<compile_context>
chip_gen: v7x
topology: tpu7x:2x2x1
jax: 0.10.0
libtpu: 0.0.40
codegen_flags: <defaults>
</compile_context>

<pallas_src>
import functools
import math

import jax
import jax.numpy as jnp
from jax import lax
from jax.experimental import pallas as pl
from jax.experimental.pallas import tpu as pltpu


# ----------------------------------------------------------------------------
# helpers
# ----------------------------------------------------------------------------
def _fit_tile(dim, target, align):
    """Largest tile <= target that evenly divides `dim` (prefer `align` multiples)."""
    if dim <= target:
        return dim
    t = (target // align) * align
    while t >= align:
        if dim % t == 0:
            return t
        t -= align
    for t in range(target, 0, -1):
        if dim % t == 0:
            return t
    return dim


# ----------------------------------------------------------------------------
# Tiled Linear:  y = x @ W^T (+ b)      (PyTorch nn.Linear weight layout (N, K))
# ----------------------------------------------------------------------------
def _linear_nobias_kernel(x_ref, w_ref, o_ref, acc_ref):
    @pl.when(pl.program_id(2) == 0)
    def _():
        acc_ref[...] = jnp.zeros_like(acc_ref)

    # Contract dim 1 of x (tm, tk) with dim 1 of w (tn, tk): no w.T materialized.
    acc_ref[...] += lax.dot_general(
        x_ref[...], w_ref[...],
        dimension_numbers=(((1,), (1,)), ((), ())),
        preferred_element_type=jnp.float32)

    @pl.when(pl.program_id(2) == pl.num_programs(2) - 1)
    def _():
        o_ref[...] = acc_ref[...].astype(o_ref.dtype)


def _linear_bias_kernel(x_ref, w_ref, b_ref, o_ref, acc_ref):
    @pl.when(pl.program_id(2) == 0)
    def _():
        acc_ref[...] = jnp.zeros_like(acc_ref)

    acc_ref[...] += lax.dot_general(
        x_ref[...], w_ref[...],
        dimension_numbers=(((1,), (1,)), ((), ())),
        preferred_element_type=jnp.float32)

    @pl.when(pl.program_id(2) == pl.num_programs(2) - 1)
    def _():
        o_ref[...] = (acc_ref[...] + b_ref[...].astype(jnp.float32)).astype(o_ref.dtype)


def pallas_linear(x, w, b=None, *, compute_dtype=jnp.float32,
                  out_dtype=jnp.float32, tm=256, tn=256, tk=512):
    """x: (M, K), w: (N, K) [nn.Linear layout], b: (N,) or None -> (M, N)."""
    M, K = x.shape
    N, K2 = w.shape
    assert K == K2
    tm = _fit_tile(M, tm, 8)
    tn = _fit_tile(N, tn, 128)
    tk = _fit_tile(K, tk, 128)
    grid = (M // tm, N // tn, K // tk)

    x = x.astype(compute_dtype)
    w = w.astype(compute_dtype)

    in_specs = [
        pl.BlockSpec((tm, tk), lambda i, j, k: (i, k)),
        pl.BlockSpec((tn, tk), lambda i, j, k: (j, k)),
    ]
    args = [x, w]
    if b is None:
        kernel = _linear_nobias_kernel
    else:
        kernel = _linear_bias_kernel
        in_specs.append(pl.BlockSpec((1, tn), lambda i, j, k: (0, j)))
        args.append(b.reshape(1, N).astype(jnp.float32))

    return pl.pallas_call(
        kernel,
        out_shape=jax.ShapeDtypeStruct((M, N), out_dtype),
        grid=grid,
        in_specs=in_specs,
        out_specs=pl.BlockSpec((tm, tn), lambda i, j, k: (i, j)),
        scratch_shapes=[pltpu.VMEM((tm, tn), jnp.float32)],
        compiler_params=pltpu.CompilerParams(
            dimension_semantics=("parallel", "parallel", "arbitrary")),
    )(*args)


# ----------------------------------------------------------------------------
# Attention core: grid (B, L/tq).  Each step: q row-block against the full K/V
# (softmax over the complete key axis -> exact, no online-softmax rescaling
# needed), all heads batched in one kernel body.  Reads the fused (B, L, 3C)
# qkv tensor; writes a lane-dense (B, L, C) output.
# ----------------------------------------------------------------------------
def _attn_kernel(q_ref, kv_ref, o_ref, *, num_heads, scale, approx_recip):
    C = o_ref.shape[-1]
    H = num_heads
    D = C // H
    tq = q_ref.shape[1]
    L = kv_ref.shape[1]

    # Static column slices of the fused (K H D) layout; all VMEM-resident.
    q = q_ref[0, :, 0 * C:1 * C]            # (tq, C)
    k = kv_ref[0, :, 1 * C:2 * C]           # (L, C)
    v = kv_ref[0, :, 2 * C:3 * C]           # (L, C)

    # Bring heads to front (in-VMEM relayouts, not HBM round trips).
    q = q.reshape(tq, H, D).transpose(1, 0, 2)   # (H, tq, D)
    k = k.reshape(L, H, D).transpose(1, 0, 2)    # (H, L, D)
    v = v.reshape(L, H, D).transpose(1, 0, 2)    # (H, L, D)

    # Fold the softmax scale into q: O(tq*D) multiplies instead of O(tq*L).
    q = q * jnp.asarray(scale, dtype=q.dtype)

    # Batched over heads -> one large MXU contraction instead of H tiny ones.
    s = jnp.einsum('hqd,hkd->hqk', q, k,
                   preferred_element_type=jnp.float32)            # (H, tq, L) f32
    s = s - jnp.max(s, axis=-1, keepdims=True)
    p = jnp.exp(s)
    denom = jnp.sum(p, axis=-1, keepdims=True)
    p = p * pl.reciprocal(denom, approx=approx_recip)

    o = jnp.einsum('hqk,hkd->hqd', p.astype(v.dtype), v,
                   preferred_element_type=jnp.float32)            # (H, tq, D) f32
    # Lane-dense (tq, H*D) = (tq, C) output block.
    o_ref[0] = o.transpose(1, 0, 2).reshape(tq, C).astype(o_ref.dtype)


def pallas_attention_core(qkv, num_heads, scale, *, out_dtype, approx_recip,
                          tq=256):
    """qkv: (B, L, 3C) -> (B, L, C) multi-head softmax attention."""
    B, L, C3 = qkv.shape
    C = C3 // 3
    tq = _fit_tile(L, tq, 8)
    grid = (B, L // tq)

    kernel = functools.partial(_attn_kernel, num_heads=num_heads, scale=scale,
                               approx_recip=approx_recip)
    # TODO(synk): for extremely long L where the (L, 3C) K/V block itself no
    # longer fits VMEM, switch to a KV-tiled online-softmax (flash) form.
    return pl.pallas_call(
        kernel,
        out_shape=jax.ShapeDtypeStruct((B, L, C), out_dtype),
        grid=grid,
        in_specs=[
            # q row-block for this grid step
            pl.BlockSpec((1, tq, C3), lambda b, qi: (b, qi, 0)),
            # full-length block for K/V; index constant over qi -> stays resident
            pl.BlockSpec((1, L, C3), lambda b, qi: (b, 0, 0)),
        ],
        out_specs=pl.BlockSpec((1, tq, C), lambda b, qi: (b, qi, 0)),
        compiler_params=pltpu.CompilerParams(
            dimension_semantics=("parallel", "parallel")),
    )(qkv, qkv)


# ----------------------------------------------------------------------------
# Full module forward
# ----------------------------------------------------------------------------
def attention_forward(x, params, num_heads, *, compute_dtype=jnp.bfloat16):
    """x: (B, L, C) -> (B, L, C).  Matches Attention.forward ('math' mode,
    qkv_bias=False, attn_drop=proj_drop=0)."""
    B, L, C = x.shape
    assert C % num_heads == 0
    D = C // num_heads
    scale = D ** (-0.5)

    x2 = x.reshape(B * L, C)

    # qkv = self.qkv(x)   (no bias -> no zero-bias DMA / add)
    qkv = pallas_linear(x2, params["w_qkv"], None,
                        compute_dtype=compute_dtype, out_dtype=compute_dtype)
    qkv = qkv.reshape(B, L, 3 * C)

    # softmax(q k^T * scale) @ v  for all heads, straight from the qkv layout
    # (no HBM transposes around the attention kernel).
    attn_out = pallas_attention_core(
        qkv, num_heads, scale, out_dtype=compute_dtype,
        approx_recip=(compute_dtype != jnp.float32))

    # x = self.proj(x)
    out = pallas_linear(attn_out.reshape(B * L, C), params["w_proj"],
                        params["b_proj"], compute_dtype=compute_dtype,
                        out_dtype=x.dtype)
    return out.reshape(B, L, C)


# ----------------------------------------------------------------------------
# Pure-JAX reference (f32) for sanity checking
# ----------------------------------------------------------------------------
def attention_reference(x, params, num_heads):
    B, L, C = x.shape
    H = num_heads
    D = C // H
    scale = D ** (-0.5)
    qkv = x @ params["w_qkv"].T                                     # (B, L, 3C)
    qkv = qkv.reshape(B, L, 3, H, D).transpose(2, 0, 3, 1, 4)
    q, k, v = qkv[0], qkv[1], qkv[2]
    attn = jnp.einsum("bhld,bhmd->bhlm", q, k) * scale
    attn = jax.nn.softmax(attn, axis=-1)
    o = jnp.einsum("bhlm,bhmd->bhld", attn, v)
    o = o.transpose(0, 2, 1, 3).reshape(B, L, C)
    return o @ params["w_proj"].T + params["b_proj"]


if __name__ == "__main__":
    # Small shapes consistent with the module: B=2, L=16, dim=64, heads=8 (D=8).
    B, L, C = 2, 16, 64
    num_heads = 8

    key = jax.random.PRNGKey(0)
    k_x, k_qkv, k_proj_w, k_proj_b = jax.random.split(key, 4)

    x = jax.random.normal(k_x, (B, L, C), dtype=jnp.float32)
    params = {
        "w_qkv": jax.random.normal(k_qkv, (3 * C, C), jnp.float32) / math.sqrt(C),
        "w_proj": jax.random.normal(k_proj_w, (C, C), jnp.float32) / math.sqrt(C),
        "b_proj": jax.random.normal(k_proj_b, (C,), jnp.float32) * 0.01,
    }

    ref = attention_reference(x, params, num_heads)
    fwd = jax.jit(attention_forward, static_argnames=("num_heads", "compute_dtype"))

    # Exact-precision path (matches the PyTorch 'math' branch which runs in f32).
    out_f32 = jax.block_until_ready(
        fwd(x, params, num_heads=num_heads, compute_dtype=jnp.float32))
    assert out_f32.shape == (B, L, C)
    err = float(jnp.max(jnp.abs(out_f32 - ref)))
    assert err < 2e-4, f"f32 max abs err {err}"

    # Performance path: bf16 MXU operands, f32 softmax / accumulation (v6e/v7x).
    out_bf16 = jax.block_until_ready(
        fwd(x, params, num_heads=num_heads, compute_dtype=jnp.bfloat16))
    assert out_bf16.shape == (B, L, C)
    assert bool(jnp.isfinite(out_bf16).all())
    mean_err = float(jnp.mean(jnp.abs(out_bf16.astype(jnp.float32) - ref)))
    assert mean_err < 0.05, f"bf16 mean abs err {mean_err}"

    print("KERNEL_OK")
</pallas_src>

<mosaic_0001>
module attributes {stable_mosaic.version = 11 : i64} {
  func.func @_linear_nobias_kernel(%arg0: i32, %arg1: i32, %arg2: i32, %arg3: memref<32x64xf32, #tpu.memory_space<vmem>>, %arg4: memref<192x64xf32, #tpu.memory_space<vmem>>, %arg5: memref<32x192xf32, #tpu.memory_space<vmem>>, %arg6: memref<32x192xf32, #tpu.memory_space<vmem>>) attributes {dimension_semantics = [#tpu.dimension_semantics<parallel>, #tpu.dimension_semantics<parallel>, #tpu.dimension_semantics<arbitrary>], iteration_bounds = array<i64: 1, 1, 1>, scalar_prefetch = 0 : i64, scratch_operands = 1 : i64, tpu.core_type = #tpu.core_type<tc>, window_params = [{transform_indices = @transform_0, window_bounds = array<i64: 32, 64>}, {transform_indices = @transform_1, window_bounds = array<i64: 192, 64>}, {transform_indices = @transform_2, window_bounds = array<i64: 32, 192>}]} {
    %c0_i32 = arith.constant 0 : i32
    %0 = arith.cmpi eq, %arg2, %c0_i32 : i32
    %1 = arith.extui %0 : i1 to i32
    %c0_i32_0 = arith.constant 0 : i32
    %2 = arith.cmpi ne, %1, %c0_i32_0 : i32
    scf.if %2 {
      %cst_10 = arith.constant 0.000000e+00 : f32
      %12 = vector.broadcast %cst_10 : f32 to vector<32x192xf32>
      %c0_11 = arith.constant 0 : index
      %c0_12 = arith.constant 0 : index
      %13 = vector.load %arg6[%c0_11, %c0_12] : memref<32x192xf32, #tpu.memory_space<vmem>>, vector<32x192xf32>
      tpu.vector_store %arg6[%c0_11, %c0_12], %12 {strides = array<i32>} : memref<32x192xf32, #tpu.memory_space<vmem>>, vector<32x192xf32>,
    } else {
    }
    %c0 = arith.constant 0 : index
    %c0_1 = arith.constant 0 : index
    %3 = vector.load %arg6[%c0, %c0_1] : memref<32x192xf32, #tpu.memory_space<vmem>>, vector<32x192xf32>
    %c0_2 = arith.constant 0 : index
    %c0_3 = arith.constant 0 : index
    %4 = vector.load %arg3[%c0_2, %c0_3] : memref<32x64xf32, #tpu.memory_space<vmem>>, vector<32x64xf32>
    %c0_4 = arith.constant 0 : index
    %c0_5 = arith.constant 0 : index
    %5 = vector.load %arg4[%c0_4, %c0_5] : memref<192x64xf32, #tpu.memory_space<vmem>>, vector<192x64xf32>
    %cst = arith.constant dense<0.000000e+00> : vector<32x192xf32>
    %6 = tpu.matmul %4, %5, %cst {dimension_numbers = #tpu.dot_dimension_numbers<[1], [1], [0], [0], [0, 0, 1, 0], [], []>} : vector<32x64xf32>, vector<192x64xf32>, vector<32x192xf32> -> vector<32x192xf32>
    %7 = arith.addf %3, %6 : vector<32x192xf32>
    %c0_6 = arith.constant 0 : index
    %c0_7 = arith.constant 0 : index
    %8 = vector.load %arg6[%c0_6, %c0_7] : memref<32x192xf32, #tpu.memory_space<vmem>>, vector<32x192xf32>
    tpu.vector_store %arg6[%c0_6, %c0_7], %7 {strides = array<i32>} : memref<32x192xf32, #tpu.memory_space<vmem>>, vector<32x192xf32>,
    %c0_i32_8 = arith.constant 0 : i32
    %9 = arith.cmpi eq, %arg2, %c0_i32_8 : i32
    %10 = arith.extui %9 : i1 to i32
    %c0_i32_9 = arith.constant 0 : i32
    %11 = arith.cmpi ne, %10, %c0_i32_9 : i32
    scf.if %11 {
      %c0_10 = arith.constant 0 : index
      %c0_11 = arith.constant 0 : index
      %12 = vector.load %arg6[%c0_10, %c0_11] : memref<32x192xf32, #tpu.memory_space<vmem>>, vector<32x192xf32>
      %c0_12 = arith.constant 0 : index
      %c0_13 = arith.constant 0 : index
      %13 = vector.load %arg5[%c0_12, %c0_13] : memref<32x192xf32, #tpu.memory_space<vmem>>, vector<32x192xf32>
      tpu.vector_store %arg5[%c0_12, %c0_13], %12 {strides = array<i32>} : memref<32x192xf32, #tpu.memory_space<vmem>>, vector<32x192xf32>,
    } else {
    }
    return
  }
  func.func @transform_0(%arg0: i32, %arg1: i32, %arg2: i32) -> (i32, i32) {
    %c0_i32 = arith.constant 0 : i32
    return %arg0, %arg2 : i32, i32
  }
  func.func @transform_1(%arg0: i32, %arg1: i32, %arg2: i32) -> (i32, i32) {
    %c0_i32 = arith.constant 0 : i32
    return %arg1, %arg2 : i32, i32
  }
  func.func @transform_2(%arg0: i32, %arg1: i32, %arg2: i32) -> (i32, i32) {
    %c0_i32 = arith.constant 0 : i32
    return %arg0, %arg1 : i32, i32
  }
}

module attributes {stable_mosaic.version = 11 : i64} {
  func.func @_attn_kernel(%arg0: i32, %arg1: i32, %arg2: memref<1x16x192xf32, #tpu.memory_space<vmem>>, %arg3: memref<1x16x192xf32, #tpu.memory_space<vmem>>, %arg4: memref<1x16x64xf32, #tpu.memory_space<vmem>>) attributes {dimension_semantics = [#tpu.dimension_semantics<parallel>, #tpu.dimension_semantics<parallel>], iteration_bounds = array<i64: 2, 1>, scalar_prefetch = 0 : i64, scratch_operands = 0 : i64, tpu.core_type = #tpu.core_type<tc>, window_params = [{transform_indices = @transform_0, window_bounds = array<i64: 1, 16, 192>}, {transform_indices = @transform_1, window_bounds = array<i64: 1, 16, 192>}, {transform_indices = @transform_2, window_bounds = array<i64: 1, 16, 64>}]} {
    %c0 = arith.constant 0 : index
    %c0_0 = arith.constant 0 : index
    %c0_1 = arith.constant 0 : index
    %0 = vector.load %arg2[%c0, %c0_0, %c0_1] : memref<1x16x192xf32, #tpu.memory_space<vmem>>, vector<1x16x64xf32>
    %1 = vector.shape_cast %0 : vector<1x16x64xf32> to vector<16x64xf32>
    %c0_2 = arith.constant 0 : index
    %c0_3 = arith.constant 0 : index
    %c64 = arith.constant 64 : index
    %2 = vector.load %arg3[%c0_2, %c0_3, %c64] : memref<1x16x192xf32, #tpu.memory_space<vmem>>, vector<1x16x64xf32>
    %3 = vector.shape_cast %2 : vector<1x16x64xf32> to vector<16x64xf32>
    %c0_4 = arith.constant 0 : index
    %c0_5 = arith.constant 0 : index
    %c128 = arith.constant 128 : index
    %4 = vector.load %arg3[%c0_4, %c0_5, %c128] : memref<1x16x192xf32, #tpu.memory_space<vmem>>, vector<1x16x64xf32>
    %5 = vector.shape_cast %4 : vector<1x16x64xf32> to vector<16x64xf32>
    %6 = vector.shape_cast %1 : vector<16x64xf32> to vector<16x8x8xf32>
    %7 = tpu.transpose %6, [1, 0, 2] : vector<16x8x8xf32> -> vector<8x16x8xf32>
    %8 = vector.shape_cast %3 : vector<16x64xf32> to vector<16x8x8xf32>
    %9 = tpu.transpose %8, [1, 0, 2] : vector<16x8x8xf32> -> vector<8x16x8xf32>
    %10 = vector.shape_cast %5 : vector<16x64xf32> to vector<16x8x8xf32>
    %11 = tpu.transpose %10, [1, 0, 2] : vector<16x8x8xf32> -> vector<8x16x8xf32>
    %cst = arith.constant 0.353553385 : f32
    %12 = vector.broadcast %cst : f32 to vector<8x16x8xf32>
    %13 = arith.mulf %7, %12 : vector<8x16x8xf32>
    "tpu.trace_start"() <{level = 10 : i32, message = "hqd,hkd->hqk"}> : () -> ()
    %cst_6 = arith.constant dense<0.000000e+00> : vector<8x16x16xf32>
    %14 = tpu.matmul %13, %9, %cst_6 {dimension_numbers = #tpu.dot_dimension_numbers<[2], [2], [1], [1], [0, 0, 0, 1, 1, 1], [0], [0]>} : vector<8x16x8xf32>, vector<8x16x8xf32>, vector<8x16x16xf32> -> vector<8x16x16xf32>
    "tpu.trace_stop"() : () -> ()
    %cst_7 = arith.constant dense<0xFF800000> : vector<8x16xf32>
    %15 = vector.multi_reduction <maximumf>, %14, %cst_7 [2] : vector<8x16x16xf32> to vector<8x16xf32>
    %16 = vector.shape_cast %15 : vector<8x16xf32> to vector<8x16x1xf32>
    %17 = vector.broadcast %16 : vector<8x16x1xf32> to vector<8x16x16xf32>
    %18 = arith.subf %14, %17 : vector<8x16x16xf32>
    %19 = math.exp %18 : vector<8x16x16xf32>
    %cst_8 = arith.constant dense<0.000000e+00> : vector<8x16xf32>
    %20 = vector.multi_reduction <add>, %19, %cst_8 [2] : vector<8x16x16xf32> to vector<8x16xf32>
    %21 = vector.shape_cast %20 : vector<8x16xf32> to vector<8x16x1xf32>
    %22 = tpu.reciprocal %21 : vector<8x16x1xf32> -> vector<8x16x1xf32>
    %23 = vector.broadcast %22 : vector<8x16x1xf32> to vector<8x16x16xf32>
    %24 = arith.mulf %19, %23 : vector<8x16x16xf32>
    "tpu.trace_start"() <{level = 10 : i32, message = "hqk,hkd->hqd"}> : () -> ()
    %cst_9 = arith.constant dense<0.000000e+00> : vector<8x16x8xf32>
    %25 = tpu.matmul %24, %11, %cst_9 {dimension_numbers = #tpu.dot_dimension_numbers<[2], [1], [1], [2], [0, 0, 0, 1, 1, 2], [0], [0]>} : vector<8x16x16xf32>, vector<8x16x8xf32>, vector<8x16x8xf32> -> vector<8x16x8xf32>
    "tpu.trace_stop"() : () -> ()
    %26 = tpu.transpose %25, [1, 0, 2] : vector<8x16x8xf32> -> vector<16x8x8xf32>
    %27 = vector.shape_cast %26 : vector<16x8x8xf32> to vector<16x64xf32>
    %c0_10 = arith.constant 0 : index
    %c0_11 = arith.constant 0 : index
    %c0_12 = arith.constant 0 : index
    %28 = vector.load %arg4[%c0_10, %c0_11, %c0_12] : memref<1x16x64xf32, #tpu.memory_space<vmem>>, vector<1x16x64xf32>
    %29 = vector.shape_cast %28 : vector<1x16x64xf32> to vector<16x64xf32>
    %30 = vector.shape_cast %27 : vector<16x64xf32> to vector<1x16x64xf32>
    tpu.vector_store %arg4[%c0_10, %c0_11, %c0_12], %30 {strides = array<i32>} : memref<1x16x64xf32, #tpu.memory_space<vmem>>, vector<1x16x64xf32>,
    return
  }
  func.func @transform_0(%arg0: i32, %arg1: i32) -> (i32, i32, i32) {
    %c0_i32 = arith.constant 0 : i32
    %c0_i32_0 = arith.constant 0 : i32
    return %arg0, %arg1, %c0_i32 : i32, i32, i32
  }
  func.func @transform_1(%arg0: i32, %arg1: i32) -> (i32, i32, i32) {
    %c0_i32 = arith.constant 0 : i32
    %c0_i32_0 = arith.constant 0 : i32
    %c0_i32_1 = arith.constant 0 : i32
    return %arg0, %c0_i32, %c0_i32_0 : i32, i32, i32
  }
  func.func @transform_2(%arg0: i32, %arg1: i32) -> (i32, i32, i32) {
    %c0_i32 = arith.constant 0 : i32
    %c0_i32_0 = arith.constant 0 : i32
    return %arg0, %arg1, %c0_i32 : i32, i32, i32
  }
}

module attributes {stable_mosaic.version = 11 : i64} {
  func.func @_linear_bias_kernel(%arg0: i32, %arg1: i32, %arg2: i32, %arg3: memref<32x64xf32, #tpu.memory_space<vmem>>, %arg4: memref<64x64xf32, #tpu.memory_space<vmem>>, %arg5: memref<1x64xf32, #tpu.memory_space<vmem>>, %arg6: memref<32x64xf32, #tpu.memory_space<vmem>>, %arg7: memref<32x64xf32, #tpu.memory_space<vmem>>) attributes {dimension_semantics = [#tpu.dimension_semantics<parallel>, #tpu.dimension_semantics<parallel>, #tpu.dimension_semantics<arbitrary>], iteration_bounds = array<i64: 1, 1, 1>, scalar_prefetch = 0 : i64, scratch_operands = 1 : i64, tpu.core_type = #tpu.core_type<tc>, window_params = [{transform_indices = @transform_0, window_bounds = array<i64: 32, 64>}, {transform_indices = @transform_1, window_bounds = array<i64: 64, 64>}, {transform_indices = @transform_2, window_bounds = array<i64: 1, 64>}, {transform_indices = @transform_3, window_bounds = array<i64: 32, 64>}]} {
    %c0_i32 = arith.constant 0 : i32
    %0 = arith.cmpi eq, %arg2, %c0_i32 : i32
    %1 = arith.extui %0 : i1 to i32
    %c0_i32_0 = arith.constant 0 : i32
    %2 = arith.cmpi ne, %1, %c0_i32_0 : i32
    scf.if %2 {
      %cst_10 = arith.constant 0.000000e+00 : f32
      %12 = vector.broadcast %cst_10 : f32 to vector<32x64xf32>
      %c0_11 = arith.constant 0 : index
      %c0_12 = arith.constant 0 : index
      %13 = vector.load %arg7[%c0_11, %c0_12] : memref<32x64xf32, #tpu.memory_space<vmem>>, vector<32x64xf32>
      tpu.vector_store %arg7[%c0_11, %c0_12], %12 {strides = array<i32>} : memref<32x64xf32, #tpu.memory_space<vmem>>, vector<32x64xf32>,
    } else {
    }
    %c0 = arith.constant 0 : index
    %c0_1 = arith.constant 0 : index
    %3 = vector.load %arg7[%c0, %c0_1] : memref<32x64xf32, #tpu.memory_space<vmem>>, vector<32x64xf32>
    %c0_2 = arith.constant 0 : index
    %c0_3 = arith.constant 0 : index
    %4 = vector.load %arg3[%c0_2, %c0_3] : memref<32x64xf32, #tpu.memory_space<vmem>>, vector<32x64xf32>
    %c0_4 = arith.constant 0 : index
    %c0_5 = arith.constant 0 : index
    %5 = vector.load %arg4[%c0_4, %c0_5] : memref<64x64xf32, #tpu.memory_space<vmem>>, vector<64x64xf32>
    %cst = arith.constant dense<0.000000e+00> : vector<32x64xf32>
    %6 = tpu.matmul %4, %5, %cst {dimension_numbers = #tpu.dot_dimension_numbers<[1], [1], [0], [0], [0, 0, 1, 0], [], []>} : vector<32x64xf32>, vector<64x64xf32>, vector<32x64xf32> -> vector<32x64xf32>
    %7 = arith.addf %3, %6 : vector<32x64xf32>
    %c0_6 = arith.constant 0 : index
    %c0_7 = arith.constant 0 : index
    %8 = vector.load %arg7[%c0_6, %c0_7] : memref<32x64xf32, #tpu.memory_space<vmem>>, vector<32x64xf32>
    tpu.vector_store %arg7[%c0_6, %c0_7], %7 {strides = array<i32>} : memref<32x64xf32, #tpu.memory_space<vmem>>, vector<32x64xf32>,
    %c0_i32_8 = arith.constant 0 : i32
    %9 = arith.cmpi eq, %arg2, %c0_i32_8 : i32
    %10 = arith.extui %9 : i1 to i32
    %c0_i32_9 = arith.constant 0 : i32
    %11 = arith.cmpi ne, %10, %c0_i32_9 : i32
    scf.if %11 {
      %c0_10 = arith.constant 0 : index
      %c0_11 = arith.constant 0 : index
      %12 = vector.load %arg7[%c0_10, %c0_11] : memref<32x64xf32, #tpu.memory_space<vmem>>, vector<32x64xf32>
      %c0_12 = arith.constant 0 : index
      %c0_13 = arith.constant 0 : index
      %13 = vector.load %arg5[%c0_12, %c0_13] : memref<1x64xf32, #tpu.memory_space<vmem>>, vector<1x64xf32>
      %14 = vector.broadcast %13 : vector<1x64xf32> to vector<32x64xf32>
      %15 = arith.addf %12, %14 : vector<32x64xf32>
      %c0_14 = arith.constant 0 : index
      %c0_15 = arith.constant 0 : index
      %16 = vector.load %arg6[%c0_14, %c0_15] : memref<32x64xf32, #tpu.memory_space<vmem>>, vector<32x64xf32>
      tpu.vector_store %arg6[%c0_14, %c0_15], %15 {strides = array<i32>} : memref<32x64xf32, #tpu.memory_space<vmem>>, vector<32x64xf32>,
    } else {
    }
    return
  }
  func.func @transform_0(%arg0: i32, %arg1: i32, %arg2: i32) -> (i32, i32) {
    %c0_i32 = arith.constant 0 : i32
    return %arg0, %arg2 : i32, i32
  }
  func.func @transform_1(%arg0: i32, %arg1: i32, %arg2: i32) -> (i32, i32) {
    %c0_i32 = arith.constant 0 : i32
    return %arg1, %arg2 : i32, i32
  }
  func.func @transform_2(%arg0: i32, %arg1: i32, %arg2: i32) -> (i32, i32) {
    %c0_i32 = arith.constant 0 : i32
    %c0_i32_0 = arith.constant 0 : i32
    return %c0_i32, %arg1 : i32, i32
  }
  func.func @transform_3(%arg0: i32, %arg1: i32, %arg2: i32) -> (i32, i32) {
    %c0_i32 = arith.constant 0 : i32
    return %arg0, %arg1 : i32, i32
  }
}

</mosaic_0001>

<llo_original>
// kernel: attention_forward.3
$region0: #{attention_forward.3}
  #allocation0 [shape = 'u32[]', space=smem, size = 0x4, offset = 0x4, fixed_abs, tag = 'smem constant byte address 0x4 - core index']
  #allocation1 [shape = 'u32[144,128]{1,0:T(1,128)}', space=vmem, size = 0x12000, scoped, tag = 'internal scratch']
  #allocation2 [shape = 'f32[32,192]{1,0:T(8,128)}', space=vmem, size = 0x8000, scoped, tag = 'scratch operand']
  %s0 = inlined_call_operand.vmem [shape: f32[32,64], index: 0, kind: input, shape index: {}]
  %s1 = inlined_call_operand.vmem [shape: f32[192,64], index: 1, kind: input, shape index: {}]
  %s2 = inlined_call_operand.vmem [shape: f32[32,192], index: 2, kind: output, shape index: {}]
  %s3 = sld [smem:[#allocation0]]
  $region26: #{attention_forward.3} parent=0
    _
  %s5 = ssub.s32 1, %s3
  %s6 = scalar_select 0, %s5, %s3
  // Predicated region
  $region2: #{attention_forward.3} parent=0 // pred_check
    _
  $region3: #{attention_forward.3} parent=0 // pred_check_branch
    %8 = sbr.rel (0) target = $region5
  $region4: #{attention_forward.3} parent=0 // pred_region
    _
  $region5: #{attention_forward.3} parent=0 // pred_fallthru
    _
  // Predicated region
  $region6: #{attention_forward.3} parent=0 // pred_check
    _
  $region7: #{attention_forward.3} parent=0 // pred_check_branch
    %10 = sbr.rel (0) target = $region9
  $region8: #{attention_forward.3} parent=0 // pred_region
    _
  $region9: #{attention_forward.3} parent=0 // pred_fallthru
    _
  %p11 = scmp.eq.s32.totalorder 0, 0
  // Predicated region
  $region10: #{attention_forward.3} parent=0 // pred_check
    %p12 = pneg %p11
  $region11: #{attention_forward.3} parent=0 // pred_check_branch
    %14 = sbr.rel (%p12) target = $region13
  $region12: #{attention_forward.3} parent=0 // pred_region
    %15 = vst [vmem:[#allocation2] sm:$0xff] 0.0
    %vm16 = vcmask 523264
    %17 = vst.msk [vmem:[#allocation2 + $0x8] sm:$0xff] %vm16, 0.0
    %18 = vst [vmem:[#allocation2 + $0x10] sm:$0xff] 0.0
    %19 = vst.msk [vmem:[#allocation2 + $0x18] sm:$0xff] %vm16, 0.0
    %20 = vst [vmem:[#allocation2 + $0x20] sm:$0xff] 0.0
    %21 = vst.msk [vmem:[#allocation2 + $0x28] sm:$0xff] %vm16, 0.0
    %22 = vst [vmem:[#allocation2 + $0x30] sm:$0xff] 0.0
    %23 = vst.msk [vmem:[#allocation2 + $0x38] sm:$0xff] %vm16, 0.0
  $region13: #{attention_forward.3} parent=0 // pred_fallthru
    _
  %v24 = vld [vmem:[#allocation2] sm:$0xff]
  %v25 = vld [vmem:[#allocation2 + $0x8] sm:$0xff]
  %v26 = vld [vmem:[#allocation2 + $0x10] sm:$0xff]
  %v27 = vld [vmem:[#allocation2 + $0x18] sm:$0xff]
  %v28 = vld [vmem:[#allocation2 + $0x20] sm:$0xff]
  %v29 = vld [vmem:[#allocation2 + $0x28] sm:$0xff]
  %v30 = vld [vmem:[#allocation2 + $0x30] sm:$0xff]
  %v31 = vld [vmem:[#allocation2 + $0x38] sm:$0xff]
  %v32 = vld [vmem:[%s0] sm:$0xff]
  %v33 = vld [vmem:[%s0 + $0x8] sm:$0xff]
  %v34 = vld [vmem:[%s0 + $0x10] sm:$0xff]
  %v35 = vld [vmem:[%s0 + $0x18] sm:$0xff]
  %v36 = vld [vmem:[%s1] sm:$0xff]
  %v37 = vld [vmem:[%s1 + $0x8] sm:$0xff]
  %v38 = vld [vmem:[%s1 + $0x10] sm:$0xff]
  %v39 = vld [vmem:[%s1 + $0x18] sm:$0xff]
  %v40 = vld [vmem:[%s1 + $0x20] sm:$0xff]
  %v41 = vld [vmem:[%s1 + $0x28] sm:$0xff]
  %v42 = vld [vmem:[%s1 + $0x30] sm:$0xff]
  %v43 = vld [vmem:[%s1 + $0x38] sm:$0xff]
  %v44 = vld [vmem:[%s1 + $0x40] sm:$0xff]
  %v45 = vld [vmem:[%s1 + $0x48] sm:$0xff]
  %v46 = vld [vmem:[%s1 + $0x50] sm:$0xff]
  %v47 = vld [vmem:[%s1 + $0x58] sm:$0xff]
  %v48 = vld [vmem:[%s1 + $0x60] sm:$0xff]
  %v49 = vld [vmem:[%s1 + $0x68] sm:$0xff]
  %v50 = vld [vmem:[%s1 + $0x70] sm:$0xff]
  %v51 = vld [vmem:[%s1 + $0x78] sm:$0xff]
  %v52 = vld [vmem:[%s1 + $0x80] sm:$0xff]
  %v53 = vld [vmem:[%s1 + $0x88] sm:$0xff]
  %v54 = vld [vmem:[%s1 + $0x90] sm:$0xff]
  %v55 = vld [vmem:[%s1 + $0x98] sm:$0xff]
  %v56 = vld [vmem:[%s1 + $0xa0] sm:$0xff]
  %v57 = vld [vmem:[%s1 + $0xa8] sm:$0xff]
  %v58 = vld [vmem:[%s1 + $0xb0] sm:$0xff]
  %v59 = vld [vmem:[%s1 + $0xb8] sm:$0xff]
  %vm60 = vcmask 523264
  %v62 = vsel %vm60, %v32, 0
  %v65 = vsel %vm60, %v33, 0
  %v68 = vsel %vm60, %v34, 0
  %v71 = vsel %vm60, %v35, 0
  %v74 = vsel %vm60, %v36, 0
  %v77 = vsel %vm60, %v37, 0
  %v80 = vsel %vm60, %v38, 0
  %v83 = vsel %vm60, %v39, 0
  %v86 = vsel %vm60, %v40, 0
  %v89 = vsel %vm60, %v41, 0
  %v92 = vsel %vm60, %v42, 0
  %v95 = vsel %vm60, %v43, 0
  %v98 = vsel %vm60, %v44, 0
  %v101 = vsel %vm60, %v45, 0
  %v104 = vsel %vm60, %v46, 0
  %v107 = vsel %vm60, %v47, 0
  %v110 = vsel %vm60, %v48, 0
  %v113 = vsel %vm60, %v49, 0
  %v116 = vsel %vm60, %v50, 0
  %v119 = vsel %vm60, %v51, 0
  %v122 = vsel %vm60, %v52, 0
  %v125 = vsel %vm60, %v53, 0
  %v128 = vsel %vm60, %v54, 0
  %v131 = vsel %vm60, %v55, 0
  %v134 = vsel %vm60, %v56, 0
  %v137 = vsel %vm60, %v57, 0
  %v140 = vsel %vm60, %v58, 0
  %v143 = vsel %vm60, %v59, 0
  %145 = vmatprep.subr.mxu0 0.0
  %146 = vmatpush1.xpose.msra.mxu0 %v74
  %147 = vmatprep.subr.mxu0 0.0
  %148 = vmatpush1.xpose.msra.mxu0 %v77
  %149 = vmatprep.subr.mxu0 0.0
  %150 = vmatpush1.xpose.msra.mxu0 %v80
  %151 = vmatprep.subr.mxu0 0.0
  %152 = vmatpush1.xpose.msra.mxu0 %v83
  %153 = vmatprep.subr.mxu0 0.0
  %154 = vmatpush1.xpose.msra.mxu0 %v86
  %155 = vmatprep.subr.mxu0 0.0
  %156 = vmatpush1.xpose.msra.mxu0 %v89
  %157 = vmatprep.subr.mxu0 0.0
  %158 = vmatpush1.xpose.msra.mxu0 %v92
  %159 = vmatprep.subr.mxu0 0.0
  %160 = vmatpush1.xpose.msra.mxu0 %v95
  %161 = vmatprep.subr.mxu0 0.0
  %162 = vmatpush1.xpose.msra.mxu0 %v98
  %163 = vmatprep.subr.mxu0 0.0
  %164 = vmatpush1.xpose.msra.mxu0 %v101
  %165 = vmatprep.subr.mxu0 0.0
  %166 = vmatpush1.xpose.msra.mxu0 %v104
  %167 = vmatprep.subr.mxu0 0.0
  %168 = vmatpush1.xpose.msra.mxu0 %v107
  %169 = vmatprep.subr.mxu0 0.0
  %170 = vmatpush1.xpose.msra.mxu0 %v110
  %171 = vmatprep.subr.mxu0 0.0
  %172 = vmatpush1.xpose.msra.mxu0 %v113
  %173 = vmatprep.subr.mxu0 0.0
  %174 = vmatpush1.xpose.msra.mxu0 %v116
  %175 = vmatprep.subr.mxu0 0.0
  %176 = vmatpush1.xpose.msra.mxu0 %v119
  %177 = vmatprep.subr.mxu0 0.0
  %178 = vmatpush1.xpose.msra.mxu0 %v122
  %179 = vmatprep.subr.mxu0 0.0
  %180 = vmatpush1.xpose.msra.mxu0 %v125
  %181 = vmatprep.subr.mxu0 0.0
  %182 = vmatpush1.xpose.msra.mxu0 %v128
  %183 = vmatprep.subr.mxu0 0.0
  %184 = vmatpush1.xpose.msra.mxu0 %v131
  %185 = vmatprep.subr.mxu0 0.0
  %186 = vmatpush1.xpose.msra.mxu0 %v134
  %187 = vmatprep.subr.mxu0 0.0
  %188 = vmatpush1.xpose.msra.mxu0 %v137
  %189 = vmatprep.subr.mxu0 0.0
  %190 = vmatpush1.xpose.msra.mxu0 %v140
  %191 = vmatprep.subr.mxu0 0.0
  %192 = vmatpush1.xpose.msra.mxu0 %v143
  %193 = vmatprep.subr.mxu0 0.0
  %194 = vmatpush1.xpose.msra.mxu0 0.0
  %195 = vmatprep.subr.mxu0 0.0
  %196 = vmatpush1.xpose.msra.mxu0 0.0
  %197 = vmatprep.subr.mxu0 0.0
  %198 = vmatpush1.xpose.msra.mxu0 0.0
  %199 = vmatprep.subr.mxu0 0.0
  %200 = vmatpush1.xpose.msra.mxu0 0.0
  %201 = vmatprep.subr.mxu0 0.0
  %202 = vmatpush1.xpose.msra.mxu0 0.0
  %203 = vmatprep.subr.mxu0 0.0
  %204 = vmatpush1.xpose.msra.mxu0 0.0
  %205 = vmatprep.subr.mxu0 0.0
  %206 = vmatpush1.xpose.msra.mxu0 0.0
  %207 = vmatprep.subr.mxu0 0.0
  %208 = vmatpush1.xpose.msra.mxu0 0.0
  %209 = vmatprep.mubr.f32.mxu0 0.0
  %210 = vmatmul.mubr.f32.gmra.mrb[0].mxu0 %v62
  %v211 = vpop.f32.mrb[0].mxu0
  %v212 = vadd.f32 0.0, %v211
  %v213 = vpop.f32.mrb[0].mxu0
  %v214 = vadd.f32 0.0, %v213
  %215 = vmatprep.mubr.f32.mxu0 0.0
  %216 = vmatmul.mubr.f32.gmra.mrb[0].mxu0 %v65
  %v217 = vpop.f32.mrb[0].mxu0
  %v218 = vadd.f32 0.0, %v217
  %v219 = vpop.f32.mrb[0].mxu0
  %v220 = vadd.f32 0.0, %v219
  %221 = vmatprep.mubr.f32.mxu0 0.0
  %222 = vmatmul.mubr.f32.gmra.mrb[0].mxu0 %v68
  %v223 = vpop.f32.mrb[0].mxu0
  %v224 = vadd.f32 0.0, %v223
  %v225 = vpop.f32.mrb[0].mxu0
  %v226 = vadd.f32 0.0, %v225
  %227 = vmatprep.mubr.f32.mxu0 0.0
  %228 = vmatmul.mubr.f32.gmra.mrb[0].mxu0 %v71
  %v229 = vpop.f32.mrb[0].mxu0
  %v230 = vadd.f32 0.0, %v229
  %v231 = vpop.f32.mrb[0].mxu0
  %v232 = vadd.f32 0.0, %v231
  %233 = vdwg.mxu0
  %v234 = vadd.f32 %v24, %v212
  %v235 = vadd.f32 %v25, %v214
  %v236 = vadd.f32 %v26, %v218
  %v237 = vadd.f32 %v27, %v220
  %v238 = vadd.f32 %v28, %v224
  %v239 = vadd.f32 %v29, %v226
  %v240 = vadd.f32 %v30, %v230
  %v241 = vadd.f32 %v31, %v232
  %242 = vst [vmem:[#allocation2] sm:$0xff] %v234
  %243 = vst.msk [vmem:[#allocation2 + $0x8] sm:$0xff] %vm60, %v235
  %244 = vst [vmem:[#allocation2 + $0x10] sm:$0xff] %v236
  %245 = vst.msk [vmem:[#allocation2 + $0x18] sm:$0xff] %vm60, %v237
  %246 = vst [vmem:[#allocation2 + $0x20] sm:$0xff] %v238
  %247 = vst.msk [vmem:[#allocation2 + $0x28] sm:$0xff] %vm60, %v239
  %248 = vst [vmem:[#allocation2 + $0x30] sm:$0xff] %v240
  %249 = vst.msk [vmem:[#allocation2 + $0x38] sm:$0xff] %vm60, %v241
  // Predicated region
  $region14: #{attention_forward.3} parent=0 // pred_check
    %p250 = pneg %p11
  $region15: #{attention_forward.3} parent=0 // pred_check_branch
    %252 = sbr.rel (%p250) target = $region17
  $region16: #{attention_forward.3} parent=0 // pred_region
    %v253 = vld [vmem:[#allocation2] sm:$0xff]
    %v254 = vld [vmem:[#allocation2 + $0x8] sm:$0xff]
    %v255 = vld [vmem:[#allocation2 + $0x10] sm:$0xff]
    %v256 = vld [vmem:[#allocation2 + $0x18] sm:$0xff]
    %v257 = vld [vmem:[#allocation2 + $0x20] sm:$0xff]
    %v258 = vld [vmem:[#allocation2 + $0x28] sm:$0xff]
    %v259 = vld [vmem:[#allocation2 + $0x30] sm:$0xff]
    %v260 = vld [vmem:[#allocation2 + $0x38] sm:$0xff]
    %261 = vst [vmem:[%s2] sm:$0xff] %v253
    %262 = vst.msk [vmem:[%s2 + $0x8] sm:$0xff] %vm60, %v254
    %263 = vst [vmem:[%s2 + $0x10] sm:$0xff] %v255
    %264 = vst.msk [vmem:[%s2 + $0x18] sm:$0xff] %vm60, %v256
    %265 = vst [vmem:[%s2 + $0x20] sm:$0xff] %v257
    %266 = vst.msk [vmem:[%s2 + $0x28] sm:$0xff] %vm60, %v258
    %267 = vst [vmem:[%s2 + $0x30] sm:$0xff] %v259
    %268 = vst.msk [vmem:[%s2 + $0x38] sm:$0xff] %vm60, %v260
  $region17: #{attention_forward.3} parent=0 // pred_fallthru
    _
  // Predicated region
  $region18: #{attention_forward.3} parent=0 // pred_check
    _
  $region19: #{attention_forward.3} parent=0 // pred_check_branch
    %270 = sbr.rel (0) target = $region21
  $region20: #{attention_forward.3} parent=0 // pred_region
    _
  $region21: #{attention_forward.3} parent=0 // pred_fallthru
    _
  // Predicated region
  $region22: #{attention_forward.3} parent=0 // pred_check
    _
  $region23: #{attention_forward.3} parent=0 // pred_check_branch
    %272 = sbr.rel (0) target = $region25
  $region24: #{attention_forward.3} parent=0 // pred_region
    _
  $region25: #{attention_forward.3} parent=0 // pred_fallthru
    _

// kernel: attention_forward.5
$region0: #{attention_forward.5}
  #allocation0 [shape = 'u32[]', space=smem, size = 0x4, offset = 0x4, fixed_abs, tag = 'smem constant byte address 0x4 - core index']
  #allocation1 [shape = 'u32[144,128]{1,0:T(1,128)}', space=vmem, size = 0x12000, scoped, tag = 'internal scratch']
  #allocation2 [shape = 'f32[32,64]{1,0:T(8,128)}', space=vmem, size = 0x4000, scoped, tag = 'scratch operand']
  %s0 = inlined_call_operand.vmem [shape: f32[32,64], index: 0, kind: input, shape index: {}]
  %s1 = inlined_call_operand.vmem [shape: f32[64,64], index: 1, kind: input, shape index: {}]
  %s2 = inlined_call_operand.vmem [shape: f32[1,64], index: 2, kind: input, shape index: {}]
  %s3 = inlined_call_operand.hbm [shape: f32[32,64], index: 3, kind: output, shape index: {}]
  %s4 = sld [smem:[#allocation0]]
  $region30: #{attention_forward.5} parent=0
    _
  %s6 = ssub.s32 1, %s4
  %s7 = scalar_select 0, %s6, %s4
  $region1: #{attention_forward.5} parent=0
    #allocation3 [shape = 'u8[16384]{0}', space=vmem, size = 0x4000, scoped, tag = 'output window, operand 0, single buffered']
    #allocation4 [shape = 's32[1]{0}', space=sflag, size = 0x4, scoped, tag = 'scoped memory for attention_forward.5']
    %8 = vsyncpa [#allocation4], 0
    // Predicated region
    $region2: #{attention_forward.5} parent=1 // pred_check
      _
    $region3: #{attention_forward.5} parent=1 // pred_check_branch
      %10 = sbr.rel (0) target = $region5
    $region4: #{attention_forward.5} parent=1 // pred_region
      _
    $region5: #{attention_forward.5} parent=1 // pred_fallthru
      _
    // Predicated region
    $region6: #{attention_forward.5} parent=1 // pred_check
      _
    $region7: #{attention_forward.5} parent=1 // pred_check_branch
      %12 = sbr.rel (0) target = $region9
    $region8: #{attention_forward.5} parent=1 // pred_region
      _
    $region9: #{attention_forward.5} parent=1 // pred_fallthru
      _
    // Predicated region
    $region10: #{attention_forward.5} parent=1 // pred_check
      _
    $region11: #{attention_forward.5} parent=1 // pred_check_branch
      %14 = sbr.rel (0) target = $region13
    $region12: #{attention_forward.5} parent=1 // pred_region
      _
    $region13: #{attention_forward.5} parent=1 // pred_fallthru
      _
    %p15 = scmp.eq.s32.totalorder 0, 0
    // Predicated region
    $region14: #{attention_forward.5} parent=1 // pred_check
      %p16 = pneg %p15
    $region15: #{attention_forward.5} parent=1 // pred_check_branch
      %18 = sbr.rel (%p16) target = $region17
    $region16: #{attention_forward.5} parent=1 // pred_region
      %vm19 = vcmask 523264
      %20 = vst.msk [vmem:[#allocation2] sm:$0xff] %vm19, 0.0
      %21 = vst.msk [vmem:[#allocation2 + $0x8] sm:$0xff] %vm19, 0.0
      %22 = vst.msk [vmem:[#allocation2 + $0x10] sm:$0xff] %vm19, 0.0
      %23 = vst.msk [vmem:[#allocation2 + $0x18] sm:$0xff] %vm19, 0.0
    $region17: #{attention_forward.5} parent=1 // pred_fallthru
      _
    %v24 = vld [vmem:[#allocation2] sm:$0xff]
    %v25 = vld [vmem:[#allocation2 + $0x8] sm:$0xff]
    %v26 = vld [vmem:[#allocation2 + $0x10] sm:$0xff]
    %v27 = vld [vmem:[#allocation2 + $0x18] sm:$0xff]
    %v28 = vld [vmem:[%s0] sm:$0xff]
    %v29 = vld [vmem:[%s0 + $0x8] sm:$0xff]
    %v30 = vld [vmem:[%s0 + $0x10] sm:$0xff]
    %v31 = vld [vmem:[%s0 + $0x18] sm:$0xff]
    %v32 = vld [vmem:[%s1] sm:$0xff]
    %v33 = vld [vmem:[%s1 + $0x8] sm:$0xff]
    %v34 = vld [vmem:[%s1 + $0x10] sm:$0xff]
    %v35 = vld [vmem:[%s1 + $0x18] sm:$0xff]
    %v36 = vld [vmem:[%s1 + $0x20] sm:$0xff]
    %v37 = vld [vmem:[%s1 + $0x28] sm:$0xff]
    %v38 = vld [vmem:[%s1 + $0x30] sm:$0xff]
    %v39 = vld [vmem:[%s1 + $0x38] sm:$0xff]
    %vm40 = vcmask 523264
    %v42 = vsel %vm40, %v28, 0
    %v45 = vsel %vm40, %v29, 0
    %v48 = vsel %vm40, %v30, 0
    %v51 = vsel %vm40, %v31, 0
    %v54 = vsel %vm40, %v32, 0
    %v57 = vsel %vm40, %v33, 0
    %v60 = vsel %vm40, %v34, 0
    %v63 = vsel %vm40, %v35, 0
    %v66 = vsel %vm40, %v36, 0
    %v69 = vsel %vm40, %v37, 0
    %v72 = vsel %vm40, %v38, 0
    %v75 = vsel %vm40, %v39, 0
    %77 = vmatprep.subr.mxu0 0.0
    %78 = vmatpush1.xpose.msra.mxu0 %v54
    %79 = vmatprep.subr.mxu0 0.0
    %80 = vmatpush1.xpose.msra.mxu0 %v57
    %81 = vmatprep.subr.mxu0 0.0
    %82 = vmatpush1.xpose.msra.mxu0 %v60
    %83 = vmatprep.subr.mxu0 0.0
    %84 = vmatpush1.xpose.msra.mxu0 %v63
    %85 = vmatprep.subr.mxu0 0.0
    %86 = vmatpush1.xpose.msra.mxu0 %v66
    %87 = vmatprep.subr.mxu0 0.0
    %88 = vmatpush1.xpose.msra.mxu0 %v69
    %89 = vmatprep.subr.mxu0 0.0
    %90 = vmatpush1.xpose.msra.mxu0 %v72
    %91 = vmatprep.subr.mxu0 0.0
    %92 = vmatpush1.xpose.msra.mxu0 %v75
    %93 = vmatprep.subr.mxu0 0.0
    %94 = vmatpush1.xpose.msra.mxu0 0.0
    %95 = vmatprep.subr.mxu0 0.0
    %96 = vmatpush1.xpose.msra.mxu0 0.0
    %97 = vmatprep.subr.mxu0 0.0
    %98 = vmatpush1.xpose.msra.mxu0 0.0
    %99 = vmatprep.subr.mxu0 0.0
    %100 = vmatpush1.xpose.msra.mxu0 0.0
    %101 = vmatprep.subr.mxu0 0.0
    %102 = vmatpush1.xpose.msra.mxu0 0.0
    %103 = vmatprep.subr.mxu0 0.0
    %104 = vmatpush1.xpose.msra.mxu0 0.0
    %105 = vmatprep.subr.mxu0 0.0
    %106 = vmatpush1.xpose.msra.mxu0 0.0
    %107 = vmatprep.subr.mxu0 0.0
    %108 = vmatpush1.xpose.msra.mxu0 0.0
    %109 = vmatprep.subr.mxu0 0.0
    %110 = vmatpush1.xpose.msra.mxu0 0.0
    %111 = vmatprep.subr.mxu0 0.0
    %112 = vmatpush1.xpose.msra.mxu0 0.0
    %113 = vmatprep.subr.mxu0 0.0
    %114 = vmatpush1.xpose.msra.mxu0 0.0
    %115 = vmatprep.subr.mxu0 0.0
    %116 = vmatpush1.xpose.msra.mxu0 0.0
    %117 = vmatprep.subr.mxu0 0.0
    %118 = vmatpush1.xpose.msra.mxu0 0.0
    %119 = vmatprep.subr.mxu0 0.0
    %120 = vmatpush1.xpose.msra.mxu0 0.0
    %121 = vmatprep.subr.mxu0 0.0
    %122 = vmatpush1.xpose.msra.mxu0 0.0
    %123 = vmatprep.subr.mxu0 0.0
    %124 = vmatpush1.xpose.msra.mxu0 0.0
    %125 = vmatprep.subr.mxu0 0.0
    %126 = vmatpush1.xpose.msra.mxu0 0.0
    %127 = vmatprep.subr.mxu0 0.0
    %128 = vmatpush1.xpose.msra.mxu0 0.0
    %129 = vmatprep.subr.mxu0 0.0
    %130 = vmatpush1.xpose.msra.mxu0 0.0
    %131 = vmatprep.subr.mxu0 0.0
    %132 = vmatpush1.xpose.msra.mxu0 0.0
    %133 = vmatprep.subr.mxu0 0.0
    %134 = vmatpush1.xpose.msra.mxu0 0.0
    %135 = vmatprep.subr.mxu0 0.0
    %136 = vmatpush1.xpose.msra.mxu0 0.0
    %137 = vmatprep.subr.mxu0 0.0
    %138 = vmatpush1.xpose.msra.mxu0 0.0
    %139 = vmatprep.subr.mxu0 0.0
    %140 = vmatpush1.xpose.msra.mxu0 0.0
    %141 = vmatprep.mubr.f32.mxu0 0.0
    %142 = vmatmul.mubr.f32.gmra.mrb[0].mxu0 %v42
    %v143 = vpop.f32.mrb[0].mxu0
    %v144 = vadd.f32 0.0, %v143
    %v145 = vpop.f32.mrb[0].mxu0
    %146 = vmatprep.mubr.f32.mxu0 0.0
    %147 = vmatmul.mubr.f32.gmra.mrb[0].mxu0 %v45
    %v148 = vpop.f32.mrb[0].mxu0
    %v149 = vadd.f32 0.0, %v148
    %v150 = vpop.f32.mrb[0].mxu0
    %151 = vmatprep.mubr.f32.mxu0 0.0
    %152 = vmatmul.mubr.f32.gmra.mrb[0].mxu0 %v48
    %v153 = vpop.f32.mrb[0].mxu0
    %v154 = vadd.f32 0.0, %v153
    %v155 = vpop.f32.mrb[0].mxu0
    %156 = vmatprep.mubr.f32.mxu0 0.0
    %157 = vmatmul.mubr.f32.gmra.mrb[0].mxu0 %v51
    %v158 = vpop.f32.mrb[0].mxu0
    %v159 = vadd.f32 0.0, %v158
    %v160 = vpop.f32.mrb[0].mxu0
    %161 = vdwg.mxu0
    %v162 = vadd.f32 %v24, %v144
    %v163 = vadd.f32 %v25, %v149
    %v164 = vadd.f32 %v26, %v154
    %v165 = vadd.f32 %v27, %v159
    %166 = vst.msk [vmem:[#allocation2] sm:$0xff] %vm40, %v162
    %167 = vst.msk [vmem:[#allocation2 + $0x8] sm:$0xff] %vm40, %v163
    %168 = vst.msk [vmem:[#allocation2 + $0x10] sm:$0xff] %vm40, %v164
    %169 = vst.msk [vmem:[#allocation2 + $0x18] sm:$0xff] %vm40, %v165
    // Predicated region
    $region18: #{attention_forward.5} parent=1 // pred_check
      %p170 = pneg %p15
    $region19: #{attention_forward.5} parent=1 // pred_check_branch
      %172 = sbr.rel (%p170) target = $region21
    $region20: #{attention_forward.5} parent=1 // pred_region
      %v173 = vld [vmem:[#allocation2] sm:$0xff]
      %v174 = vld [vmem:[#allocation2 + $0x8] sm:$0xff]
      %v175 = vld [vmem:[#allocation2 + $0x10] sm:$0xff]
      %v176 = vld [vmem:[#allocation2 + $0x18] sm:$0xff]
      %v177 = vld [vmem:[%s2] sm:$0x1]
      %v179 = vlaneseq
      %v180 = vshrl.u32 %v179, 7
      %v181 = vsub.s32 0, %v180
      %v182 = vrot.slane %v177, %v181
      %v184 = vadd.f32 %v173, %v182
      %v185 = vadd.f32 %v174, %v182
      %v186 = vadd.f32 %v175, %v182
      %v187 = vadd.f32 %v176, %v182
      %188 = vst.msk [vmem:[#allocation3] sm:$0xff] %vm40, %v184
      %189 = vst.msk [vmem:[#allocation3 + $0x8] sm:$0xff] %vm40, %v185
      %190 = vst.msk [vmem:[#allocation3 + $0x10] sm:$0xff] %vm40, %v186
      %191 = vst.msk [vmem:[#allocation3 + $0x18] sm:$0xff] %vm40, %v187
    $region21: #{attention_forward.5} parent=1 // pred_fallthru
      _
    // Predicated region
    $region22: #{attention_forward.5} parent=1 // pred_check
      _
    $region23: #{attention_forward.5} parent=1 // pred_check_branch
      %193 = sbr.rel (0) target = $region25
    $region24: #{attention_forward.5} parent=1 // pred_region
      %s195 = ssub.s32 512, 512
      %196 = vsyncadd [#allocation4], %s195
      %s197 = sshll.u32 [#allocation3], 4
      %s198 = int_to_ptr.vmem [resolvable:$true] %s197
      %203 = dma.vmem_to_hbm [thread:$0]  %s198, 512, %s3, [#allocation4], 128, 128, 8
    $region25: #{attention_forward.5} parent=1 // pred_fallthru
      _
    // Predicated region
    $region26: #{attention_forward.5} parent=1 // pred_check
      _
    $region27: #{attention_forward.5} parent=1 // pred_check_branch
      %205 = sbr.rel (0) target = $region29
    $region28: #{attention_forward.5} parent=1 // pred_region
      %206 = dma.done [#allocation4], 512
    $region29: #{attention_forward.5} parent=1 // pred_fallthru
      _
    %207 = vsyncpa [#allocation4], 1

// kernel: attention_forward.4
$region0: #{attention_forward.4}
  #allocation0 [shape = 'u32[]', space=smem, size = 0x4, offset = 0x4, fixed_abs, tag = 'smem constant byte address 0x4 - core index']
  #allocation1 [shape = 'u32[144,128]{1,0:T(1,128)}', space=vmem, size = 0x12000, scoped, tag = 'internal scratch']
  %s0 = inlined_call_operand.vmem [shape: f32[2,16,192], index: 0, kind: input, shape index: {}, may-alias: {0,1}]
  %s1 = inlined_call_operand.vmem [shape: f32[2,16,192], index: 1, kind: input, shape index: {}, may-alias: {0,1}]
  %s2 = inlined_call_operand.vmem [shape: f32[2,16,64], index: 2, kind: output, shape index: {}]
  %s3 = sld [smem:[#allocation0]]
  $region41: #{attention_forward.4} parent=0
    _
  %s5 = ssub.s32 1, %s3
  %s6 = scalar_select 0, %s5, %s3
  loop: start=0, step=1, limit=4
  $region2: #{attention_forward.4} parent=0 // loop_pre_header
    _
  $region3: #{attention_forward.4} parent=0 // loop_header
    %s8 = sphi 0, %s12
    %p9 = scmp.ge.s32.totalorder %s8, 4
    %s15 = sphi 0, %s27
    %s16 = sphi 0, %s23
    %s17 = sphi 0, %s15
    %s18 = sphi 0, %s16
    %s19 = sphi 0, %s17
    %s20 = sphi 0, %s18
    %s32 = sphi 0, %s34
    %s35 = sphi 0, %s32
    %s36 = sphi 0, %s35
    %s52 = sphi 0, %s36
    %s58 = sphi 0, %s60
    %s61 = sphi 0, %s58
    %s62 = sphi 0, %s61
    %s78 = sphi 0, %s62
    %s86 = sphi 0, %s88
    %s89 = sphi 0, %s86
    %s90 = sphi 0, %s89
    %s106 = sphi 0, %s90
  $region4: #{attention_forward.4} parent=0 // loop_header_branch
    %11 = sbr.rel (%p9) target = $region8
  $region5: #{attention_forward.4} parent=0 // loop_body
    %s13 = ssub.s32 %s8, 1
    %s14 = ssub.s32 %s8, 2
    %s21 = sadd.s32 1, %s16
    %p22 = scmp.ge.s32.totalorder %s21, 1
    %s23 = scalar_select %p22, 0, %s21
    %s24 = sadd.s32 1, %s15
    %s25 = scalar_select %p22, %s24, %s15
    %p26 = scmp.ge.s32.totalorder %s25, 2
    %s27 = scalar_select %p26, 0, %s25
    %s28 = ssub.s32 %s15, %s27
    %s29 = ssub.s32 %s16, %s23
    %s30 = sor.u32 %s28, %s29
    %p31 = scmp.eq.s32.totalorder %s30, 0
    %s33 = sadd.s32 %s32, 1
    %s34 = scalar_select %p31, %s32, %s33
    %p37 = pneg %p31
    %p38 = scmp.eq.s32.totalorder %s8, 1
    %p39 = por %p37, %p38
    %p40 = scmp.ne.s32.totalorder %s32, %s35
    %p41 = scmp.eq.s32.totalorder %s8, 0
    %p42 = por %p40, %p41
    %p43 = scmp.ne.s32.totalorder %s32, %s35
    %p44 = scmp.eq.s32.totalorder %s13, 1
    %p45 = por %p43, %p44
    %p46 = scmp.ne.s32.totalorder %s35, %s36
    %p47 = scmp.eq.s32.totalorder %s13, 0
    %p48 = por %p46, %p47
    %p49 = scmp.ne.s32.totalorder %s35, %s36
    %p50 = scmp.eq.s32.totalorder %s14, 1
    %p51 = por %p49, %p50
    %p53 = scmp.ne.s32.totalorder %s36, %s52
    %p54 = scmp.eq.s32.totalorder %s14, 0
    %p55 = por %p53, %p54
    %s56 = ssub.s32 %s15, %s27
    %p57 = scmp.eq.s32.totalorder %s56, 0
    %s59 = sadd.s32 %s58, 1
    %s60 = scalar_select %p57, %s58, %s59
    %p63 = pneg %p57
    %p64 = scmp.eq.s32.totalorder %s8, 1
    %p65 = por %p63, %p64
    %p66 = scmp.ne.s32.totalorder %s58, %s61
    %p67 = scmp.eq.s32.totalorder %s8, 0
    %p68 = por %p66, %p67
    %p69 = scmp.ne.s32.totalorder %s58, %s61
    %p70 = scmp.eq.s32.totalorder %s13, 1
    %p71 = por %p69, %p70
    %p72 = scmp.ne.s32.totalorder %s61, %s62
    %p73 = scmp.eq.s32.totalorder %s13, 0
    %p74 = por %p72, %p73
    %p75 = scmp.ne.s32.totalorder %s61, %s62
    %p76 = scmp.eq.s32.totalorder %s14, 1
    %p77 = por %p75, %p76
    %p79 = scmp.ne.s32.totalorder %s62, %s78
    %p80 = scmp.eq.s32.totalorder %s14, 0
    %p81 = por %p79, %p80
    %s82 = ssub.s32 %s15, %s27
    %s83 = ssub.s32 %s16, %s23
    %s84 = sor.u32 %s82, %s83
    %p85 = scmp.eq.s32.totalorder %s84, 0
    %s87 = sadd.s32 %s86, 1
    %s88 = scalar_select %p85, %s86, %s87
    %p91 = pneg %p85
    %p92 = scmp.eq.s32.totalorder %s8, 1
    %p93 = por %p91, %p92
    %p94 = scmp.ne.s32.totalorder %s86, %s89
    %p95 = scmp.eq.s32.totalorder %s8, 0
    %p96 = por %p94, %p95
    %p97 = scmp.ne.s32.totalorder %s86, %s89
    %p98 = scmp.eq.s32.totalorder %s13, 1
    %p99 = por %p97, %p98
    %p100 = scmp.ne.s32.totalorder %s89, %s90
    %p101 = scmp.eq.s32.totalorder %s13, 0
    %p102 = por %p100, %p101
    %p103 = scmp.ne.s32.totalorder %s89, %s90
    %p104 = scmp.eq.s32.totalorder %s14, 1
    %p105 = por %p103, %p104
    %p107 = scmp.ne.s32.totalorder %s90, %s106
    %p108 = scmp.eq.s32.totalorder %s14, 0
    %p109 = por %p107, %p108
    %p110 = scmp.le.s32.totalorder 1, %s8
    %p111 = scmp.lt.s32.totalorder %s8, 3
    %p112 = pnand %p110, %p111
    %p113 = pneg %p112
    // Predicated region
    $region9: #{attention_forward.4} parent=5 // pred_check
      _
    $region10: #{attention_forward.4} parent=5 // pred_check_branch
      %115 = sbr.rel (%p112) target = $region12
    $region11: #{attention_forward.4} parent=5 // pred_region
      %s116 = ssub.s32 %s8, 1
    $region12: #{attention_forward.4} parent=5 // pred_fallthru
      _
    %p117 = scmp.lt.s32.totalorder %s8, 2
    // Predicated region
    $region13: #{attention_forward.4} parent=5 // pred_check
      %p118 = pneg %p117
    $region14: #{attention_forward.4} parent=5 // pred_check_branch
      %120 = sbr.rel (%p118) target = $region16
    $region15: #{attention_forward.4} parent=5 // pred_region
      // Predicated region
      $region17: #{attention_forward.4} parent=15 // pred_check
        %p121 = pneg %p42
      $region18: #{attention_forward.4} parent=15 // pred_check_branch
        %123 = sbr.rel (%p121) target = $region20
      $region19: #{attention_forward.4} parent=15 // pred_region
        %s124 = smul.u32 2, %s16
        %p125 = scmp.lt.s32.totalorder %s15, 1
        %s126 = scalar_select %p125, %s15, 1
        %p127 = scmp.lt.s32.totalorder %s124, 1
        %s128 = scalar_select %p127, %s124, 1
        %s129 = smul.addr %s128, 2
        %s130 = smul.addr %s126, 4
        %s131 = sadd.s32 %s129, %s130
        %s132 = smul.addr %s131, 8
        %s133 = scalar_lea.vmem %s0, %s132
        %s134 = smul.u32 2, %s16
      $region20: #{attention_forward.4} parent=15 // pred_fallthru
        _
      // Predicated region
      $region21: #{attention_forward.4} parent=15 // pred_check
        %p135 = pneg %p68
      $region22: #{attention_forward.4} parent=15 // pred_check_branch
        %137 = sbr.rel (%p135) target = $region24
      $region23: #{attention_forward.4} parent=15 // pred_region
        %p138 = scmp.lt.s32.totalorder %s15, 1
        %s139 = scalar_select %p138, %s15, 1
        %s140 = smul.addr %s139, 4
        %s141 = smul.addr %s140, 8
        %s142 = scalar_lea.vmem %s1, %s141
      $region24: #{attention_forward.4} parent=15 // pred_fallthru
        _
    $region16: #{attention_forward.4} parent=5 // pred_fallthru
      _
    %p143 = scmp.le.s32.totalorder 1, %s8
    %p144 = scmp.lt.s32.totalorder %s8, 3
    %p145 = pnand %p143, %p144
    %p146 = pneg %p145
    // Predicated region
    $region25: #{attention_forward.4} parent=5 // pred_check
      _
    $region26: #{attention_forward.4} parent=5 // pred_check_branch
      %148 = sbr.rel (%p145) target = $region28
    $region27: #{attention_forward.4} parent=5 // pred_region
      %s149 = ssub.s32 %s8, 1
      %s150 = smul.u32 2, %s18
      %p151 = scmp.lt.s32.totalorder %s17, 1
      %s152 = scalar_select %p151, %s17, 1
      %p153 = scmp.lt.s32.totalorder %s150, 1
      %s154 = scalar_select %p153, %s150, 1
      %s155 = smul.addr %s154, 2
      %s156 = smul.addr %s152, 4
      %s157 = sadd.s32 %s155, %s156
      %s158 = smul.addr %s157, 8
      %s159 = scalar_lea.vmem %s0, %s158
      %p160 = pneg %p48
      %p161 = pneg %p45
      %p162 = scmp.lt.s32.totalorder %s17, 1
      %s163 = scalar_select %p162, %s17, 1
      %s164 = smul.addr %s163, 4
      %s165 = smul.addr %s164, 8
      %s166 = scalar_lea.vmem %s1, %s165
      %p167 = pneg %p74
      %p168 = pneg %p71
      %p169 = pneg %p102
      %p170 = pneg %p99
      %s171 = smul.u32 2, %s18
      %p172 = scmp.lt.s32.totalorder %s17, 1
      %s173 = scalar_select %p172, %s17, 1
      %p174 = scmp.lt.s32.totalorder %s171, 1
      %s175 = scalar_select %p174, %s171, 1
      %s176 = smul.addr %s173, 2
      %s177 = sadd.s32 %s175, %s176
      %s178 = smul.addr %s177, 8
      %s179 = scalar_lea.vmem %s2, %s178
      %s180 = smul.u32 2, %s18
      %p181 = scmp.lt.s32.totalorder %s17, 1
      %s182 = scalar_select %p181, %s17, 1
      %p183 = scmp.lt.s32.totalorder %s180, 1
      %s184 = scalar_select %p183, %s180, 1
      %s185 = smul.addr %s184, 2
      %s186 = smul.addr %s182, 4
      %s187 = sadd.s32 %s185, %s186
      %s188 = smul.addr %s187, 8
      %s189 = scalar_lea.vmem %s0, %s188
      %s190 = smul.u32 2, %s18
      %p191 = scmp.lt.s32.totalorder %s17, 1
      %s192 = scalar_select %p191, %s17, 1
      %s193 = smul.addr %s192, 4
      %s194 = smul.addr %s193, 8
      %s195 = scalar_lea.vmem %s1, %s194
      %s196 = smul.u32 2, %s18
      %p197 = scmp.lt.s32.totalorder %s17, 1
      %s198 = scalar_select %p197, %s17, 1
      %p199 = scmp.lt.s32.totalorder %s196, 1
      %s200 = scalar_select %p199, %s196, 1
      %s201 = smul.addr %s198, 2
      %s202 = sadd.s32 %s200, %s201
      %s203 = smul.addr %s202, 8
      %s204 = scalar_lea.vmem %s2, %s203
      %s205 = smul.u32 2, %s18
      %v206 = vld [vmem:[%s189] sm:$0xff]
      %v207 = vld [vmem:[%s189 + $0x10] sm:$0xff]
      %v208 = vld [vmem:[%s195] sm:$0xff]
      %v209 = vld [vmem:[%s195 + $0x10] sm:$0xff]
      %v210 = vld [vmem:[%s195 + $0x8] sm:$0xff]
      %v211 = vld [vmem:[%s195 + $0x18] sm:$0xff]
      %214 = vrot.lane.b32.xlu0 %v206, 120
      %v215 = vpop.permute.xlu0 %214
      %216 = vrot.lane.b32.xlu0 %v207, 120
      %v217 = vpop.permute.xlu0 %216
      %220 = vrot.lane.b32.xlu0 %v206, 112
      %v221 = vpop.permute.xlu0 %220
      %222 = vrot.lane.b32.xlu0 %v207, 112
      %v223 = vpop.permute.xlu0 %222
      %226 = vrot.lane.b32.xlu0 %v206, 104
      %v227 = vpop.permute.xlu0 %226
      %228 = vrot.lane.b32.xlu0 %v207, 104
      %v229 = vpop.permute.xlu0 %228
      %232 = vrot.lane.b32.xlu0 %v206, 96
      %v233 = vpop.permute.xlu0 %232
      %234 = vrot.lane.b32.xlu0 %v207, 96
      %v235 = vpop.permute.xlu0 %234
      %238 = vrot.lane.b32.xlu0 %v206, 88
      %v239 = vpop.permute.xlu0 %238
      %240 = vrot.lane.b32.xlu0 %v207, 88
      %v241 = vpop.permute.xlu0 %240
      %244 = vrot.lane.b32.xlu0 %v206, 80
      %v245 = vpop.permute.xlu0 %244
      %246 = vrot.lane.b32.xlu0 %v207, 80
      %v247 = vpop.permute.xlu0 %246
      %250 = vrot.lane.b32.xlu0 %v206, 72
      %v251 = vpop.permute.xlu0 %250
      %252 = vrot.lane.b32.xlu0 %v207, 72
      %v253 = vpop.permute.xlu0 %252
      %v256 = vcombine.low %v206, %v221
      %v257 = vcombine.high %v206, %v221
      %v259 = vunpack.c.l.s4 1983009808
      %v260 = vunpack.c.0.s8 %v259
      %v261 = vlaneseq
      %v262 = vshrl.u32 %v261, 7
      %v263 = vsub.s32 %v260, %v262
      %v264 = vrot.slane %v256, %v263
      %v266 = vunpack.c.l.s4 1983009808
      %v267 = vunpack.c.0.s8 %v266
      %v268 = vlaneseq
      %v269 = vshrl.u32 %v268, 7
      %v270 = vsub.s32 %v267, %v269
      %v271 = vrot.slane %v257, %v270
      %v272 = vcombine.low %v215, %v227
      %v273 = vcombine.high %v215, %v227
      %v275 = vunpack.c.l.s4 1983009808
      %v276 = vunpack.c.0.s8 %v275
      %v277 = vlaneseq
      %v278 = vshrl.u32 %v277, 7
      %v279 = vsub.s32 %v276, %v278
      %v280 = vrot.slane %v272, %v279
      %v282 = vunpack.c.l.s4 1983009808
      %v283 = vunpack.c.0.s8 %v282
      %v284 = vlaneseq
      %v285 = vshrl.u32 %v284, 7
      %v286 = vsub.s32 %v283, %v285
      %v287 = vrot.slane %v273, %v286
      %v288 = vcombine.low %v233, %v245
      %v289 = vcombine.high %v233, %v245
      %v291 = vunpack.c.l.s4 1983009808
      %v292 = vunpack.c.0.s8 %v291
      %v293 = vlaneseq
      %v294 = vshrl.u32 %v293, 7
      %v295 = vsub.s32 %v292, %v294
      %v296 = vrot.slane %v288, %v295
      %v298 = vunpack.c.l.s4 1983009808
      %v299 = vunpack.c.0.s8 %v298
      %v300 = vlaneseq
      %v301 = vshrl.u32 %v300, 7
      %v302 = vsub.s32 %v299, %v301
      %v303 = vrot.slane %v289, %v302
      %v304 = vcombine.low %v239, %v251
      %v305 = vcombine.high %v239, %v251
      %v307 = vunpack.c.l.s4 1983009808
      %v308 = vunpack.c.0.s8 %v307
      %v309 = vlaneseq
      %v310 = vshrl.u32 %v309, 7
      %v311 = vsub.s32 %v308, %v310
      %v312 = vrot.slane %v304, %v311
      %v314 = vunpack.c.l.s4 1983009808
      %v315 = vunpack.c.0.s8 %v314
      %v316 = vlaneseq
      %v317 = vshrl.u32 %v316, 7
      %v318 = vsub.s32 %v315, %v317
      %v319 = vrot.slane %v305, %v318
      %v320 = vcombine.low %v264, %v280
      %v321 = vcombine.high %v264, %v280
      %v323 = vunpack.c.l.s4 1934713408
      %v324 = vunpack.c.0.s8 %v323
      %v325 = vlaneseq
      %v326 = vshrl.u32 %v325, 7
      %v327 = vsub.s32 %v324, %v326
      %v328 = vrot.slane %v320, %v327
      %v330 = vunpack.c.l.s4 1934713408
      %v331 = vunpack.c.0.s8 %v330
      %v332 = vlaneseq
      %v333 = vshrl.u32 %v332, 7
      %v334 = vsub.s32 %v331, %v333
      %v335 = vrot.slane %v321, %v334
      %v336 = vcombine.low %v271, %v287
      %v337 = vcombine.high %v271, %v287
      %v339 = vunpack.c.l.s4 1934713408
      %v340 = vunpack.c.0.s8 %v339
      %v341 = vlaneseq
      %v342 = vshrl.u32 %v341, 7
      %v343 = vsub.s32 %v340, %v342
      %v344 = vrot.slane %v336, %v343
      %v346 = vunpack.c.l.s4 1934713408
      %v347 = vunpack.c.0.s8 %v346
      %v348 = vlaneseq
      %v349 = vshrl.u32 %v348, 7
      %v350 = vsub.s32 %v347, %v349
      %v351 = vrot.slane %v337, %v350
      %v352 = vcombine.low %v296, %v312
      %v353 = vcombine.high %v296, %v312
      %v355 = vunpack.c.l.s4 1934713408
      %v356 = vunpack.c.0.s8 %v355
      %v357 = vlaneseq
      %v358 = vshrl.u32 %v357, 7
      %v359 = vsub.s32 %v356, %v358
      %v360 = vrot.slane %v352, %v359
      %v362 = vunpack.c.l.s4 1934713408
      %v363 = vunpack.c.0.s8 %v362
      %v364 = vlaneseq
      %v365 = vshrl.u32 %v364, 7
      %v366 = vsub.s32 %v363, %v365
      %v367 = vrot.slane %v353, %v366
      %v368 = vcombine.low %v303, %v319
      %v369 = vcombine.high %v303, %v319
      %v371 = vunpack.c.l.s4 1934713408
      %v372 = vunpack.c.0.s8 %v371
      %v373 = vlaneseq
      %v374 = vshrl.u32 %v373, 7
      %v375 = vsub.s32 %v372, %v374
      %v376 = vrot.slane %v368, %v375
      %v378 = vunpack.c.l.s4 1934713408
      %v379 = vunpack.c.0.s8 %v378
      %v380 = vlaneseq
      %v381 = vshrl.u32 %v380, 7
      %v382 = vsub.s32 %v379, %v381
      %v383 = vrot.slane %v369, %v382
      %v384 = vcombine.low %v328, %v360
      %v385 = vcombine.high %v328, %v360
      %v386 = vcombine.low %v335, %v367
      %v387 = vcombine.high %v335, %v367
      %v388 = vcombine.low %v344, %v376
      %v389 = vcombine.high %v344, %v376
      %v390 = vcombine.low %v351, %v383
      %v391 = vcombine.high %v351, %v383
      %v392 = vcombine.low %v207, %v223
      %v393 = vcombine.high %v207, %v223
      %v395 = vunpack.c.l.s4 1983009808
      %v396 = vunpack.c.0.s8 %v395
      %v397 = vlaneseq
      %v398 = vshrl.u32 %v397, 7
      %v399 = vsub.s32 %v396, %v398
      %v400 = vrot.slane %v392, %v399
      %v402 = vunpack.c.l.s4 1983009808
      %v403 = vunpack.c.0.s8 %v402
      %v404 = vlaneseq
      %v405 = vshrl.u32 %v404, 7
      %v406 = vsub.s32 %v403, %v405
      %v407 = vrot.slane %v393, %v406
      %v408 = vcombine.low %v217, %v229
      %v409 = vcombine.high %v217, %v229
      %v411 = vunpack.c.l.s4 1983009808
      %v412 = vunpack.c.0.s8 %v411
      %v413 = vlaneseq
      %v414 = vshrl.u32 %v413, 7
      %v415 = vsub.s32 %v412, %v414
      %v416 = vrot.slane %v408, %v415
      %v418 = vunpack.c.l.s4 1983009808
      %v419 = vunpack.c.0.s8 %v418
      %v420 = vlaneseq
      %v421 = vshrl.u32 %v420, 7
      %v422 = vsub.s32 %v419, %v421
      %v423 = vrot.slane %v409, %v422
      %v424 = vcombine.low %v235, %v247
      %v425 = vcombine.high %v235, %v247
      %v427 = vunpack.c.l.s4 1983009808
      %v428 = vunpack.c.0.s8 %v427
      %v429 = vlaneseq
      %v430 = vshrl.u32 %v429, 7
      %v431 = vsub.s32 %v428, %v430
      %v432 = vrot.slane %v424, %v431
      %v434 = vunpack.c.l.s4 1983009808
      %v435 = vunpack.c.0.s8 %v434
      %v436 = vlaneseq
      %v437 = vshrl.u32 %v436, 7
      %v438 = vsub.s32 %v435, %v437
      %v439 = vrot.slane %v425, %v438
      %v440 = vcombine.low %v241, %v253
      %v441 = vcombine.high %v241, %v253
      %v443 = vunpack.c.l.s4 1983009808
      %v444 = vunpack.c.0.s8 %v443
      %v445 = vlaneseq
      %v446 = vshrl.u32 %v445, 7
      %v447 = vsub.s32 %v444, %v446
      %v448 = vrot.slane %v440, %v447
      %v450 = vunpack.c.l.s4 1983009808
      %v451 = vunpack.c.0.s8 %v450
      %v452 = vlaneseq
      %v453 = vshrl.u32 %v452, 7
      %v454 = vsub.s32 %v451, %v453
      %v455 = vrot.slane %v441, %v454
      %v456 = vcombine.low %v400, %v416
      %v457 = vcombine.high %v400, %v416
      %v459 = vunpack.c.l.s4 1934713408
      %v460 = vunpack.c.0.s8 %v459
      %v461 = vlaneseq
      %v462 = vshrl.u32 %v461, 7
      %v463 = vsub.s32 %v460, %v462
      %v464 = vrot.slane %v456, %v463
      %v466 = vunpack.c.l.s4 1934713408
      %v467 = vunpack.c.0.s8 %v466
      %v468 = vlaneseq
      %v469 = vshrl.u32 %v468, 7
      %v470 = vsub.s32 %v467, %v469
      %v471 = vrot.slane %v457, %v470
      %v472 = vcombine.low %v407, %v423
      %v473 = vcombine.high %v407, %v423
      %v475 = vunpack.c.l.s4 1934713408
      %v476 = vunpack.c.0.s8 %v475
      %v477 = vlaneseq
      %v478 = vshrl.u32 %v477, 7
      %v479 = vsub.s32 %v476, %v478
      %v480 = vrot.slane %v472, %v479
      %v482 = vunpack.c.l.s4 1934713408
      %v483 = vunpack.c.0.s8 %v482
      %v484 = vlaneseq
      %v485 = vshrl.u32 %v484, 7
      %v486 = vsub.s32 %v483, %v485
      %v487 = vrot.slane %v473, %v486
      %v488 = vcombine.low %v432, %v448
      %v489 = vcombine.high %v432, %v448
      %v491 = vunpack.c.l.s4 1934713408
      %v492 = vunpack.c.0.s8 %v491
      %v493 = vlaneseq
      %v494 = vshrl.u32 %v493, 7
      %v495 = vsub.s32 %v492, %v494
      %v496 = vrot.slane %v488, %v495
      %v498 = vunpack.c.l.s4 1934713408
      %v499 = vunpack.c.0.s8 %v498
      %v500 = vlaneseq
      %v501 = vshrl.u32 %v500, 7
      %v502 = vsub.s32 %v499, %v501
      %v503 = vrot.slane %v489, %v502
      %v504 = vcombine.low %v439, %v455
      %v505 = vcombine.high %v439, %v455
      %v507 = vunpack.c.l.s4 1934713408
      %v508 = vunpack.c.0.s8 %v507
      %v509 = vlaneseq
      %v510 = vshrl.u32 %v509, 7
      %v511 = vsub.s32 %v508, %v510
      %v512 = vrot.slane %v504, %v511
      %v514 = vunpack.c.l.s4 1934713408
      %v515 = vunpack.c.0.s8 %v514
      %v516 = vlaneseq
      %v517 = vshrl.u32 %v516, 7
      %v518 = vsub.s32 %v515, %v517
      %v519 = vrot.slane %v505, %v518
      %v520 = vcombine.low %v464, %v496
      %v521 = vcombine.high %v464, %v496
      %v522 = vcombine.low %v471, %v503
      %v523 = vcombine.high %v471, %v503
      %v524 = vcombine.low %v480, %v512
      %v525 = vcombine.high %v480, %v512
      %v526 = vcombine.low %v487, %v519
      %v527 = vcombine.high %v487, %v519
      %v528 = vcombine.low %v384, %v386
      %v529 = vcombine.high %v384, %v386
      %v531 = vunpack.c.l.s4 1983009808
      %v532 = vunpack.c.0.s8 %v531
      %v533 = vlaneseq
      %v534 = vshrl.u32 %v533, 7
      %v535 = vsub.s32 %v532, %v534
      %v536 = vrot.slane %v528, %v535
      %v538 = vunpack.c.l.s4 1983009808
      %v539 = vunpack.c.0.s8 %v538
      %v540 = vlaneseq
      %v541 = vshrl.u32 %v540, 7
      %v542 = vsub.s32 %v539, %v541
      %v543 = vrot.slane %v529, %v542
      %v544 = vcombine.low %v385, %v387
      %v545 = vcombine.high %v385, %v387
      %v547 = vunpack.c.l.s4 1983009808
      %v548 = vunpack.c.0.s8 %v547
      %v549 = vlaneseq
      %v550 = vshrl.u32 %v549, 7
      %v551 = vsub.s32 %v548, %v550
      %v552 = vrot.slane %v544, %v551
      %v554 = vunpack.c.l.s4 1983009808
      %v555 = vunpack.c.0.s8 %v554
      %v556 = vlaneseq
      %v557 = vshrl.u32 %v556, 7
      %v558 = vsub.s32 %v555, %v557
      %v559 = vrot.slane %v545, %v558
      %v560 = vcombine.low %v388, %v390
      %v561 = vcombine.high %v388, %v390
      %v563 = vunpack.c.l.s4 1983009808
      %v564 = vunpack.c.0.s8 %v563
      %v565 = vlaneseq
      %v566 = vshrl.u32 %v565, 7
      %v567 = vsub.s32 %v564, %v566
      %v568 = vrot.slane %v560, %v567
      %v570 = vunpack.c.l.s4 1983009808
      %v571 = vunpack.c.0.s8 %v570
      %v572 = vlaneseq
      %v573 = vshrl.u32 %v572, 7
      %v574 = vsub.s32 %v571, %v573
      %v575 = vrot.slane %v561, %v574
      %v576 = vcombine.low %v389, %v391
      %v577 = vcombine.high %v389, %v391
      %v579 = vunpack.c.l.s4 1983009808
      %v580 = vunpack.c.0.s8 %v579
      %v581 = vlaneseq
      %v582 = vshrl.u32 %v581, 7
      %v583 = vsub.s32 %v580, %v582
      %v584 = vrot.slane %v576, %v583
      %v586 = vunpack.c.l.s4 1983009808
      %v587 = vunpack.c.0.s8 %v586
      %v588 = vlaneseq
      %v589 = vshrl.u32 %v588, 7
      %v590 = vsub.s32 %v587, %v589
      %v591 = vrot.slane %v577, %v590
      %v592 = vcombine.low %v536, %v552
      %v593 = vcombine.high %v536, %v552
      %v595 = vunpack.c.l.s4 1934713408
      %v596 = vunpack.c.0.s8 %v595
      %v597 = vlaneseq
      %v598 = vshrl.u32 %v597, 7
      %v599 = vsub.s32 %v596, %v598
      %v600 = vrot.slane %v592, %v599
      %v602 = vunpack.c.l.s4 1934713408
      %v603 = vunpack.c.0.s8 %v602
      %v604 = vlaneseq
      %v605 = vshrl.u32 %v604, 7
      %v606 = vsub.s32 %v603, %v605
      %v607 = vrot.slane %v593, %v606
      %v608 = vcombine.low %v543, %v559
      %v609 = vcombine.high %v543, %v559
      %v611 = vunpack.c.l.s4 1934713408
      %v612 = vunpack.c.0.s8 %v611
      %v613 = vlaneseq
      %v614 = vshrl.u32 %v613, 7
      %v615 = vsub.s32 %v612, %v614
      %v616 = vrot.slane %v608, %v615
      %v618 = vunpack.c.l.s4 1934713408
      %v619 = vunpack.c.0.s8 %v618
      %v620 = vlaneseq
      %v621 = vshrl.u32 %v620, 7
      %v622 = vsub.s32 %v619, %v621
      %v623 = vrot.slane %v609, %v622
      %v624 = vcombine.low %v568, %v584
      %v625 = vcombine.high %v568, %v584
      %v627 = vunpack.c.l.s4 1934713408
      %v628 = vunpack.c.0.s8 %v627
      %v629 = vlaneseq
      %v630 = vshrl.u32 %v629, 7
      %v631 = vsub.s32 %v628, %v630
      %v632 = vrot.slane %v624, %v631
      %v634 = vunpack.c.l.s4 1934713408
      %v635 = vunpack.c.0.s8 %v634
      %v636 = vlaneseq
      %v637 = vshrl.u32 %v636, 7
      %v638 = vsub.s32 %v635, %v637
      %v639 = vrot.slane %v625, %v638
      %v640 = vcombine.low %v575, %v591
      %v641 = vcombine.high %v575, %v591
      %v643 = vunpack.c.l.s4 1934713408
      %v644 = vunpack.c.0.s8 %v643
      %v645 = vlaneseq
      %v646 = vshrl.u32 %v645, 7
      %v647 = vsub.s32 %v644, %v646
      %v648 = vrot.slane %v640, %v647
      %v650 = vunpack.c.l.s4 1934713408
      %v651 = vunpack.c.0.s8 %v650
      %v652 = vlaneseq
      %v653 = vshrl.u32 %v652, 7
      %v654 = vsub.s32 %v651, %v653
      %v655 = vrot.slane %v641, %v654
      %v656 = vcombine.low %v600, %v632
      %v657 = vcombine.high %v600, %v632
      %v658 = vcombine.low %v607, %v639
      %v659 = vcombine.high %v607, %v639
      %v660 = vcombine.low %v616, %v648
      %v661 = vcombine.high %v616, %v648
      %v662 = vcombine.low %v623, %v655
      %v663 = vcombine.high %v623, %v655
      %v664 = vcombine.low %v520, %v522
      %v665 = vcombine.high %v520, %v522
      %v667 = vunpack.c.l.s4 1983009808
      %v668 = vunpack.c.0.s8 %v667
      %v669 = vlaneseq
      %v670 = vshrl.u32 %v669, 7
      %v671 = vsub.s32 %v668, %v670
      %v672 = vrot.slane %v664, %v671
      %v674 = vunpack.c.l.s4 1983009808
      %v675 = vunpack.c.0.s8 %v674
      %v676 = vlaneseq
      %v677 = vshrl.u32 %v676, 7
      %v678 = vsub.s32 %v675, %v677
      %v679 = vrot.slane %v665, %v678
      %v680 = vcombine.low %v521, %v523
      %v681 = vcombine.high %v521, %v523
      %v683 = vunpack.c.l.s4 1983009808
      %v684 = vunpack.c.0.s8 %v683
      %v685 = vlaneseq
      %v686 = vshrl.u32 %v685, 7
      %v687 = vsub.s32 %v684, %v686
      %v688 = vrot.slane %v680, %v687
      %v690 = vunpack.c.l.s4 1983009808
      %v691 = vunpack.c.0.s8 %v690
      %v692 = vlaneseq
      %v693 = vshrl.u32 %v692, 7
      %v694 = vsub.s32 %v691, %v693
      %v695 = vrot.slane %v681, %v694
      %v696 = vcombine.low %v524, %v526
      %v697 = vcombine.high %v524, %v526
      %v699 = vunpack.c.l.s4 1983009808
      %v700 = vunpack.c.0.s8 %v699
      %v701 = vlaneseq
      %v702 = vshrl.u32 %v701, 7
      %v703 = vsub.s32 %v700, %v702
      %v704 = vrot.slane %v696, %v703
      %v706 = vunpack.c.l.s4 1983009808
      %v707 = vunpack.c.0.s8 %v706
      %v708 = vlaneseq
      %v709 = vshrl.u32 %v708, 7
      %v710 = vsub.s32 %v707, %v709
      %v711 = vrot.slane %v697, %v710
      %v712 = vcombine.low %v525, %v527
      %v713 = vcombine.high %v525, %v527
      %v715 = vunpack.c.l.s4 1983009808
      %v716 = vunpack.c.0.s8 %v715
      %v717 = vlaneseq
      %v718 = vshrl.u32 %v717, 7
      %v719 = vsub.s32 %v716, %v718
      %v720 = vrot.slane %v712, %v719
      %v722 = vunpack.c.l.s4 1983009808
      %v723 = vunpack.c.0.s8 %v722
      %v724 = vlaneseq
      %v725 = vshrl.u32 %v724, 7
      %v726 = vsub.s32 %v723, %v725
      %v727 = vrot.slane %v713, %v726
      %v728 = vcombine.low %v672, %v688
      %v729 = vcombine.high %v672, %v688
      %v731 = vunpack.c.l.s4 1934713408
      %v732 = vunpack.c.0.s8 %v731
      %v733 = vlaneseq
      %v734 = vshrl.u32 %v733, 7
      %v735 = vsub.s32 %v732, %v734
      %v736 = vrot.slane %v728, %v735
      %v738 = vunpack.c.l.s4 1934713408
      %v739 = vunpack.c.0.s8 %v738
      %v740 = vlaneseq
      %v741 = vshrl.u32 %v740, 7
      %v742 = vsub.s32 %v739, %v741
      %v743 = vrot.slane %v729, %v742
      %v744 = vcombine.low %v679, %v695
      %v745 = vcombine.high %v679, %v695
      %v747 = vunpack.c.l.s4 1934713408
      %v748 = vunpack.c.0.s8 %v747
      %v749 = vlaneseq
      %v750 = vshrl.u32 %v749, 7
      %v751 = vsub.s32 %v748, %v750
      %v752 = vrot.slane %v744, %v751
      %v754 = vunpack.c.l.s4 1934713408
      %v755 = vunpack.c.0.s8 %v754
      %v756 = vlaneseq
      %v757 = vshrl.u32 %v756, 7
      %v758 = vsub.s32 %v755, %v757
      %v759 = vrot.slane %v745, %v758
      %v760 = vcombine.low %v704, %v720
      %v761 = vcombine.high %v704, %v720
      %v763 = vunpack.c.l.s4 1934713408
      %v764 = vunpack.c.0.s8 %v763
      %v765 = vlaneseq
      %v766 = vshrl.u32 %v765, 7
      %v767 = vsub.s32 %v764, %v766
      %v768 = vrot.slane %v760, %v767
      %v770 = vunpack.c.l.s4 1934713408
      %v771 = vunpack.c.0.s8 %v770
      %v772 = vlaneseq
      %v773 = vshrl.u32 %v772, 7
      %v774 = vsub.s32 %v771, %v773
      %v775 = vrot.slane %v761, %v774
      %v776 = vcombine.low %v711, %v727
      %v777 = vcombine.high %v711, %v727
      %v779 = vunpack.c.l.s4 1934713408
      %v780 = vunpack.c.0.s8 %v779
      %v781 = vlaneseq
      %v782 = vshrl.u32 %v781, 7
      %v783 = vsub.s32 %v780, %v782
      %v784 = vrot.slane %v776, %v783
      %v786 = vunpack.c.l.s4 1934713408
      %v787 = vunpack.c.0.s8 %v786
      %v788 = vlaneseq
      %v789 = vshrl.u32 %v788, 7
      %v790 = vsub.s32 %v787, %v789
      %v791 = vrot.slane %v777, %v790
      %v792 = vcombine.low %v736, %v768
      %v793 = vcombine.high %v736, %v768
      %v794 = vcombine.low %v743, %v775
      %v795 = vcombine.high %v743, %v775
      %v796 = vcombine.low %v752, %v784
      %v797 = vcombine.high %v752, %v784
      %v798 = vcombine.low %v759, %v791
      %v799 = vcombine.high %v759, %v791
      %802 = vrot.lane.b32.xlu0 %v208, 120
      %v803 = vpop.permute.xlu0 %802
      %804 = vrot.lane.b32.xlu0 %v209, 120
      %v805 = vpop.permute.xlu0 %804
      %806 = vrot.lane.b32.xlu0 %v208, 112
      %v807 = vpop.permute.xlu0 %806
      %808 = vrot.lane.b32.xlu0 %v209, 112
      %v809 = vpop.permute.xlu0 %808
      %810 = vrot.lane.b32.xlu0 %v208, 104
      %v811 = vpop.permute.xlu0 %810
      %812 = vrot.lane.b32.xlu0 %v209, 104
      %v813 = vpop.permute.xlu0 %812
      %814 = vrot.lane.b32.xlu0 %v208, 96
      %v815 = vpop.permute.xlu0 %814
      %816 = vrot.lane.b32.xlu0 %v209, 96
      %v817 = vpop.permute.xlu0 %816
      %818 = vrot.lane.b32.xlu0 %v208, 88
      %v819 = vpop.permute.xlu0 %818
      %820 = vrot.lane.b32.xlu0 %v209, 88
      %v821 = vpop.permute.xlu0 %820
      %822 = vrot.lane.b32.xlu0 %v208, 80
      %v823 = vpop.permute.xlu0 %822
      %824 = vrot.lane.b32.xlu0 %v209, 80
      %v825 = vpop.permute.xlu0 %824
      %826 = vrot.lane.b32.xlu0 %v208, 72
      %v827 = vpop.permute.xlu0 %826
      %828 = vrot.lane.b32.xlu0 %v209, 72
      %v829 = vpop.permute.xlu0 %828
      %830 = vrot.lane.b32.xlu0 %v208, 64
      %v831 = vpop.permute.xlu0 %830
      %832 = vrot.lane.b32.xlu0 %v209, 64
      %v833 = vpop.permute.xlu0 %832
      %834 = vrot.lane.b32.xlu0 %v803, 64
      %v835 = vpop.permute.xlu0 %834
      %836 = vrot.lane.b32.xlu0 %v805, 64
      %v837 = vpop.permute.xlu0 %836
      %838 = vrot.lane.b32.xlu0 %v807, 64
      %v839 = vpop.permute.xlu0 %838
      %840 = vrot.lane.b32.xlu0 %v809, 64
      %v841 = vpop.permute.xlu0 %840
      %842 = vrot.lane.b32.xlu0 %v811, 64
      %v843 = vpop.permute.xlu0 %842
      %844 = vrot.lane.b32.xlu0 %v813, 64
      %v845 = vpop.permute.xlu0 %844
      %846 = vrot.lane.b32.xlu0 %v815, 64
      %v847 = vpop.permute.xlu0 %846
      %848 = vrot.lane.b32.xlu0 %v817, 64
      %v849 = vpop.permute.xlu0 %848
      %850 = vrot.lane.b32.xlu0 %v819, 64
      %v851 = vpop.permute.xlu0 %850
      %852 = vrot.lane.b32.xlu0 %v821, 64
      %v853 = vpop.permute.xlu0 %852
      %854 = vrot.lane.b32.xlu0 %v823, 64
      %v855 = vpop.permute.xlu0 %854
      %856 = vrot.lane.b32.xlu0 %v825, 64
      %v857 = vpop.permute.xlu0 %856
      %858 = vrot.lane.b32.xlu0 %v827, 64
      %v859 = vpop.permute.xlu0 %858
      %860 = vrot.lane.b32.xlu0 %v829, 64
      %v861 = vpop.permute.xlu0 %860
      %v878 = vcombine.low %v831, %v839
      %v879 = vcombine.high %v831, %v839
      %v881 = vunpack.c.l.s4 1983009808
      %v882 = vunpack.c.0.s8 %v881
      %v883 = vlaneseq
      %v884 = vshrl.u32 %v883, 7
      %v885 = vsub.s32 %v882, %v884
      %v886 = vrot.slane %v878, %v885
      %v888 = vunpack.c.l.s4 1983009808
      %v889 = vunpack.c.0.s8 %v888
      %v890 = vlaneseq
      %v891 = vshrl.u32 %v890, 7
      %v892 = vsub.s32 %v889, %v891
      %v893 = vrot.slane %v879, %v892
      %v894 = vcombine.low %v835, %v843
      %v895 = vcombine.high %v835, %v843
      %v897 = vunpack.c.l.s4 1983009808
      %v898 = vunpack.c.0.s8 %v897
      %v899 = vlaneseq
      %v900 = vshrl.u32 %v899, 7
      %v901 = vsub.s32 %v898, %v900
      %v902 = vrot.slane %v894, %v901
      %v904 = vunpack.c.l.s4 1983009808
      %v905 = vunpack.c.0.s8 %v904
      %v906 = vlaneseq
      %v907 = vshrl.u32 %v906, 7
      %v908 = vsub.s32 %v905, %v907
      %v909 = vrot.slane %v895, %v908
      %v910 = vcombine.low %v847, %v855
      %v911 = vcombine.high %v847, %v855
      %v913 = vunpack.c.l.s4 1983009808
      %v914 = vunpack.c.0.s8 %v913
      %v915 = vlaneseq
      %v916 = vshrl.u32 %v915, 7
      %v917 = vsub.s32 %v914, %v916
      %v918 = vrot.slane %v910, %v917
      %v920 = vunpack.c.l.s4 1983009808
      %v921 = vunpack.c.0.s8 %v920
      %v922 = vlaneseq
      %v923 = vshrl.u32 %v922, 7
      %v924 = vsub.s32 %v921, %v923
      %v925 = vrot.slane %v911, %v924
      %v926 = vcombine.low %v851, %v859
      %v927 = vcombine.high %v851, %v859
      %v929 = vunpack.c.l.s4 1983009808
      %v930 = vunpack.c.0.s8 %v929
      %v931 = vlaneseq
      %v932 = vshrl.u32 %v931, 7
      %v933 = vsub.s32 %v930, %v932
      %v934 = vrot.slane %v926, %v933
      %v936 = vunpack.c.l.s4 1983009808
      %v937 = vunpack.c.0.s8 %v936
      %v938 = vlaneseq
      %v939 = vshrl.u32 %v938, 7
      %v940 = vsub.s32 %v937, %v939
      %v941 = vrot.slane %v927, %v940
      %v942 = vcombine.low %v886, %v902
      %v943 = vcombine.high %v886, %v902
      %v945 = vunpack.c.l.s4 1934713408
      %v946 = vunpack.c.0.s8 %v945
      %v947 = vlaneseq
      %v948 = vshrl.u32 %v947, 7
      %v949 = vsub.s32 %v946, %v948
      %v950 = vrot.slane %v942, %v949
      %v952 = vunpack.c.l.s4 1934713408
      %v953 = vunpack.c.0.s8 %v952
      %v954 = vlaneseq
      %v955 = vshrl.u32 %v954, 7
      %v956 = vsub.s32 %v953, %v955
      %v957 = vrot.slane %v943, %v956
      %v958 = vcombine.low %v893, %v909
      %v959 = vcombine.high %v893, %v909
      %v961 = vunpack.c.l.s4 1934713408
      %v962 = vunpack.c.0.s8 %v961
      %v963 = vlaneseq
      %v964 = vshrl.u32 %v963, 7
      %v965 = vsub.s32 %v962, %v964
      %v966 = vrot.slane %v958, %v965
      %v968 = vunpack.c.l.s4 1934713408
      %v969 = vunpack.c.0.s8 %v968
      %v970 = vlaneseq
      %v971 = vshrl.u32 %v970, 7
      %v972 = vsub.s32 %v969, %v971
      %v973 = vrot.slane %v959, %v972
      %v974 = vcombine.low %v918, %v934
      %v975 = vcombine.high %v918, %v934
      %v977 = vunpack.c.l.s4 1934713408
      %v978 = vunpack.c.0.s8 %v977
      %v979 = vlaneseq
      %v980 = vshrl.u32 %v979, 7
      %v981 = vsub.s32 %v978, %v980
      %v982 = vrot.slane %v974, %v981
      %v984 = vunpack.c.l.s4 1934713408
      %v985 = vunpack.c.0.s8 %v984
      %v986 = vlaneseq
      %v987 = vshrl.u32 %v986, 7
      %v988 = vsub.s32 %v985, %v987
      %v989 = vrot.slane %v975, %v988
      %v990 = vcombine.low %v925, %v941
      %v991 = vcombine.high %v925, %v941
      %v993 = vunpack.c.l.s4 1934713408
      %v994 = vunpack.c.0.s8 %v993
      %v995 = vlaneseq
      %v996 = vshrl.u32 %v995, 7
      %v997 = vsub.s32 %v994, %v996
      %v998 = vrot.slane %v990, %v997
      %v1000 = vunpack.c.l.s4 1934713408
      %v1001 = vunpack.c.0.s8 %v1000
      %v1002 = vlaneseq
      %v1003 = vshrl.u32 %v1002, 7
      %v1004 = vsub.s32 %v1001, %v1003
      %v1005 = vrot.slane %v991, %v1004
      %v1006 = vcombine.low %v950, %v982
      %v1007 = vcombine.high %v950, %v982
      %v1008 = vcombine.low %v957, %v989
      %v1009 = vcombine.high %v957, %v989
      %v1010 = vcombine.low %v966, %v998
      %v1011 = vcombine.high %v966, %v998
      %v1012 = vcombine.low %v973, %v1005
      %v1013 = vcombine.high %v973, %v1005
      %v1014 = vcombine.low %v833, %v841
      %v1015 = vcombine.high %v833, %v841
      %v1017 = vunpack.c.l.s4 1983009808
      %v1018 = vunpack.c.0.s8 %v1017
      %v1019 = vlaneseq
      %v1020 = vshrl.u32 %v1019, 7
      %v1021 = vsub.s32 %v1018, %v1020
      %v1022 = vrot.slane %v1014, %v1021
      %v1024 = vunpack.c.l.s4 1983009808
      %v1025 = vunpack.c.0.s8 %v1024
      %v1026 = vlaneseq
      %v1027 = vshrl.u32 %v1026, 7
      %v1028 = vsub.s32 %v1025, %v1027
      %v1029 = vrot.slane %v1015, %v1028
      %v1030 = vcombine.low %v837, %v845
      %v1031 = vcombine.high %v837, %v845
      %v1033 = vunpack.c.l.s4 1983009808
      %v1034 = vunpack.c.0.s8 %v1033
      %v1035 = vlaneseq
      %v1036 = vshrl.u32 %v1035, 7
      %v1037 = vsub.s32 %v1034, %v1036
      %v1038 = vrot.slane %v1030, %v1037
      %v1040 = vunpack.c.l.s4 1983009808
      %v1041 = vunpack.c.0.s8 %v1040
      %v1042 = vlaneseq
      %v1043 = vshrl.u32 %v1042, 7
      %v1044 = vsub.s32 %v1041, %v1043
      %v1045 = vrot.slane %v1031, %v1044
      %v1046 = vcombine.low %v849, %v857
      %v1047 = vcombine.high %v849, %v857
      %v1049 = vunpack.c.l.s4 1983009808
      %v1050 = vunpack.c.0.s8 %v1049
      %v1051 = vlaneseq
      %v1052 = vshrl.u32 %v1051, 7
      %v1053 = vsub.s32 %v1050, %v1052
      %v1054 = vrot.slane %v1046, %v1053
      %v1056 = vunpack.c.l.s4 1983009808
      %v1057 = vunpack.c.0.s8 %v1056
      %v1058 = vlaneseq
      %v1059 = vshrl.u32 %v1058, 7
      %v1060 = vsub.s32 %v1057, %v1059
      %v1061 = vrot.slane %v1047, %v1060
      %v1062 = vcombine.low %v853, %v861
      %v1063 = vcombine.high %v853, %v861
      %v1065 = vunpack.c.l.s4 1983009808
      %v1066 = vunpack.c.0.s8 %v1065
      %v1067 = vlaneseq
      %v1068 = vshrl.u32 %v1067, 7
      %v1069 = vsub.s32 %v1066, %v1068
      %v1070 = vrot.slane %v1062, %v1069
      %v1072 = vunpack.c.l.s4 1983009808
      %v1073 = vunpack.c.0.s8 %v1072
      %v1074 = vlaneseq
      %v1075 = vshrl.u32 %v1074, 7
      %v1076 = vsub.s32 %v1073, %v1075
      %v1077 = vrot.slane %v1063, %v1076
      %v1078 = vcombine.low %v1022, %v1038
      %v1079 = vcombine.high %v1022, %v1038
      %v1081 = vunpack.c.l.s4 1934713408
      %v1082 = vunpack.c.0.s8 %v1081
      %v1083 = vlaneseq
      %v1084 = vshrl.u32 %v1083, 7
      %v1085 = vsub.s32 %v1082, %v1084
      %v1086 = vrot.slane %v1078, %v1085
      %v1088 = vunpack.c.l.s4 1934713408
      %v1089 = vunpack.c.0.s8 %v1088
      %v1090 = vlaneseq
      %v1091 = vshrl.u32 %v1090, 7
      %v1092 = vsub.s32 %v1089, %v1091
      %v1093 = vrot.slane %v1079, %v1092
      %v1094 = vcombine.low %v1029, %v1045
      %v1095 = vcombine.high %v1029, %v1045
      %v1097 = vunpack.c.l.s4 1934713408
      %v1098 = vunpack.c.0.s8 %v1097
      %v1099 = vlaneseq
      %v1100 = vshrl.u32 %v1099, 7
      %v1101 = vsub.s32 %v1098, %v1100
      %v1102 = vrot.slane %v1094, %v1101
      %v1104 = vunpack.c.l.s4 1934713408
      %v1105 = vunpack.c.0.s8 %v1104
      %v1106 = vlaneseq
      %v1107 = vshrl.u32 %v1106, 7
      %v1108 = vsub.s32 %v1105, %v1107
      %v1109 = vrot.slane %v1095, %v1108
      %v1110 = vcombine.low %v1054, %v1070
      %v1111 = vcombine.high %v1054, %v1070
      %v1113 = vunpack.c.l.s4 1934713408
      %v1114 = vunpack.c.0.s8 %v1113
      %v1115 = vlaneseq
      %v1116 = vshrl.u32 %v1115, 7
      %v1117 = vsub.s32 %v1114, %v1116
      %v1118 = vrot.slane %v1110, %v1117
      %v1120 = vunpack.c.l.s4 1934713408
      %v1121 = vunpack.c.0.s8 %v1120
      %v1122 = vlaneseq
      %v1123 = vshrl.u32 %v1122, 7
      %v1124 = vsub.s32 %v1121, %v1123
      %v1125 = vrot.slane %v1111, %v1124
      %v1126 = vcombine.low %v1061, %v1077
      %v1127 = vcombine.high %v1061, %v1077
      %v1129 = vunpack.c.l.s4 1934713408
      %v1130 = vunpack.c.0.s8 %v1129
      %v1131 = vlaneseq
      %v1132 = vshrl.u32 %v1131, 7
      %v1133 = vsub.s32 %v1130, %v1132
      %v1134 = vrot.slane %v1126, %v1133
      %v1136 = vunpack.c.l.s4 1934713408
      %v1137 = vunpack.c.0.s8 %v1136
      %v1138 = vlaneseq
      %v1139 = vshrl.u32 %v1138, 7
      %v1140 = vsub.s32 %v1137, %v1139
      %v1141 = vrot.slane %v1127, %v1140
      %v1142 = vcombine.low %v1086, %v1118
      %v1143 = vcombine.high %v1086, %v1118
      %v1144 = vcombine.low %v1093, %v1125
      %v1145 = vcombine.high %v1093, %v1125
      %v1146 = vcombine.low %v1102, %v1134
      %v1147 = vcombine.high %v1102, %v1134
      %v1148 = vcombine.low %v1109, %v1141
      %v1149 = vcombine.high %v1109, %v1141
      %v1150 = vcombine.low %v1006, %v1008
      %v1151 = vcombine.high %v1006, %v1008
      %v1153 = vunpack.c.l.s4 1983009808
      %v1154 = vunpack.c.0.s8 %v1153
      %v1155 = vlaneseq
      %v1156 = vshrl.u32 %v1155, 7
      %v1157 = vsub.s32 %v1154, %v1156
      %v1158 = vrot.slane %v1150, %v1157
      %v1160 = vunpack.c.l.s4 1983009808
      %v1161 = vunpack.c.0.s8 %v1160
      %v1162 = vlaneseq
      %v1163 = vshrl.u32 %v1162, 7
      %v1164 = vsub.s32 %v1161, %v1163
      %v1165 = vrot.slane %v1151, %v1164
      %v1166 = vcombine.low %v1007, %v1009
      %v1167 = vcombine.high %v1007, %v1009
      %v1169 = vunpack.c.l.s4 1983009808
      %v1170 = vunpack.c.0.s8 %v1169
      %v1171 = vlaneseq
      %v1172 = vshrl.u32 %v1171, 7
      %v1173 = vsub.s32 %v1170, %v1172
      %v1174 = vrot.slane %v1166, %v1173
      %v1176 = vunpack.c.l.s4 1983009808
      %v1177 = vunpack.c.0.s8 %v1176
      %v1178 = vlaneseq
      %v1179 = vshrl.u32 %v1178, 7
      %v1180 = vsub.s32 %v1177, %v1179
      %v1181 = vrot.slane %v1167, %v1180
      %v1182 = vcombine.low %v1010, %v1012
      %v1183 = vcombine.high %v1010, %v1012
      %v1185 = vunpack.c.l.s4 1983009808
      %v1186 = vunpack.c.0.s8 %v1185
      %v1187 = vlaneseq
      %v1188 = vshrl.u32 %v1187, 7
      %v1189 = vsub.s32 %v1186, %v1188
      %v1190 = vrot.slane %v1182, %v1189
      %v1192 = vunpack.c.l.s4 1983009808
      %v1193 = vunpack.c.0.s8 %v1192
      %v1194 = vlaneseq
      %v1195 = vshrl.u32 %v1194, 7
      %v1196 = vsub.s32 %v1193, %v1195
      %v1197 = vrot.slane %v1183, %v1196
      %v1198 = vcombine.low %v1011, %v1013
      %v1199 = vcombine.high %v1011, %v1013
      %v1201 = vunpack.c.l.s4 1983009808
      %v1202 = vunpack.c.0.s8 %v1201
      %v1203 = vlaneseq
      %v1204 = vshrl.u32 %v1203, 7
      %v1205 = vsub.s32 %v1202, %v1204
      %v1206 = vrot.slane %v1198, %v1205
      %v1208 = vunpack.c.l.s4 1983009808
      %v1209 = vunpack.c.0.s8 %v1208
      %v1210 = vlaneseq
      %v1211 = vshrl.u32 %v1210, 7
      %v1212 = vsub.s32 %v1209, %v1211
      %v1213 = vrot.slane %v1199, %v1212
      %v1214 = vcombine.low %v1158, %v1174
      %v1215 = vcombine.high %v1158, %v1174
      %v1217 = vunpack.c.l.s4 1934713408
      %v1218 = vunpack.c.0.s8 %v1217
      %v1219 = vlaneseq
      %v1220 = vshrl.u32 %v1219, 7
      %v1221 = vsub.s32 %v1218, %v1220
      %v1222 = vrot.slane %v1214, %v1221
      %v1224 = vunpack.c.l.s4 1934713408
      %v1225 = vunpack.c.0.s8 %v1224
      %v1226 = vlaneseq
      %v1227 = vshrl.u32 %v1226, 7
      %v1228 = vsub.s32 %v1225, %v1227
      %v1229 = vrot.slane %v1215, %v1228
      %v1230 = vcombine.low %v1165, %v1181
      %v1231 = vcombine.high %v1165, %v1181
      %v1233 = vunpack.c.l.s4 1934713408
      %v1234 = vunpack.c.0.s8 %v1233
      %v1235 = vlaneseq
      %v1236 = vshrl.u32 %v1235, 7
      %v1237 = vsub.s32 %v1234, %v1236
      %v1238 = vrot.slane %v1230, %v1237
      %v1240 = vunpack.c.l.s4 1934713408
      %v1241 = vunpack.c.0.s8 %v1240
      %v1242 = vlaneseq
      %v1243 = vshrl.u32 %v1242, 7
      %v1244 = vsub.s32 %v1241, %v1243
      %v1245 = vrot.slane %v1231, %v1244
      %v1246 = vcombine.low %v1190, %v1206
      %v1247 = vcombine.high %v1190, %v1206
      %v1249 = vunpack.c.l.s4 1934713408
      %v1250 = vunpack.c.0.s8 %v1249
      %v1251 = vlaneseq
      %v1252 = vshrl.u32 %v1251, 7
      %v1253 = vsub.s32 %v1250, %v1252
      %v1254 = vrot.slane %v1246, %v1253
      %v1256 = vunpack.c.l.s4 1934713408
      %v1257 = vunpack.c.0.s8 %v1256
      %v1258 = vlaneseq
      %v1259 = vshrl.u32 %v1258, 7
      %v1260 = vsub.s32 %v1257, %v1259
      %v1261 = vrot.slane %v1247, %v1260
      %v1262 = vcombine.low %v1197, %v1213
      %v1263 = vcombine.high %v1197, %v1213
      %v1265 = vunpack.c.l.s4 1934713408
      %v1266 = vunpack.c.0.s8 %v1265
      %v1267 = vlaneseq
      %v1268 = vshrl.u32 %v1267, 7
      %v1269 = vsub.s32 %v1266, %v1268
      %v1270 = vrot.slane %v1262, %v1269
      %v1272 = vunpack.c.l.s4 1934713408
      %v1273 = vunpack.c.0.s8 %v1272
      %v1274 = vlaneseq
      %v1275 = vshrl.u32 %v1274, 7
      %v1276 = vsub.s32 %v1273, %v1275
      %v1277 = vrot.slane %v1263, %v1276
      %v1278 = vcombine.low %v1222, %v1254
      %v1279 = vcombine.high %v1222, %v1254
      %v1280 = vcombine.low %v1229, %v1261
      %v1281 = vcombine.high %v1229, %v1261
      %v1282 = vcombine.low %v1238, %v1270
      %v1283 = vcombine.high %v1238, %v1270
      %v1284 = vcombine.low %v1245, %v1277
      %v1285 = vcombine.high %v1245, %v1277
      %v1286 = vcombine.low %v1142, %v1144
      %v1287 = vcombine.high %v1142, %v1144
      %v1289 = vunpack.c.l.s4 1983009808
      %v1290 = vunpack.c.0.s8 %v1289
      %v1291 = vlaneseq
      %v1292 = vshrl.u32 %v1291, 7
      %v1293 = vsub.s32 %v1290, %v1292
      %v1294 = vrot.slane %v1286, %v1293
      %v1296 = vunpack.c.l.s4 1983009808
      %v1297 = vunpack.c.0.s8 %v1296
      %v1298 = vlaneseq
      %v1299 = vshrl.u32 %v1298, 7
      %v1300 = vsub.s32 %v1297, %v1299
      %v1301 = vrot.slane %v1287, %v1300
      %v1302 = vcombine.low %v1143, %v1145
      %v1303 = vcombine.high %v1143, %v1145
      %v1305 = vunpack.c.l.s4 1983009808
      %v1306 = vunpack.c.0.s8 %v1305
      %v1307 = vlaneseq
      %v1308 = vshrl.u32 %v1307, 7
      %v1309 = vsub.s32 %v1306, %v1308
      %v1310 = vrot.slane %v1302, %v1309
      %v1312 = vunpack.c.l.s4 1983009808
      %v1313 = vunpack.c.0.s8 %v1312
      %v1314 = vlaneseq
      %v1315 = vshrl.u32 %v1314, 7
      %v1316 = vsub.s32 %v1313, %v1315
      %v1317 = vrot.slane %v1303, %v1316
      %v1318 = vcombine.low %v1146, %v1148
      %v1319 = vcombine.high %v1146, %v1148
      %v1321 = vunpack.c.l.s4 1983009808
      %v1322 = vunpack.c.0.s8 %v1321
      %v1323 = vlaneseq
      %v1324 = vshrl.u32 %v1323, 7
      %v1325 = vsub.s32 %v1322, %v1324
      %v1326 = vrot.slane %v1318, %v1325
      %v1328 = vunpack.c.l.s4 1983009808
      %v1329 = vunpack.c.0.s8 %v1328
      %v1330 = vlaneseq
      %v1331 = vshrl.u32 %v1330, 7
      %v1332 = vsub.s32 %v1329, %v1331
      %v1333 = vrot.slane %v1319, %v1332
      %v1334 = vcombine.low %v1147, %v1149
      %v1335 = vcombine.high %v1147, %v1149
      %v1337 = vunpack.c.l.s4 1983009808
      %v1338 = vunpack.c.0.s8 %v1337
      %v1339 = vlaneseq
      %v1340 = vshrl.u32 %v1339, 7
      %v1341 = vsub.s32 %v1338, %v1340
      %v1342 = vrot.slane %v1334, %v1341
      %v1344 = vunpack.c.l.s4 1983009808
      %v1345 = vunpack.c.0.s8 %v1344
      %v1346 = vlaneseq
      %v1347 = vshrl.u32 %v1346, 7
      %v1348 = vsub.s32 %v1345, %v1347
      %v1349 = vrot.slane %v1335, %v1348
      %v1350 = vcombine.low %v1294, %v1310
      %v1351 = vcombine.high %v1294, %v1310
      %v1353 = vunpack.c.l.s4 1934713408
      %v1354 = vunpack.c.0.s8 %v1353
      %v1355 = vlaneseq
      %v1356 = vshrl.u32 %v1355, 7
      %v1357 = vsub.s32 %v1354, %v1356
      %v1358 = vrot.slane %v1350, %v1357
      %v1360 = vunpack.c.l.s4 1934713408
      %v1361 = vunpack.c.0.s8 %v1360
      %v1362 = vlaneseq
      %v1363 = vshrl.u32 %v1362, 7
      %v1364 = vsub.s32 %v1361, %v1363
      %v1365 = vrot.slane %v1351, %v1364
      %v1366 = vcombine.low %v1301, %v1317
      %v1367 = vcombine.high %v1301, %v1317
      %v1369 = vunpack.c.l.s4 1934713408
      %v1370 = vunpack.c.0.s8 %v1369
      %v1371 = vlaneseq
      %v1372 = vshrl.u32 %v1371, 7
      %v1373 = vsub.s32 %v1370, %v1372
      %v1374 = vrot.slane %v1366, %v1373
      %v1376 = vunpack.c.l.s4 1934713408
      %v1377 = vunpack.c.0.s8 %v1376
      %v1378 = vlaneseq
      %v1379 = vshrl.u32 %v1378, 7
      %v1380 = vsub.s32 %v1377, %v1379
      %v1381 = vrot.slane %v1367, %v1380
      %v1382 = vcombine.low %v1326, %v1342
      %v1383 = vcombine.high %v1326, %v1342
      %v1385 = vunpack.c.l.s4 1934713408
      %v1386 = vunpack.c.0.s8 %v1385
      %v1387 = vlaneseq
      %v1388 = vshrl.u32 %v1387, 7
      %v1389 = vsub.s32 %v1386, %v1388
      %v1390 = vrot.slane %v1382, %v1389
      %v1392 = vunpack.c.l.s4 1934713408
      %v1393 = vunpack.c.0.s8 %v1392
      %v1394 = vlaneseq
      %v1395 = vshrl.u32 %v1394, 7
      %v1396 = vsub.s32 %v1393, %v1395
      %v1397 = vrot.slane %v1383, %v1396
      %v1398 = vcombine.low %v1333, %v1349
      %v1399 = vcombine.high %v1333, %v1349
      %v1401 = vunpack.c.l.s4 1934713408
      %v1402 = vunpack.c.0.s8 %v1401
      %v1403 = vlaneseq
      %v1404 = vshrl.u32 %v1403, 7
      %v1405 = vsub.s32 %v1402, %v1404
      %v1406 = vrot.slane %v1398, %v1405
      %v1408 = vunpack.c.l.s4 1934713408
      %v1409 = vunpack.c.0.s8 %v1408
      %v1410 = vlaneseq
      %v1411 = vshrl.u32 %v1410, 7
      %v1412 = vsub.s32 %v1409, %v1411
      %v1413 = vrot.slane %v1399, %v1412
      %v1414 = vcombine.low %v1358, %v1390
      %v1415 = vcombine.high %v1358, %v1390
      %v1416 = vcombine.low %v1365, %v1397
      %v1417 = vcombine.high %v1365, %v1397
      %v1418 = vcombine.low %v1374, %v1406
      %v1419 = vcombine.high %v1374, %v1406
      %v1420 = vcombine.low %v1381, %v1413
      %v1421 = vcombine.high %v1381, %v1413
      %1424 = vrot.lane.b32.xlu0 %v210, 120
      %v1425 = vpop.permute.xlu0 %1424
      %1426 = vrot.lane.b32.xlu0 %v211, 120
      %v1427 = vpop.permute.xlu0 %1426
      %1430 = vrot.lane.b32.xlu0 %v210, 112
      %v1431 = vpop.permute.xlu0 %1430
      %1432 = vrot.lane.b32.xlu0 %v211, 112
      %v1433 = vpop.permute.xlu0 %1432
      %1436 = vrot.lane.b32.xlu0 %v210, 104
      %v1437 = vpop.permute.xlu0 %1436
      %1438 = vrot.lane.b32.xlu0 %v211, 104
      %v1439 = vpop.permute.xlu0 %1438
      %1442 = vrot.lane.b32.xlu0 %v210, 96
      %v1443 = vpop.permute.xlu0 %1442
      %1444 = vrot.lane.b32.xlu0 %v211, 96
      %v1445 = vpop.permute.xlu0 %1444
      %1448 = vrot.lane.b32.xlu0 %v210, 88
      %v1449 = vpop.permute.xlu0 %1448
      %1450 = vrot.lane.b32.xlu0 %v211, 88
      %v1451 = vpop.permute.xlu0 %1450
      %1454 = vrot.lane.b32.xlu0 %v210, 80
      %v1455 = vpop.permute.xlu0 %1454
      %1456 = vrot.lane.b32.xlu0 %v211, 80
      %v1457 = vpop.permute.xlu0 %1456
      %1460 = vrot.lane.b32.xlu0 %v210, 72
      %v1461 = vpop.permute.xlu0 %1460
      %1462 = vrot.lane.b32.xlu0 %v211, 72
      %v1463 = vpop.permute.xlu0 %1462
      %v1466 = vcombine.low %v210, %v1431
      %v1467 = vcombine.high %v210, %v1431
      %v1469 = vunpack.c.l.s4 1983009808
      %v1470 = vunpack.c.0.s8 %v1469
      %v1471 = vlaneseq
      %v1472 = vshrl.u32 %v1471, 7
      %v1473 = vsub.s32 %v1470, %v1472
      %v1474 = vrot.slane %v1466, %v1473
      %v1476 = vunpack.c.l.s4 1983009808
      %v1477 = vunpack.c.0.s8 %v1476
      %v1478 = vlaneseq
      %v1479 = vshrl.u32 %v1478, 7
      %v1480 = vsub.s32 %v1477, %v1479
      %v1481 = vrot.slane %v1467, %v1480
      %v1482 = vcombine.low %v1425, %v1437
      %v1483 = vcombine.high %v1425, %v1437
      %v1485 = vunpack.c.l.s4 1983009808
      %v1486 = vunpack.c.0.s8 %v1485
      %v1487 = vlaneseq
      %v1488 = vshrl.u32 %v1487, 7
      %v1489 = vsub.s32 %v1486, %v1488
      %v1490 = vrot.slane %v1482, %v1489
      %v1492 = vunpack.c.l.s4 1983009808
      %v1493 = vunpack.c.0.s8 %v1492
      %v1494 = vlaneseq
      %v1495 = vshrl.u32 %v1494, 7
      %v1496 = vsub.s32 %v1493, %v1495
      %v1497 = vrot.slane %v1483, %v1496
      %v1498 = vcombine.low %v1443, %v1455
      %v1499 = vcombine.high %v1443, %v1455
      %v1501 = vunpack.c.l.s4 1983009808
      %v1502 = vunpack.c.0.s8 %v1501
      %v1503 = vlaneseq
      %v1504 = vshrl.u32 %v1503, 7
      %v1505 = vsub.s32 %v1502, %v1504
      %v1506 = vrot.slane %v1498, %v1505
      %v1508 = vunpack.c.l.s4 1983009808
      %v1509 = vunpack.c.0.s8 %v1508
      %v1510 = vlaneseq
      %v1511 = vshrl.u32 %v1510, 7
      %v1512 = vsub.s32 %v1509, %v1511
      %v1513 = vrot.slane %v1499, %v1512
      %v1514 = vcombine.low %v1449, %v1461
      %v1515 = vcombine.high %v1449, %v1461
      %v1517 = vunpack.c.l.s4 1983009808
      %v1518 = vunpack.c.0.s8 %v1517
      %v1519 = vlaneseq
      %v1520 = vshrl.u32 %v1519, 7
      %v1521 = vsub.s32 %v1518, %v1520
      %v1522 = vrot.slane %v1514, %v1521
      %v1524 = vunpack.c.l.s4 1983009808
      %v1525 = vunpack.c.0.s8 %v1524
      %v1526 = vlaneseq
      %v1527 = vshrl.u32 %v1526, 7
      %v1528 = vsub.s32 %v1525, %v1527
      %v1529 = vrot.slane %v1515, %v1528
      %v1530 = vcombine.low %v1474, %v1490
      %v1531 = vcombine.high %v1474, %v1490
      %v1533 = vunpack.c.l.s4 1934713408
      %v1534 = vunpack.c.0.s8 %v1533
      %v1535 = vlaneseq
      %v1536 = vshrl.u32 %v1535, 7
      %v1537 = vsub.s32 %v1534, %v1536
      %v1538 = vrot.slane %v1530, %v1537
      %v1540 = vunpack.c.l.s4 1934713408
      %v1541 = vunpack.c.0.s8 %v1540
      %v1542 = vlaneseq
      %v1543 = vshrl.u32 %v1542, 7
      %v1544 = vsub.s32 %v1541, %v1543
      %v1545 = vrot.slane %v1531, %v1544
      %v1546 = vcombine.low %v1481, %v1497
      %v1547 = vcombine.high %v1481, %v1497
      %v1549 = vunpack.c.l.s4 1934713408
      %v1550 = vunpack.c.0.s8 %v1549
      %v1551 = vlaneseq
      %v1552 = vshrl.u32 %v1551, 7
      %v1553 = vsub.s32 %v1550, %v1552
      %v1554 = vrot.slane %v1546, %v1553
      %v1556 = vunpack.c.l.s4 1934713408
      %v1557 = vunpack.c.0.s8 %v1556
      %v1558 = vlaneseq
      %v1559 = vshrl.u32 %v1558, 7
      %v1560 = vsub.s32 %v1557, %v1559
      %v1561 = vrot.slane %v1547, %v1560
      %v1562 = vcombine.low %v1506, %v1522
      %v1563 = vcombine.high %v1506, %v1522
      %v1565 = vunpack.c.l.s4 1934713408
      %v1566 = vunpack.c.0.s8 %v1565
      %v1567 = vlaneseq
      %v1568 = vshrl.u32 %v1567, 7
      %v1569 = vsub.s32 %v1566, %v1568
      %v1570 = vrot.slane %v1562, %v1569
      %v1572 = vunpack.c.l.s4 1934713408
      %v1573 = vunpack.c.0.s8 %v1572
      %v1574 = vlaneseq
      %v1575 = vshrl.u32 %v1574, 7
      %v1576 = vsub.s32 %v1573, %v1575
      %v1577 = vrot.slane %v1563, %v1576
      %v1578 = vcombine.low %v1513, %v1529
      %v1579 = vcombine.high %v1513, %v1529
      %v1581 = vunpack.c.l.s4 1934713408
      %v1582 = vunpack.c.0.s8 %v1581
      %v1583 = vlaneseq
      %v1584 = vshrl.u32 %v1583, 7
      %v1585 = vsub.s32 %v1582, %v1584
      %v1586 = vrot.slane %v1578, %v1585
      %v1588 = vunpack.c.l.s4 1934713408
      %v1589 = vunpack.c.0.s8 %v1588
      %v1590 = vlaneseq
      %v1591 = vshrl.u32 %v1590, 7
      %v1592 = vsub.s32 %v1589, %v1591
      %v1593 = vrot.slane %v1579, %v1592
      %v1594 = vcombine.low %v1538, %v1570
      %v1595 = vcombine.high %v1538, %v1570
      %v1596 = vcombine.low %v1545, %v1577
      %v1597 = vcombine.high %v1545, %v1577
      %v1598 = vcombine.low %v1554, %v1586
      %v1599 = vcombine.high %v1554, %v1586
      %v1600 = vcombine.low %v1561, %v1593
      %v1601 = vcombine.high %v1561, %v1593
      %v1602 = vcombine.low %v211, %v1433
      %v1603 = vcombine.high %v211, %v1433
      %v1605 = vunpack.c.l.s4 1983009808
      %v1606 = vunpack.c.0.s8 %v1605
      %v1607 = vlaneseq
      %v1608 = vshrl.u32 %v1607, 7
      %v1609 = vsub.s32 %v1606, %v1608
      %v1610 = vrot.slane %v1602, %v1609
      %v1612 = vunpack.c.l.s4 1983009808
      %v1613 = vunpack.c.0.s8 %v1612
      %v1614 = vlaneseq
      %v1615 = vshrl.u32 %v1614, 7
      %v1616 = vsub.s32 %v1613, %v1615
      %v1617 = vrot.slane %v1603, %v1616
      %v1618 = vcombine.low %v1427, %v1439
      %v1619 = vcombine.high %v1427, %v1439
      %v1621 = vunpack.c.l.s4 1983009808
      %v1622 = vunpack.c.0.s8 %v1621
      %v1623 = vlaneseq
      %v1624 = vshrl.u32 %v1623, 7
      %v1625 = vsub.s32 %v1622, %v1624
      %v1626 = vrot.slane %v1618, %v1625
      %v1628 = vunpack.c.l.s4 1983009808
      %v1629 = vunpack.c.0.s8 %v1628
      %v1630 = vlaneseq
      %v1631 = vshrl.u32 %v1630, 7
      %v1632 = vsub.s32 %v1629, %v1631
      %v1633 = vrot.slane %v1619, %v1632
      %v1634 = vcombine.low %v1445, %v1457
      %v1635 = vcombine.high %v1445, %v1457
      %v1637 = vunpack.c.l.s4 1983009808
      %v1638 = vunpack.c.0.s8 %v1637
      %v1639 = vlaneseq
      %v1640 = vshrl.u32 %v1639, 7
      %v1641 = vsub.s32 %v1638, %v1640
      %v1642 = vrot.slane %v1634, %v1641
      %v1644 = vunpack.c.l.s4 1983009808
      %v1645 = vunpack.c.0.s8 %v1644
      %v1646 = vlaneseq
      %v1647 = vshrl.u32 %v1646, 7
      %v1648 = vsub.s32 %v1645, %v1647
      %v1649 = vrot.slane %v1635, %v1648
      %v1650 = vcombine.low %v1451, %v1463
      %v1651 = vcombine.high %v1451, %v1463
      %v1653 = vunpack.c.l.s4 1983009808
      %v1654 = vunpack.c.0.s8 %v1653
      %v1655 = vlaneseq
      %v1656 = vshrl.u32 %v1655, 7
      %v1657 = vsub.s32 %v1654, %v1656
      %v1658 = vrot.slane %v1650, %v1657
      %v1660 = vunpack.c.l.s4 1983009808
      %v1661 = vunpack.c.0.s8 %v1660
      %v1662 = vlaneseq
      %v1663 = vshrl.u32 %v1662, 7
      %v1664 = vsub.s32 %v1661, %v1663
      %v1665 = vrot.slane %v1651, %v1664
      %v1666 = vcombine.low %v1610, %v1626
      %v1667 = vcombine.high %v1610, %v1626
      %v1669 = vunpack.c.l.s4 1934713408
      %v1670 = vunpack.c.0.s8 %v1669
      %v1671 = vlaneseq
      %v1672 = vshrl.u32 %v1671, 7
      %v1673 = vsub.s32 %v1670, %v1672
      %v1674 = vrot.slane %v1666, %v1673
      %v1676 = vunpack.c.l.s4 1934713408
      %v1677 = vunpack.c.0.s8 %v1676
      %v1678 = vlaneseq
      %v1679 = vshrl.u32 %v1678, 7
      %v1680 = vsub.s32 %v1677, %v1679
      %v1681 = vrot.slane %v1667, %v1680
      %v1682 = vcombine.low %v1617, %v1633
      %v1683 = vcombine.high %v1617, %v1633
      %v1685 = vunpack.c.l.s4 1934713408
      %v1686 = vunpack.c.0.s8 %v1685
      %v1687 = vlaneseq
      %v1688 = vshrl.u32 %v1687, 7
      %v1689 = vsub.s32 %v1686, %v1688
      %v1690 = vrot.slane %v1682, %v1689
      %v1692 = vunpack.c.l.s4 1934713408
      %v1693 = vunpack.c.0.s8 %v1692
      %v1694 = vlaneseq
      %v1695 = vshrl.u32 %v1694, 7
      %v1696 = vsub.s32 %v1693, %v1695
      %v1697 = vrot.slane %v1683, %v1696
      %v1698 = vcombine.low %v1642, %v1658
      %v1699 = vcombine.high %v1642, %v1658
      %v1701 = vunpack.c.l.s4 1934713408
      %v1702 = vunpack.c.0.s8 %v1701
      %v1703 = vlaneseq
      %v1704 = vshrl.u32 %v1703, 7
      %v1705 = vsub.s32 %v1702, %v1704
      %v1706 = vrot.slane %v1698, %v1705
      %v1708 = vunpack.c.l.s4 1934713408
      %v1709 = vunpack.c.0.s8 %v1708
      %v1710 = vlaneseq
      %v1711 = vshrl.u32 %v1710, 7
      %v1712 = vsub.s32 %v1709, %v1711
      %v1713 = vrot.slane %v1699, %v1712
      %v1714 = vcombine.low %v1649, %v1665
      %v1715 = vcombine.high %v1649, %v1665
      %v1717 = vunpack.c.l.s4 1934713408
      %v1718 = vunpack.c.0.s8 %v1717
      %v1719 = vlaneseq
      %v1720 = vshrl.u32 %v1719, 7
      %v1721 = vsub.s32 %v1718, %v1720
      %v1722 = vrot.slane %v1714, %v1721
      %v1724 = vunpack.c.l.s4 1934713408
      %v1725 = vunpack.c.0.s8 %v1724
      %v1726 = vlaneseq
      %v1727 = vshrl.u32 %v1726, 7
      %v1728 = vsub.s32 %v1725, %v1727
      %v1729 = vrot.slane %v1715, %v1728
      %v1730 = vcombine.low %v1674, %v1706
      %v1731 = vcombine.high %v1674, %v1706
      %v1732 = vcombine.low %v1681, %v1713
      %v1733 = vcombine.high %v1681, %v1713
      %v1734 = vcombine.low %v1690, %v1722
      %v1735 = vcombine.high %v1690, %v1722
      %v1736 = vcombine.low %v1697, %v1729
      %v1737 = vcombine.high %v1697, %v1729
      %v1738 = vcombine.low %v1594, %v1596
      %v1739 = vcombine.high %v1594, %v1596
      %v1741 = vunpack.c.l.s4 1983009808
      %v1742 = vunpack.c.0.s8 %v1741
      %v1743 = vlaneseq
      %v1744 = vshrl.u32 %v1743, 7
      %v1745 = vsub.s32 %v1742, %v1744
      %v1746 = vrot.slane %v1738, %v1745
      %v1748 = vunpack.c.l.s4 1983009808
      %v1749 = vunpack.c.0.s8 %v1748
      %v1750 = vlaneseq
      %v1751 = vshrl.u32 %v1750, 7
      %v1752 = vsub.s32 %v1749, %v1751
      %v1753 = vrot.slane %v1739, %v1752
      %v1754 = vcombine.low %v1595, %v1597
      %v1755 = vcombine.high %v1595, %v1597
      %v1757 = vunpack.c.l.s4 1983009808
      %v1758 = vunpack.c.0.s8 %v1757
      %v1759 = vlaneseq
      %v1760 = vshrl.u32 %v1759, 7
      %v1761 = vsub.s32 %v1758, %v1760
      %v1762 = vrot.slane %v1754, %v1761
      %v1764 = vunpack.c.l.s4 1983009808
      %v1765 = vunpack.c.0.s8 %v1764
      %v1766 = vlaneseq
      %v1767 = vshrl.u32 %v1766, 7
      %v1768 = vsub.s32 %v1765, %v1767
      %v1769 = vrot.slane %v1755, %v1768
      %v1770 = vcombine.low %v1598, %v1600
      %v1771 = vcombine.high %v1598, %v1600
      %v1773 = vunpack.c.l.s4 1983009808
      %v1774 = vunpack.c.0.s8 %v1773
      %v1775 = vlaneseq
      %v1776 = vshrl.u32 %v1775, 7
      %v1777 = vsub.s32 %v1774, %v1776
      %v1778 = vrot.slane %v1770, %v1777
      %v1780 = vunpack.c.l.s4 1983009808
      %v1781 = vunpack.c.0.s8 %v1780
      %v1782 = vlaneseq
      %v1783 = vshrl.u32 %v1782, 7
      %v1784 = vsub.s32 %v1781, %v1783
      %v1785 = vrot.slane %v1771, %v1784
      %v1786 = vcombine.low %v1599, %v1601
      %v1787 = vcombine.high %v1599, %v1601
      %v1789 = vunpack.c.l.s4 1983009808
      %v1790 = vunpack.c.0.s8 %v1789
      %v1791 = vlaneseq
      %v1792 = vshrl.u32 %v1791, 7
      %v1793 = vsub.s32 %v1790, %v1792
      %v1794 = vrot.slane %v1786, %v1793
      %v1796 = vunpack.c.l.s4 1983009808
      %v1797 = vunpack.c.0.s8 %v1796
      %v1798 = vlaneseq
      %v1799 = vshrl.u32 %v1798, 7
      %v1800 = vsub.s32 %v1797, %v1799
      %v1801 = vrot.slane %v1787, %v1800
      %v1802 = vcombine.low %v1746, %v1762
      %v1803 = vcombine.high %v1746, %v1762
      %v1805 = vunpack.c.l.s4 1934713408
      %v1806 = vunpack.c.0.s8 %v1805
      %v1807 = vlaneseq
      %v1808 = vshrl.u32 %v1807, 7
      %v1809 = vsub.s32 %v1806, %v1808
      %v1810 = vrot.slane %v1802, %v1809
      %v1812 = vunpack.c.l.s4 1934713408
      %v1813 = vunpack.c.0.s8 %v1812
      %v1814 = vlaneseq
      %v1815 = vshrl.u32 %v1814, 7
      %v1816 = vsub.s32 %v1813, %v1815
      %v1817 = vrot.slane %v1803, %v1816
      %v1818 = vcombine.low %v1753, %v1769
      %v1819 = vcombine.high %v1753, %v1769
      %v1821 = vunpack.c.l.s4 1934713408
      %v1822 = vunpack.c.0.s8 %v1821
      %v1823 = vlaneseq
      %v1824 = vshrl.u32 %v1823, 7
      %v1825 = vsub.s32 %v1822, %v1824
      %v1826 = vrot.slane %v1818, %v1825
      %v1828 = vunpack.c.l.s4 1934713408
      %v1829 = vunpack.c.0.s8 %v1828
      %v1830 = vlaneseq
      %v1831 = vshrl.u32 %v1830, 7
      %v1832 = vsub.s32 %v1829, %v1831
      %v1833 = vrot.slane %v1819, %v1832
      %v1834 = vcombine.low %v1778, %v1794
      %v1835 = vcombine.high %v1778, %v1794
      %v1837 = vunpack.c.l.s4 1934713408
      %v1838 = vunpack.c.0.s8 %v1837
      %v1839 = vlaneseq
      %v1840 = vshrl.u32 %v1839, 7
      %v1841 = vsub.s32 %v1838, %v1840
      %v1842 = vrot.slane %v1834, %v1841
      %v1844 = vunpack.c.l.s4 1934713408
      %v1845 = vunpack.c.0.s8 %v1844
      %v1846 = vlaneseq
      %v1847 = vshrl.u32 %v1846, 7
      %v1848 = vsub.s32 %v1845, %v1847
      %v1849 = vrot.slane %v1835, %v1848
      %v1850 = vcombine.low %v1785, %v1801
      %v1851 = vcombine.high %v1785, %v1801
      %v1853 = vunpack.c.l.s4 1934713408
      %v1854 = vunpack.c.0.s8 %v1853
      %v1855 = vlaneseq
      %v1856 = vshrl.u32 %v1855, 7
      %v1857 = vsub.s32 %v1854, %v1856
      %v1858 = vrot.slane %v1850, %v1857
      %v1860 = vunpack.c.l.s4 1934713408
      %v1861 = vunpack.c.0.s8 %v1860
      %v1862 = vlaneseq
      %v1863 = vshrl.u32 %v1862, 7
      %v1864 = vsub.s32 %v1861, %v1863
      %v1865 = vrot.slane %v1851, %v1864
      %v1866 = vcombine.low %v1810, %v1842
      %v1867 = vcombine.high %v1810, %v1842
      %v1868 = vcombine.low %v1817, %v1849
      %v1869 = vcombine.high %v1817, %v1849
      %v1870 = vcombine.low %v1826, %v1858
      %v1871 = vcombine.high %v1826, %v1858
      %v1872 = vcombine.low %v1833, %v1865
      %v1873 = vcombine.high %v1833, %v1865
      %v1874 = vcombine.low %v1730, %v1732
      %v1875 = vcombine.high %v1730, %v1732
      %v1877 = vunpack.c.l.s4 1983009808
      %v1878 = vunpack.c.0.s8 %v1877
      %v1879 = vlaneseq
      %v1880 = vshrl.u32 %v1879, 7
      %v1881 = vsub.s32 %v1878, %v1880
      %v1882 = vrot.slane %v1874, %v1881
      %v1884 = vunpack.c.l.s4 1983009808
      %v1885 = vunpack.c.0.s8 %v1884
      %v1886 = vlaneseq
      %v1887 = vshrl.u32 %v1886, 7
      %v1888 = vsub.s32 %v1885, %v1887
      %v1889 = vrot.slane %v1875, %v1888
      %v1890 = vcombine.low %v1731, %v1733
      %v1891 = vcombine.high %v1731, %v1733
      %v1893 = vunpack.c.l.s4 1983009808
      %v1894 = vunpack.c.0.s8 %v1893
      %v1895 = vlaneseq
      %v1896 = vshrl.u32 %v1895, 7
      %v1897 = vsub.s32 %v1894, %v1896
      %v1898 = vrot.slane %v1890, %v1897
      %v1900 = vunpack.c.l.s4 1983009808
      %v1901 = vunpack.c.0.s8 %v1900
      %v1902 = vlaneseq
      %v1903 = vshrl.u32 %v1902, 7
      %v1904 = vsub.s32 %v1901, %v1903
      %v1905 = vrot.slane %v1891, %v1904
      %v1906 = vcombine.low %v1734, %v1736
      %v1907 = vcombine.high %v1734, %v1736
      %v1909 = vunpack.c.l.s4 1983009808
      %v1910 = vunpack.c.0.s8 %v1909
      %v1911 = vlaneseq
      %v1912 = vshrl.u32 %v1911, 7
      %v1913 = vsub.s32 %v1910, %v1912
      %v1914 = vrot.slane %v1906, %v1913
      %v1916 = vunpack.c.l.s4 1983009808
      %v1917 = vunpack.c.0.s8 %v1916
      %v1918 = vlaneseq
      %v1919 = vshrl.u32 %v1918, 7
      %v1920 = vsub.s32 %v1917, %v1919
      %v1921 = vrot.slane %v1907, %v1920
      %v1922 = vcombine.low %v1735, %v1737
      %v1923 = vcombine.high %v1735, %v1737
      %v1925 = vunpack.c.l.s4 1983009808
      %v1926 = vunpack.c.0.s8 %v1925
      %v1927 = vlaneseq
      %v1928 = vshrl.u32 %v1927, 7
      %v1929 = vsub.s32 %v1926, %v1928
      %v1930 = vrot.slane %v1922, %v1929
      %v1932 = vunpack.c.l.s4 1983009808
      %v1933 = vunpack.c.0.s8 %v1932
      %v1934 = vlaneseq
      %v1935 = vshrl.u32 %v1934, 7
      %v1936 = vsub.s32 %v1933, %v1935
      %v1937 = vrot.slane %v1923, %v1936
      %v1938 = vcombine.low %v1882, %v1898
      %v1939 = vcombine.high %v1882, %v1898
      %v1941 = vunpack.c.l.s4 1934713408
      %v1942 = vunpack.c.0.s8 %v1941
      %v1943 = vlaneseq
      %v1944 = vshrl.u32 %v1943, 7
      %v1945 = vsub.s32 %v1942, %v1944
      %v1946 = vrot.slane %v1938, %v1945
      %v1948 = vunpack.c.l.s4 1934713408
      %v1949 = vunpack.c.0.s8 %v1948
      %v1950 = vlaneseq
      %v1951 = vshrl.u32 %v1950, 7
      %v1952 = vsub.s32 %v1949, %v1951
      %v1953 = vrot.slane %v1939, %v1952
      %v1954 = vcombine.low %v1889, %v1905
      %v1955 = vcombine.high %v1889, %v1905
      %v1957 = vunpack.c.l.s4 1934713408
      %v1958 = vunpack.c.0.s8 %v1957
      %v1959 = vlaneseq
      %v1960 = vshrl.u32 %v1959, 7
      %v1961 = vsub.s32 %v1958, %v1960
      %v1962 = vrot.slane %v1954, %v1961
      %v1964 = vunpack.c.l.s4 1934713408
      %v1965 = vunpack.c.0.s8 %v1964
      %v1966 = vlaneseq
      %v1967 = vshrl.u32 %v1966, 7
      %v1968 = vsub.s32 %v1965, %v1967
      %v1969 = vrot.slane %v1955, %v1968
      %v1970 = vcombine.low %v1914, %v1930
      %v1971 = vcombine.high %v1914, %v1930
      %v1973 = vunpack.c.l.s4 1934713408
      %v1974 = vunpack.c.0.s8 %v1973
      %v1975 = vlaneseq
      %v1976 = vshrl.u32 %v1975, 7
      %v1977 = vsub.s32 %v1974, %v1976
      %v1978 = vrot.slane %v1970, %v1977
      %v1980 = vunpack.c.l.s4 1934713408
      %v1981 = vunpack.c.0.s8 %v1980
      %v1982 = vlaneseq
      %v1983 = vshrl.u32 %v1982, 7
      %v1984 = vsub.s32 %v1981, %v1983
      %v1985 = vrot.slane %v1971, %v1984
      %v1986 = vcombine.low %v1921, %v1937
      %v1987 = vcombine.high %v1921, %v1937
      %v1989 = vunpack.c.l.s4 1934713408
      %v1990 = vunpack.c.0.s8 %v1989
      %v1991 = vlaneseq
      %v1992 = vshrl.u32 %v1991, 7
      %v1993 = vsub.s32 %v1990, %v1992
      %v1994 = vrot.slane %v1986, %v1993
      %v1996 = vunpack.c.l.s4 1934713408
      %v1997 = vunpack.c.0.s8 %v1996
      %v1998 = vlaneseq
      %v1999 = vshrl.u32 %v1998, 7
      %v2000 = vsub.s32 %v1997, %v1999
      %v2001 = vrot.slane %v1987, %v2000
      %v2002 = vcombine.low %v1946, %v1978
      %v2003 = vcombine.high %v1946, %v1978
      %v2004 = vcombine.low %v1953, %v1985
      %v2005 = vcombine.high %v1953, %v1985
      %v2006 = vcombine.low %v1962, %v1994
      %v2007 = vcombine.high %v1962, %v1994
      %v2008 = vcombine.low %v1969, %v2001
      %v2009 = vcombine.high %v1969, %v2001
      %v2010 = vmul.f32 %v656, 0.35355338
      %v2011 = vmul.f32 %v792, 0.35355338
      %v2012 = vmul.f32 %v657, 0.35355338
      %v2013 = vmul.f32 %v793, 0.35355338
      %v2014 = vmul.f32 %v658, 0.35355338
      %v2015 = vmul.f32 %v794, 0.35355338
      %v2016 = vmul.f32 %v659, 0.35355338
      %v2017 = vmul.f32 %v795, 0.35355338
      %v2018 = vmul.f32 %v660, 0.35355338
      %v2019 = vmul.f32 %v796, 0.35355338
      %v2020 = vmul.f32 %v661, 0.35355338
      %v2021 = vmul.f32 %v797, 0.35355338
      %v2022 = vmul.f32 %v662, 0.35355338
      %v2023 = vmul.f32 %v798, 0.35355338
      %v2024 = vmul.f32 %v663, 0.35355338
      %v2025 = vmul.f32 %v799, 0.35355338
      %vm2026 = vcmask 64512
      %v2028 = vsel %vm2026, %v2010, 0
      %v2031 = vsel %vm2026, %v2011, 0
      %v2034 = vsel %vm2026, %v1278, 0
      %v2037 = vsel %vm2026, %v1414, 0
      %2039 = vmatprep.subr.mxu0 0.0
      %2040 = vmatpush1.xpose.msra.mxu0 %v2034
      %2041 = vmatprep.subr.mxu0 0.0
      %2042 = vmatpush1.xpose.msra.mxu0 %v2037
      %2043 = vmatprep.subr.mxu0 0.0
      %2044 = vmatpush1.xpose.msra.mxu0 0.0
      %2045 = vmatprep.subr.mxu0 0.0
      %2046 = vmatpush1.xpose.msra.mxu0 0.0
      %2047 = vmatprep.subr.mxu0 0.0
      %2048 = vmatpush1.xpose.msra.mxu0 0.0
      %2049 = vmatprep.subr.mxu0 0.0
      %2050 = vmatpush1.xpose.msra.mxu0 0.0
      %2051 = vmatprep.subr.mxu0 0.0
      %2052 = vmatpush1.xpose.msra.mxu0 0.0
      %2053 = vmatprep.subr.mxu0 0.0
      %2054 = vmatpush1.xpose.msra.mxu0 0.0
      %2055 = vmatprep.subr.mxu0 0.0
      %2056 = vmatpush1.xpose.msra.mxu0 0.0
      %2057 = vmatprep.subr.mxu0 0.0
      %2058 = vmatpush1.xpose.msra.mxu0 0.0
      %2059 = vmatprep.subr.mxu0 0.0
      %2060 = vmatpush1.xpose.msra.mxu0 0.0
      %2061 = vmatprep.subr.mxu0 0.0
      %2062 = vmatpush1.xpose.msra.mxu0 0.0
      %2063 = vmatprep.subr.mxu0 0.0
      %2064 = vmatpush1.xpose.msra.mxu0 0.0
      %2065 = vmatprep.subr.mxu0 0.0
      %2066 = vmatpush1.xpose.msra.mxu0 0.0
      %2067 = vmatprep.subr.mxu0 0.0
      %2068 = vmatpush1.xpose.msra.mxu0 0.0
      %2069 = vmatprep.subr.mxu0 0.0
      %2070 = vmatpush1.xpose.msra.mxu0 0.0
      %2071 = vmatprep.subr.mxu0 0.0
      %2072 = vmatpush1.xpose.msra.mxu0 0.0
      %2073 = vmatprep.subr.mxu0 0.0
      %2074 = vmatpush1.xpose.msra.mxu0 0.0
      %2075 = vmatprep.subr.mxu0 0.0
      %2076 = vmatpush1.xpose.msra.mxu0 0.0
      %2077 = vmatprep.subr.mxu0 0.0
      %2078 = vmatpush1.xpose.msra.mxu0 0.0
      %2079 = vmatprep.subr.mxu0 0.0
      %2080 = vmatpush1.xpose.msra.mxu0 0.0
      %2081 = vmatprep.subr.mxu0 0.0
      %2082 = vmatpush1.xpose.msra.mxu0 0.0
      %2083 = vmatprep.subr.mxu0 0.0
      %2084 = vmatpush1.xpose.msra.mxu0 0.0
      %2085 = vmatprep.subr.mxu0 0.0
      %2086 = vmatpush1.xpose.msra.mxu0 0.0
      %2087 = vmatprep.subr.mxu0 0.0
      %2088 = vmatpush1.xpose.msra.mxu0 0.0
      %2089 = vmatprep.subr.mxu0 0.0
      %2090 = vmatpush1.xpose.msra.mxu0 0.0
      %2091 = vmatprep.subr.mxu0 0.0
      %2092 = vmatpush1.xpose.msra.mxu0 0.0
      %2093 = vmatprep.subr.mxu0 0.0
      %2094 = vmatpush1.xpose.msra.mxu0 0.0
      %2095 = vmatprep.subr.mxu0 0.0
      %2096 = vmatpush1.xpose.msra.mxu0 0.0
      %2097 = vmatprep.subr.mxu0 0.0
      %2098 = vmatpush1.xpose.msra.mxu0 0.0
      %2099 = vmatprep.subr.mxu0 0.0
      %2100 = vmatpush1.xpose.msra.mxu0 0.0
      %2101 = vmatprep.subr.mxu0 0.0
      %2102 = vmatpush1.xpose.msra.mxu0 0.0
      %2103 = vmatprep.mubr.f32.mxu0 0.0
      %2104 = vmatmul.mubr.f32.gmra.mrb[0].mxu0 %v2028
      %v2105 = vpop.f32.mrb[0].mxu0
      %v2106 = vadd.f32 0.0, %v2105
      %v2107 = vpop.f32.mrb[0].mxu0
      %2108 = vmatprep.mubr.f32.mxu0 0.0
      %2109 = vmatmul.mubr.f32.gmra.mrb[0].mxu0 %v2031
      %v2110 = vpop.f32.mrb[0].mxu0
      %v2111 = vadd.f32 0.0, %v2110
      %v2112 = vpop.f32.mrb[0].mxu0
      %2113 = vdwg.mxu0
      %v2115 = vsel %vm2026, %v2012, 0
      %v2118 = vsel %vm2026, %v2013, 0
      %v2121 = vsel %vm2026, %v1279, 0
      %v2124 = vsel %vm2026, %v1415, 0
      %2126 = vmatprep.subr.mxu0 0.0
      %2127 = vmatpush1.xpose.msra.mxu0 %v2121
      %2128 = vmatprep.subr.mxu0 0.0
      %2129 = vmatpush1.xpose.msra.mxu0 %v2124
      %2130 = vmatprep.subr.mxu0 0.0
      %2131 = vmatpush1.xpose.msra.mxu0 0.0
      %2132 = vmatprep.subr.mxu0 0.0
      %2133 = vmatpush1.xpose.msra.mxu0 0.0
      %2134 = vmatprep.subr.mxu0 0.0
      %2135 = vmatpush1.xpose.msra.mxu0 0.0
      %2136 = vmatprep.subr.mxu0 0.0
      %2137 = vmatpush1.xpose.msra.mxu0 0.0
      %2138 = vmatprep.subr.mxu0 0.0
      %2139 = vmatpush1.xpose.msra.mxu0 0.0
      %2140 = vmatprep.subr.mxu0 0.0
      %2141 = vmatpush1.xpose.msra.mxu0 0.0
      %2142 = vmatprep.subr.mxu0 0.0
      %2143 = vmatpush1.xpose.msra.mxu0 0.0
      %2144 = vmatprep.subr.mxu0 0.0
      %2145 = vmatpush1.xpose.msra.mxu0 0.0
      %2146 = vmatprep.subr.mxu0 0.0
      %2147 = vmatpush1.xpose.msra.mxu0 0.0
      %2148 = vmatprep.subr.mxu0 0.0
      %2149 = vmatpush1.xpose.msra.mxu0 0.0
      %2150 = vmatprep.subr.mxu0 0.0
      %2151 = vmatpush1.xpose.msra.mxu0 0.0
      %2152 = vmatprep.subr.mxu0 0.0
      %2153 = vmatpush1.xpose.msra.mxu0 0.0
      %2154 = vmatprep.subr.mxu0 0.0
      %2155 = vmatpush1.xpose.msra.mxu0 0.0
      %2156 = vmatprep.subr.mxu0 0.0
      %2157 = vmatpush1.xpose.msra.mxu0 0.0
      %2158 = vmatprep.subr.mxu0 0.0
      %2159 = vmatpush1.xpose.msra.mxu0 0.0
      %2160 = vmatprep.subr.mxu0 0.0
      %2161 = vmatpush1.xpose.msra.mxu0 0.0
      %2162 = vmatprep.subr.mxu0 0.0
      %2163 = vmatpush1.xpose.msra.mxu0 0.0
      %2164 = vmatprep.subr.mxu0 0.0
      %2165 = vmatpush1.xpose.msra.mxu0 0.0
      %2166 = vmatprep.subr.mxu0 0.0
      %2167 = vmatpush1.xpose.msra.mxu0 0.0
      %2168 = vmatprep.subr.mxu0 0.0
      %2169 = vmatpush1.xpose.msra.mxu0 0.0
      %2170 = vmatprep.subr.mxu0 0.0
      %2171 = vmatpush1.xpose.msra.mxu0 0.0
      %2172 = vmatprep.subr.mxu0 0.0
      %2173 = vmatpush1.xpose.msra.mxu0 0.0
      %2174 = vmatprep.subr.mxu0 0.0
      %2175 = vmatpush1.xpose.msra.mxu0 0.0
      %2176 = vmatprep.subr.mxu0 0.0
      %2177 = vmatpush1.xpose.msra.mxu0 0.0
      %2178 = vmatprep.subr.mxu0 0.0
      %2179 = vmatpush1.xpose.msra.mxu0 0.0
      %2180 = vmatprep.subr.mxu0 0.0
      %2181 = vmatpush1.xpose.msra.mxu0 0.0
      %2182 = vmatprep.subr.mxu0 0.0
      %2183 = vmatpush1.xpose.msra.mxu0 0.0
      %2184 = vmatprep.subr.mxu0 0.0
      %2185 = vmatpush1.xpose.msra.mxu0 0.0
      %2186 = vmatprep.subr.mxu0 0.0
      %2187 = vmatpush1.xpose.msra.mxu0 0.0
      %2188 = vmatprep.subr.mxu0 0.0
      %2189 = vmatpush1.xpose.msra.mxu0 0.0
      %2190 = vmatprep.mubr.f32.mxu0 0.0
      %2191 = vmatmul.mubr.f32.gmra.mrb[0].mxu0 %v2115
      %v2192 = vpop.f32.mrb[0].mxu0
      %v2193 = vadd.f32 0.0, %v2192
      %v2194 = vpop.f32.mrb[0].mxu0
      %2195 = vmatprep.mubr.f32.mxu0 0.0
      %2196 = vmatmul.mubr.f32.gmra.mrb[0].mxu0 %v2118
      %v2197 = vpop.f32.mrb[0].mxu0
      %v2198 = vadd.f32 0.0, %v2197
      %v2199 = vpop.f32.mrb[0].mxu0
      %2200 = vdwg.mxu0
      %v2202 = vsel %vm2026, %v2014, 0
      %v2205 = vsel %vm2026, %v2015, 0
      %v2208 = vsel %vm2026, %v1280, 0
      %v2211 = vsel %vm2026, %v1416, 0
      %2213 = vmatprep.subr.mxu0 0.0
      %2214 = vmatpush1.xpose.msra.mxu0 %v2208
      %2215 = vmatprep.subr.mxu0 0.0
      %2216 = vmatpush1.xpose.msra.mxu0 %v2211
      %2217 = vmatprep.subr.mxu0 0.0
      %2218 = vmatpush1.xpose.msra.mxu0 0.0
      %2219 = vmatprep.subr.mxu0 0.0
      %2220 = vmatpush1.xpose.msra.mxu0 0.0
      %2221 = vmatprep.subr.mxu0 0.0
      %2222 = vmatpush1.xpose.msra.mxu0 0.0
      %2223 = vmatprep.subr.mxu0 0.0
      %2224 = vmatpush1.xpose.msra.mxu0 0.0
      %2225 = vmatprep.subr.mxu0 0.0
      %2226 = vmatpush1.xpose.msra.mxu0 0.0
      %2227 = vmatprep.subr.mxu0 0.0
      %2228 = vmatpush1.xpose.msra.mxu0 0.0
      %2229 = vmatprep.subr.mxu0 0.0
      %2230 = vmatpush1.xpose.msra.mxu0 0.0
      %2231 = vmatprep.subr.mxu0 0.0
      %2232 = vmatpush1.xpose.msra.mxu0 0.0
      %2233 = vmatprep.subr.mxu0 0.0
      %2234 = vmatpush1.xpose.msra.mxu0 0.0
      %2235 = vmatprep.subr.mxu0 0.0
      %2236 = vmatpush1.xpose.msra.mxu0 0.0
      %2237 = vmatprep.subr.mxu0 0.0
      %2238 = vmatpush1.xpose.msra.mxu0 0.0
      %2239 = vmatprep.subr.mxu0 0.0
      %2240 = vmatpush1.xpose.msra.mxu0 0.0
      %2241 = vmatprep.subr.mxu0 0.0
      %2242 = vmatpush1.xpose.msra.mxu0 0.0
      %2243 = vmatprep.subr.mxu0 0.0
      %2244 = vmatpush1.xpose.msra.mxu0 0.0
      %2245 = vmatprep.subr.mxu0 0.0
      %2246 = vmatpush1.xpose.msra.mxu0 0.0
      %2247 = vmatprep.subr.mxu0 0.0
      %2248 = vmatpush1.xpose.msra.mxu0 0.0
      %2249 = vmatprep.subr.mxu0 0.0
      %2250 = vmatpush1.xpose.msra.mxu0 0.0
      %2251 = vmatprep.subr.mxu0 0.0
      %2252 = vmatpush1.xpose.msra.mxu0 0.0
      %2253 = vmatprep.subr.mxu0 0.0
      %2254 = vmatpush1.xpose.msra.mxu0 0.0
      %2255 = vmatprep.subr.mxu0 0.0
      %2256 = vmatpush1.xpose.msra.mxu0 0.0
      %2257 = vmatprep.subr.mxu0 0.0
      %2258 = vmatpush1.xpose.msra.mxu0 0.0
      %2259 = vmatprep.subr.mxu0 0.0
      %2260 = vmatpush1.xpose.msra.mxu0 0.0
      %2261 = vmatprep.subr.mxu0 0.0
      %2262 = vmatpush1.xpose.msra.mxu0 0.0
      %2263 = vmatprep.subr.mxu0 0.0
      %2264 = vmatpush1.xpose.msra.mxu0 0.0
      %2265 = vmatprep.subr.mxu0 0.0
      %2266 = vmatpush1.xpose.msra.mxu0 0.0
      %2267 = vmatprep.subr.mxu0 0.0
      %2268 = vmatpush1.xpose.msra.mxu0 0.0
      %2269 = vmatprep.subr.mxu0 0.0
      %2270 = vmatpush1.xpose.msra.mxu0 0.0
      %2271 = vmatprep.subr.mxu0 0.0
      %2272 = vmatpush1.xpose.msra.mxu0 0.0
      %2273 = vmatprep.subr.mxu0 0.0
      %2274 = vmatpush1.xpose.msra.mxu0 0.0
      %2275 = vmatprep.subr.mxu0 0.0
      %2276 = vmatpush1.xpose.msra.mxu0 0.0
      %2277 = vmatprep.mubr.f32.mxu0 0.0
      %2278 = vmatmul.mubr.f32.gmra.mrb[0].mxu0 %v2202
      %v2279 = vpop.f32.mrb[0].mxu0
      %v2280 = vadd.f32 0.0, %v2279
      %v2281 = vpop.f32.mrb[0].mxu0
      %2282 = vmatprep.mubr.f32.mxu0 0.0
      %2283 = vmatmul.mubr.f32.gmra.mrb[0].mxu0 %v2205
      %v2284 = vpop.f32.mrb[0].mxu0
      %v2285 = vadd.f32 0.0, %v2284
      %v2286 = vpop.f32.mrb[0].mxu0
      %2287 = vdwg.mxu0
      %v2289 = vsel %vm2026, %v2016, 0
      %v2292 = vsel %vm2026, %v2017, 0
      %v2295 = vsel %vm2026, %v1281, 0
      %v2298 = vsel %vm2026, %v1417, 0
      %2300 = vmatprep.subr.mxu0 0.0
      %2301 = vmatpush1.xpose.msra.mxu0 %v2295
      %2302 = vmatprep.subr.mxu0 0.0
      %2303 = vmatpush1.xpose.msra.mxu0 %v2298
      %2304 = vmatprep.subr.mxu0 0.0
      %2305 = vmatpush1.xpose.msra.mxu0 0.0
      %2306 = vmatprep.subr.mxu0 0.0
      %2307 = vmatpush1.xpose.msra.mxu0 0.0
      %2308 = vmatprep.subr.mxu0 0.0
      %2309 = vmatpush1.xpose.msra.mxu0 0.0
      %2310 = vmatprep.subr.mxu0 0.0
      %2311 = vmatpush1.xpose.msra.mxu0 0.0
      %2312 = vmatprep.subr.mxu0 0.0
      %2313 = vmatpush1.xpose.msra.mxu0 0.0
      %2314 = vmatprep.subr.mxu0 0.0
      %2315 = vmatpush1.xpose.msra.mxu0 0.0
      %2316 = vmatprep.subr.mxu0 0.0
      %2317 = vmatpush1.xpose.msra.mxu0 0.0
      %2318 = vmatprep.subr.mxu0 0.0
      %2319 = vmatpush1.xpose.msra.mxu0 0.0
      %2320 = vmatprep.subr.mxu0 0.0
      %2321 = vmatpush1.xpose.msra.mxu0 0.0
      %2322 = vmatprep.subr.mxu0 0.0
      %2323 = vmatpush1.xpose.msra.mxu0 0.0
      %2324 = vmatprep.subr.mxu0 0.0
      %2325 = vmatpush1.xpose.msra.mxu0 0.0
      %2326 = vmatprep.subr.mxu0 0.0
      %2327 = vmatpush1.xpose.msra.mxu0 0.0
      %2328 = vmatprep.subr.mxu0 0.0
      %2329 = vmatpush1.xpose.msra.mxu0 0.0
      %2330 = vmatprep.subr.mxu0 0.0
      %2331 = vmatpush1.xpose.msra.mxu0 0.0
      %2332 = vmatprep.subr.mxu0 0.0
      %2333 = vmatpush1.xpose.msra.mxu0 0.0
      %2334 = vmatprep.subr.mxu0 0.0
      %2335 = vmatpush1.xpose.msra.mxu0 0.0
      %2336 = vmatprep.subr.mxu0 0.0
      %2337 = vmatpush1.xpose.msra.mxu0 0.0
      %2338 = vmatprep.subr.mxu0 0.0
      %2339 = vmatpush1.xpose.msra.mxu0 0.0
      %2340 = vmatprep.subr.mxu0 0.0
      %2341 = vmatpush1.xpose.msra.mxu0 0.0
      %2342 = vmatprep.subr.mxu0 0.0
      %2343 = vmatpush1.xpose.msra.mxu0 0.0
      %2344 = vmatprep.subr.mxu0 0.0
      %2345 = vmatpush1.xpose.msra.mxu0 0.0
      %2346 = vmatprep.subr.mxu0 0.0
      %2347 = vmatpush1.xpose.msra.mxu0 0.0
      %2348 = vmatprep.subr.mxu0 0.0
      %2349 = vmatpush1.xpose.msra.mxu0 0.0
      %2350 = vmatprep.subr.mxu0 0.0
      %2351 = vmatpush1.xpose.msra.mxu0 0.0
      %2352 = vmatprep.subr.mxu0 0.0
      %2353 = vmatpush1.xpose.msra.mxu0 0.0
      %2354 = vmatprep.subr.mxu0 0.0
      %2355 = vmatpush1.xpose.msra.mxu0 0.0
      %2356 = vmatprep.subr.mxu0 0.0
      %2357 = vmatpush1.xpose.msra.mxu0 0.0
      %2358 = vmatprep.subr.mxu0 0.0
      %2359 = vmatpush1.xpose.msra.mxu0 0.0
      %2360 = vmatprep.subr.mxu0 0.0
      %2361 = vmatpush1.xpose.msra.mxu0 0.0
      %2362 = vmatprep.subr.mxu0 0.0
      %2363 = vmatpush1.xpose.msra.mxu0 0.0
      %2364 = vmatprep.mubr.f32.mxu0 0.0
      %2365 = vmatmul.mubr.f32.gmra.mrb[0].mxu0 %v2289
      %v2366 = vpop.f32.mrb[0].mxu0
      %v2367 = vadd.f32 0.0, %v2366
      %v2368 = vpop.f32.mrb[0].mxu0
      %2369 = vmatprep.mubr.f32.mxu0 0.0
      %2370 = vmatmul.mubr.f32.gmra.mrb[0].mxu0 %v2292
      %v2371 = vpop.f32.mrb[0].mxu0
      %v2372 = vadd.f32 0.0, %v2371
      %v2373 = vpop.f32.mrb[0].mxu0
      %2374 = vdwg.mxu0
      %v2376 = vsel %vm2026, %v2018, 0
      %v2379 = vsel %vm2026, %v2019, 0
      %v2382 = vsel %vm2026, %v1282, 0
      %v2385 = vsel %vm2026, %v1418, 0
      %2387 = vmatprep.subr.mxu0 0.0
      %2388 = vmatpush1.xpose.msra.mxu0 %v2382
      %2389 = vmatprep.subr.mxu0 0.0
      %2390 = vmatpush1.xpose.msra.mxu0 %v2385
      %2391 = vmatprep.subr.mxu0 0.0
      %2392 = vmatpush1.xpose.msra.mxu0 0.0
      %2393 = vmatprep.subr.mxu0 0.0
      %2394 = vmatpush1.xpose.msra.mxu0 0.0
      %2395 = vmatprep.subr.mxu0 0.0
      %2396 = vmatpush1.xpose.msra.mxu0 0.0
      %2397 = vmatprep.subr.mxu0 0.0
      %2398 = vmatpush1.xpose.msra.mxu0 0.0
      %2399 = vmatprep.subr.mxu0 0.0
      %2400 = vmatpush1.xpose.msra.mxu0 0.0
      %2401 = vmatprep.subr.mxu0 0.0
      %2402 = vmatpush1.xpose.msra.mxu0 0.0
      %2403 = vmatprep.subr.mxu0 0.0
      %2404 = vmatpush1.xpose.msra.mxu0 0.0
      %2405 = vmatprep.subr.mxu0 0.0
      %2406 = vmatpush1.xpose.msra.mxu0 0.0
      %2407 = vmatprep.subr.mxu0 0.0
      %2408 = vmatpush1.xpose.msra.mxu0 0.0
      %2409 = vmatprep.subr.mxu0 0.0
      %2410 = vmatpush1.xpose.msra.mxu0 0.0
      %2411 = vmatprep.subr.mxu0 0.0
      %2412 = vmatpush1.xpose.msra.mxu0 0.0
      %2413 = vmatprep.subr.mxu0 0.0
      %2414 = vmatpush1.xpose.msra.mxu0 0.0
      %2415 = vmatprep.subr.mxu0 0.0
      %2416 = vmatpush1.xpose.msra.mxu0 0.0
      %2417 = vmatprep.subr.mxu0 0.0
      %2418 = vmatpush1.xpose.msra.mxu0 0.0
      %2419 = vmatprep.subr.mxu0 0.0
      %2420 = vmatpush1.xpose.msra.mxu0 0.0
      %2421 = vmatprep.subr.mxu0 0.0
      %2422 = vmatpush1.xpose.msra.mxu0 0.0
      %2423 = vmatprep.subr.mxu0 0.0
      %2424 = vmatpush1.xpose.msra.mxu0 0.0
      %2425 = vmatprep.subr.mxu0 0.0
      %2426 = vmatpush1.xpose.msra.mxu0 0.0
      %2427 = vmatprep.subr.mxu0 0.0
      %2428 = vmatpush1.xpose.msra.mxu0 0.0
      %2429 = vmatprep.subr.mxu0 0.0
      %2430 = vmatpush1.xpose.msra.mxu0 0.0
      %2431 = vmatprep.subr.mxu0 0.0
      %2432 = vmatpush1.xpose.msra.mxu0 0.0
      %2433 = vmatprep.subr.mxu0 0.0
      %2434 = vmatpush1.xpose.msra.mxu0 0.0
      %2435 = vmatprep.subr.mxu0 0.0
      %2436 = vmatpush1.xpose.msra.mxu0 0.0
      %2437 = vmatprep.subr.mxu0 0.0
      %2438 = vmatpush1.xpose.msra.mxu0 0.0
      %2439 = vmatprep.subr.mxu0 0.0
      %2440 = vmatpush1.xpose.msra.mxu0 0.0
      %2441 = vmatprep.subr.mxu0 0.0
      %2442 = vmatpush1.xpose.msra.mxu0 0.0
      %2443 = vmatprep.subr.mxu0 0.0
      %2444 = vmatpush1.xpose.msra.mxu0 0.0
      %2445 = vmatprep.subr.mxu0 0.0
      %2446 = vmatpush1.xpose.msra.mxu0 0.0
      %2447 = vmatprep.subr.mxu0 0.0
      %2448 = vmatpush1.xpose.msra.mxu0 0.0
      %2449 = vmatprep.subr.mxu0 0.0
      %2450 = vmatpush1.xpose.msra.mxu0 0.0
      %2451 = vmatprep.mubr.f32.mxu0 0.0
      %2452 = vmatmul.mubr.f32.gmra.mrb[0].mxu0 %v2376
      %v2453 = vpop.f32.mrb[0].mxu0
      %v2454 = vadd.f32 0.0, %v2453
      %v2455 = vpop.f32.mrb[0].mxu0
      %2456 = vmatprep.mubr.f32.mxu0 0.0
      %2457 = vmatmul.mubr.f32.gmra.mrb[0].mxu0 %v2379
      %v2458 = vpop.f32.mrb[0].mxu0
      %v2459 = vadd.f32 0.0, %v2458
      %v2460 = vpop.f32.mrb[0].mxu0
      %2461 = vdwg.mxu0
      %v2463 = vsel %vm2026, %v2020, 0
      %v2466 = vsel %vm2026, %v2021, 0
      %v2469 = vsel %vm2026, %v1283, 0
      %v2472 = vsel %vm2026, %v1419, 0
      %2474 = vmatprep.subr.mxu0 0.0
      %2475 = vmatpush1.xpose.msra.mxu0 %v2469
      %2476 = vmatprep.subr.mxu0 0.0
      %2477 = vmatpush1.xpose.msra.mxu0 %v2472
      %2478 = vmatprep.subr.mxu0 0.0
      %2479 = vmatpush1.xpose.msra.mxu0 0.0
      %2480 = vmatprep.subr.mxu0 0.0
      %2481 = vmatpush1.xpose.msra.mxu0 0.0
      %2482 = vmatprep.subr.mxu0 0.0
      %2483 = vmatpush1.xpose.msra.mxu0 0.0
      %2484 = vmatprep.subr.mxu0 0.0
      %2485 = vmatpush1.xpose.msra.mxu0 0.0
      %2486 = vmatprep.subr.mxu0 0.0
      %2487 = vmatpush1.xpose.msra.mxu0 0.0
      %2488 = vmatprep.subr.mxu0 0.0
      %2489 = vmatpush1.xpose.msra.mxu0 0.0
      %2490 = vmatprep.subr.mxu0 0.0
      %2491 = vmatpush1.xpose.msra.mxu0 0.0
      %2492 = vmatprep.subr.mxu0 0.0
      %2493 = vmatpush1.xpose.msra.mxu0 0.0
      %2494 = vmatprep.subr.mxu0 0.0
      %2495 = vmatpush1.xpose.msra.mxu0 0.0
      %2496 = vmatprep.subr.mxu0 0.0
      %2497 = vmatpush1.xpose.msra.mxu0 0.0
      %2498 = vmatprep.subr.mxu0 0.0
      %2499 = vmatpush1.xpose.msra.mxu0 0.0
      %2500 = vmatprep.subr.mxu0 0.0
      %2501 = vmatpush1.xpose.msra.mxu0 0.0
      %2502 = vmatprep.subr.mxu0 0.0
      %2503 = vmatpush1.xpose.msra.mxu0 0.0
      %2504 = vmatprep.subr.mxu0 0.0
      %2505 = vmatpush1.xpose.msra.mxu0 0.0
      %2506 = vmatprep.subr.mxu0 0.0
      %2507 = vmatpush1.xpose.msra.mxu0 0.0
      %2508 = vmatprep.subr.mxu0 0.0
      %2509 = vmatpush1.xpose.msra.mxu0 0.0
      %2510 = vmatprep.subr.mxu0 0.0
      %2511 = vmatpush1.xpose.msra.mxu0 0.0
      %2512 = vmatprep.subr.mxu0 0.0
      %2513 = vmatpush1.xpose.msra.mxu0 0.0
      %2514 = vmatprep.subr.mxu0 0.0
      %2515 = vmatpush1.xpose.msra.mxu0 0.0
      %2516 = vmatprep.subr.mxu0 0.0
      %2517 = vmatpush1.xpose.msra.mxu0 0.0
      %2518 = vmatprep.subr.mxu0 0.0
      %2519 = vmatpush1.xpose.msra.mxu0 0.0
      %2520 = vmatprep.subr.mxu0 0.0
      %2521 = vmatpush1.xpose.msra.mxu0 0.0
      %2522 = vmatprep.subr.mxu0 0.0
      %2523 = vmatpush1.xpose.msra.mxu0 0.0
      %2524 = vmatprep.subr.mxu0 0.0
      %2525 = vmatpush1.xpose.msra.mxu0 0.0
      %2526 = vmatprep.subr.mxu0 0.0
      %2527 = vmatpush1.xpose.msra.mxu0 0.0
      %2528 = vmatprep.subr.mxu0 0.0
      %2529 = vmatpush1.xpose.msra.mxu0 0.0
      %2530 = vmatprep.subr.mxu0 0.0
      %2531 = vmatpush1.xpose.msra.mxu0 0.0
      %2532 = vmatprep.subr.mxu0 0.0
      %2533 = vmatpush1.xpose.msra.mxu0 0.0
      %2534 = vmatprep.subr.mxu0 0.0
      %2535 = vmatpush1.xpose.msra.mxu0 0.0
      %2536 = vmatprep.subr.mxu0 0.0
      %2537 = vmatpush1.xpose.msra.mxu0 0.0
      %2538 = vmatprep.mubr.f32.mxu0 0.0
      %2539 = vmatmul.mubr.f32.gmra.mrb[0].mxu0 %v2463
      %v2540 = vpop.f32.mrb[0].mxu0
      %v2541 = vadd.f32 0.0, %v2540
      %v2542 = vpop.f32.mrb[0].mxu0
      %2543 = vmatprep.mubr.f32.mxu0 0.0
      %2544 = vmatmul.mubr.f32.gmra.mrb[0].mxu0 %v2466
      %v2545 = vpop.f32.mrb[0].mxu0
      %v2546 = vadd.f32 0.0, %v2545
      %v2547 = vpop.f32.mrb[0].mxu0
      %2548 = vdwg.mxu0
      %v2550 = vsel %vm2026, %v2022, 0
      %v2553 = vsel %vm2026, %v2023, 0
      %v2556 = vsel %vm2026, %v1284, 0
      %v2559 = vsel %vm2026, %v1420, 0
      %2561 = vmatprep.subr.mxu0 0.0
      %2562 = vmatpush1.xpose.msra.mxu0 %v2556
      %2563 = vmatprep.subr.mxu0 0.0
      %2564 = vmatpush1.xpose.msra.mxu0 %v2559
      %2565 = vmatprep.subr.mxu0 0.0
      %2566 = vmatpush1.xpose.msra.mxu0 0.0
      %2567 = vmatprep.subr.mxu0 0.0
      %2568 = vmatpush1.xpose.msra.mxu0 0.0
      %2569 = vmatprep.subr.mxu0 0.0
      %2570 = vmatpush1.xpose.msra.mxu0 0.0
      %2571 = vmatprep.subr.mxu0 0.0
      %2572 = vmatpush1.xpose.msra.mxu0 0.0
      %2573 = vmatprep.subr.mxu0 0.0
      %2574 = vmatpush1.xpose.msra.mxu0 0.0
      %2575 = vmatprep.subr.mxu0 0.0
      %2576 = vmatpush1.xpose.msra.mxu0 0.0
      %2577 = vmatprep.subr.mxu0 0.0
      %2578 = vmatpush1.xpose.msra.mxu0 0.0
      %2579 = vmatprep.subr.mxu0 0.0
      %2580 = vmatpush1.xpose.msra.mxu0 0.0
      %2581 = vmatprep.subr.mxu0 0.0
      %2582 = vmatpush1.xpose.msra.mxu0 0.0
      %2583 = vmatprep.subr.mxu0 0.0
      %2584 = vmatpush1.xpose.msra.mxu0 0.0
      %2585 = vmatprep.subr.mxu0 0.0
      %2586 = vmatpush1.xpose.msra.mxu0 0.0
      %2587 = vmatprep.subr.mxu0 0.0
      %2588 = vmatpush1.xpose.msra.mxu0 0.0
      %2589 = vmatprep.subr.mxu0 0.0
      %2590 = vmatpush1.xpose.msra.mxu0 0.0
      %2591 = vmatprep.subr.mxu0 0.0
      %2592 = vmatpush1.xpose.msra.mxu0 0.0
      %2593 = vmatprep.subr.mxu0 0.0
      %2594 = vmatpush1.xpose.msra.mxu0 0.0
      %2595 = vmatprep.subr.mxu0 0.0
      %2596 = vmatpush1.xpose.msra.mxu0 0.0
      %2597 = vmatprep.subr.mxu0 0.0
      %2598 = vmatpush1.xpose.msra.mxu0 0.0
      %2599 = vmatprep.subr.mxu0 0.0
      %2600 = vmatpush1.xpose.msra.mxu0 0.0
      %2601 = vmatprep.subr.mxu0 0.0
      %2602 = vmatpush1.xpose.msra.mxu0 0.0
      %2603 = vmatprep.subr.mxu0 0.0
      %2604 = vmatpush1.xpose.msra.mxu0 0.0
      %2605 = vmatprep.subr.mxu0 0.0
      %2606 = vmatpush1.xpose.msra.mxu0 0.0
      %2607 = vmatprep.subr.mxu0 0.0
      %2608 = vmatpush1.xpose.msra.mxu0 0.0
      %2609 = vmatprep.subr.mxu0 0.0
      %2610 = vmatpush1.xpose.msra.mxu0 0.0
      %2611 = vmatprep.subr.mxu0 0.0
      %2612 = vmatpush1.xpose.msra.mxu0 0.0
      %2613 = vmatprep.subr.mxu0 0.0
      %2614 = vmatpush1.xpose.msra.mxu0 0.0
      %2615 = vmatprep.subr.mxu0 0.0
      %2616 = vmatpush1.xpose.msra.mxu0 0.0
      %2617 = vmatprep.subr.mxu0 0.0
      %2618 = vmatpush1.xpose.msra.mxu0 0.0
      %2619 = vmatprep.subr.mxu0 0.0
      %2620 = vmatpush1.xpose.msra.mxu0 0.0
      %2621 = vmatprep.subr.mxu0 0.0
      %2622 = vmatpush1.xpose.msra.mxu0 0.0
      %2623 = vmatprep.subr.mxu0 0.0
      %2624 = vmatpush1.xpose.msra.mxu0 0.0
      %2625 = vmatprep.mubr.f32.mxu0 0.0
      %2626 = vmatmul.mubr.f32.gmra.mrb[0].mxu0 %v2550
      %v2627 = vpop.f32.mrb[0].mxu0
      %v2628 = vadd.f32 0.0, %v2627
      %v2629 = vpop.f32.mrb[0].mxu0
      %2630 = vmatprep.mubr.f32.mxu0 0.0
      %2631 = vmatmul.mubr.f32.gmra.mrb[0].mxu0 %v2553
      %v2632 = vpop.f32.mrb[0].mxu0
      %v2633 = vadd.f32 0.0, %v2632
      %v2634 = vpop.f32.mrb[0].mxu0
      %2635 = vdwg.mxu0
      %v2637 = vsel %vm2026, %v2024, 0
      %v2640 = vsel %vm2026, %v2025, 0
      %v2643 = vsel %vm2026, %v1285, 0
      %v2646 = vsel %vm2026, %v1421, 0
      %2648 = vmatprep.subr.mxu0 0.0
      %2649 = vmatpush1.xpose.msra.mxu0 %v2643
      %2650 = vmatprep.subr.mxu0 0.0
      %2651 = vmatpush1.xpose.msra.mxu0 %v2646
      %2652 = vmatprep.subr.mxu0 0.0
      %2653 = vmatpush1.xpose.msra.mxu0 0.0
      %2654 = vmatprep.subr.mxu0 0.0
      %2655 = vmatpush1.xpose.msra.mxu0 0.0
      %2656 = vmatprep.subr.mxu0 0.0
      %2657 = vmatpush1.xpose.msra.mxu0 0.0
      %2658 = vmatprep.subr.mxu0 0.0
      %2659 = vmatpush1.xpose.msra.mxu0 0.0
      %2660 = vmatprep.subr.mxu0 0.0
      %2661 = vmatpush1.xpose.msra.mxu0 0.0
      %2662 = vmatprep.subr.mxu0 0.0
      %2663 = vmatpush1.xpose.msra.mxu0 0.0
      %2664 = vmatprep.subr.mxu0 0.0
      %2665 = vmatpush1.xpose.msra.mxu0 0.0
      %2666 = vmatprep.subr.mxu0 0.0
      %2667 = vmatpush1.xpose.msra.mxu0 0.0
      %2668 = vmatprep.subr.mxu0 0.0
      %2669 = vmatpush1.xpose.msra.mxu0 0.0
      %2670 = vmatprep.subr.mxu0 0.0
      %2671 = vmatpush1.xpose.msra.mxu0 0.0
      %2672 = vmatprep.subr.mxu0 0.0
      %2673 = vmatpush1.xpose.msra.mxu0 0.0
      %2674 = vmatprep.subr.mxu0 0.0
      %2675 = vmatpush1.xpose.msra.mxu0 0.0
      %2676 = vmatprep.subr.mxu0 0.0
      %2677 = vmatpush1.xpose.msra.mxu0 0.0
      %2678 = vmatprep.subr.mxu0 0.0
      %2679 = vmatpush1.xpose.msra.mxu0 0.0
      %2680 = vmatprep.subr.mxu0 0.0
      %2681 = vmatpush1.xpose.msra.mxu0 0.0
      %2682 = vmatprep.subr.mxu0 0.0
      %2683 = vmatpush1.xpose.msra.mxu0 0.0
      %2684 = vmatprep.subr.mxu0 0.0
      %2685 = vmatpush1.xpose.msra.mxu0 0.0
      %2686 = vmatprep.subr.mxu0 0.0
      %2687 = vmatpush1.xpose.msra.mxu0 0.0
      %2688 = vmatprep.subr.mxu0 0.0
      %2689 = vmatpush1.xpose.msra.mxu0 0.0
      %2690 = vmatprep.subr.mxu0 0.0
      %2691 = vmatpush1.xpose.msra.mxu0 0.0
      %2692 = vmatprep.subr.mxu0 0.0
      %2693 = vmatpush1.xpose.msra.mxu0 0.0
      %2694 = vmatprep.subr.mxu0 0.0
      %2695 = vmatpush1.xpose.msra.mxu0 0.0
      %2696 = vmatprep.subr.mxu0 0.0
      %2697 = vmatpush1.xpose.msra.mxu0 0.0
      %2698 = vmatprep.subr.mxu0 0.0
      %2699 = vmatpush1.xpose.msra.mxu0 0.0
      %2700 = vmatprep.subr.mxu0 0.0
      %2701 = vmatpush1.xpose.msra.mxu0 0.0
      %2702 = vmatprep.subr.mxu0 0.0
      %2703 = vmatpush1.xpose.msra.mxu0 0.0
      %2704 = vmatprep.subr.mxu0 0.0
      %2705 = vmatpush1.xpose.msra.mxu0 0.0
      %2706 = vmatprep.subr.mxu0 0.0
      %2707 = vmatpush1.xpose.msra.mxu0 0.0
      %2708 = vmatprep.subr.mxu0 0.0
      %2709 = vmatpush1.xpose.msra.mxu0 0.0
      %2710 = vmatprep.subr.mxu0 0.0
      %2711 = vmatpush1.xpose.msra.mxu0 0.0
      %2712 = vmatprep.mubr.f32.mxu0 0.0
      %2713 = vmatmul.mubr.f32.gmra.mrb[0].mxu0 %v2637
      %v2714 = vpop.f32.mrb[0].mxu0
      %v2715 = vadd.f32 0.0, %v2714
      %v2716 = vpop.f32.mrb[0].mxu0
      %2717 = vmatprep.mubr.f32.mxu0 0.0
      %2718 = vmatmul.mubr.f32.gmra.mrb[0].mxu0 %v2640
      %v2719 = vpop.f32.mrb[0].mxu0
      %v2720 = vadd.f32 0.0, %v2719
      %v2721 = vpop.f32.mrb[0].mxu0
      %2722 = vdwg.mxu0
      %vm2723 = vcmask 130048
      %v2724 = vsel %vm2723, %v2106, -inf
      %2725 = vmax.xlane.f32.xlu0 %v2724
      %v2726 = vpop.xlane.xlu0 %2725
      %v2727 = vsel %vm2723, %v2111, -inf
      %2728 = vmax.xlane.f32.xlu0 %v2727
      %v2729 = vpop.xlane.xlu0 %2728
      %v2730 = vsel %vm2723, %v2193, -inf
      %2731 = vmax.xlane.f32.xlu0 %v2730
      %v2732 = vpop.xlane.xlu0 %2731
      %v2733 = vsel %vm2723, %v2198, -inf
      %2734 = vmax.xlane.f32.xlu0 %v2733
      %v2735 = vpop.xlane.xlu0 %2734
      %v2736 = vsel %vm2723, %v2280, -inf
      %2737 = vmax.xlane.f32.xlu0 %v2736
      %v2738 = vpop.xlane.xlu0 %2737
      %v2739 = vsel %vm2723, %v2285, -inf
      %2740 = vmax.xlane.f32.xlu0 %v2739
      %v2741 = vpop.xlane.xlu0 %2740
      %v2742 = vsel %vm2723, %v2367, -inf
      %2743 = vmax.xlane.f32.xlu0 %v2742
      %v2744 = vpop.xlane.xlu0 %2743
      %v2745 = vsel %vm2723, %v2372, -inf
      %2746 = vmax.xlane.f32.xlu0 %v2745
      %v2747 = vpop.xlane.xlu0 %2746
      %v2748 = vsel %vm2723, %v2454, -inf
      %2749 = vmax.xlane.f32.xlu0 %v2748
      %v2750 = vpop.xlane.xlu0 %2749
      %v2751 = vsel %vm2723, %v2459, -inf
      %2752 = vmax.xlane.f32.xlu0 %v2751
      %v2753 = vpop.xlane.xlu0 %2752
      %v2754 = vsel %vm2723, %v2541, -inf
      %2755 = vmax.xlane.f32.xlu0 %v2754
      %v2756 = vpop.xlane.xlu0 %2755
      %v2757 = vsel %vm2723, %v2546, -inf
      %2758 = vmax.xlane.f32.xlu0 %v2757
      %v2759 = vpop.xlane.xlu0 %2758
      %v2760 = vsel %vm2723, %v2628, -inf
      %2761 = vmax.xlane.f32.xlu0 %v2760
      %v2762 = vpop.xlane.xlu0 %2761
      %v2763 = vsel %vm2723, %v2633, -inf
      %2764 = vmax.xlane.f32.xlu0 %v2763
      %v2765 = vpop.xlane.xlu0 %2764
      %v2766 = vsel %vm2723, %v2715, -inf
      %2767 = vmax.xlane.f32.xlu0 %v2766
      %v2768 = vpop.xlane.xlu0 %2767
      %v2769 = vsel %vm2723, %v2720, -inf
      %2770 = vmax.xlane.f32.xlu0 %v2769
      %v2771 = vpop.xlane.xlu0 %2770
      %v2772 = vsub.f32 %v2106, %v2726
      %v2773 = vsub.f32 %v2111, %v2729
      %v2774 = vsub.f32 %v2193, %v2732
      %v2775 = vsub.f32 %v2198, %v2735
      %v2776 = vsub.f32 %v2280, %v2738
      %v2777 = vsub.f32 %v2285, %v2741
      %v2778 = vsub.f32 %v2367, %v2744
      %v2779 = vsub.f32 %v2372, %v2747
      %v2780 = vsub.f32 %v2454, %v2750
      %v2781 = vsub.f32 %v2459, %v2753
      %v2782 = vsub.f32 %v2541, %v2756
      %v2783 = vsub.f32 %v2546, %v2759
      %v2784 = vsub.f32 %v2628, %v2762
      %v2785 = vsub.f32 %v2633, %v2765
      %v2786 = vsub.f32 %v2715, %v2768
      %v2787 = vsub.f32 %v2720, %v2771
      %v2788 = vmul.f32 %v2772, 1.442695
      %v2789 = vpow.pop %v2788
      %v2790 = vmul.f32 %v2773, 1.442695
      %v2791 = vpow.pop %v2790
      %v2792 = vmul.f32 %v2774, 1.442695
      %v2793 = vpow.pop %v2792
      %v2794 = vmul.f32 %v2775, 1.442695
      %v2795 = vpow.pop %v2794
      %v2796 = vmul.f32 %v2776, 1.442695
      %v2797 = vpow.pop %v2796
      %v2798 = vmul.f32 %v2777, 1.442695
      %v2799 = vpow.pop %v2798
      %v2800 = vmul.f32 %v2778, 1.442695
      %v2801 = vpow.pop %v2800
      %v2802 = vmul.f32 %v2779, 1.442695
      %v2803 = vpow.pop %v2802
      %v2804 = vmul.f32 %v2780, 1.442695
      %v2805 = vpow.pop %v2804
      %v2806 = vmul.f32 %v2781, 1.442695
      %v2807 = vpow.pop %v2806
      %v2808 = vmul.f32 %v2782, 1.442695
      %v2809 = vpow.pop %v2808
      %v2810 = vmul.f32 %v2783, 1.442695
      %v2811 = vpow.pop %v2810
      %v2812 = vmul.f32 %v2784, 1.442695
      %v2813 = vpow.pop %v2812
      %v2814 = vmul.f32 %v2785, 1.442695
      %v2815 = vpow.pop %v2814
      %v2816 = vmul.f32 %v2786, 1.442695
      %v2817 = vpow.pop %v2816
      %v2818 = vmul.f32 %v2787, 1.442695
      %v2819 = vpow.pop %v2818
      %v2820 = vsel %vm2723, %v2789, 0.0
      %2821 = vadd.xlane.f32.xlu0 %v2820
      %v2822 = vpop.xlane.xlu0 %2821
      %v2823 = vsel %vm2723, %v2791, 0.0
      %2824 = vadd.xlane.f32.xlu0 %v2823
      %v2825 = vpop.xlane.xlu0 %2824
      %v2826 = vsel %vm2723, %v2793, 0.0
      %2827 = vadd.xlane.f32.xlu0 %v2826
      %v2828 = vpop.xlane.xlu0 %2827
      %v2829 = vsel %vm2723, %v2795, 0.0
      %2830 = vadd.xlane.f32.xlu0 %v2829
      %v2831 = vpop.xlane.xlu0 %2830
      %v2832 = vsel %vm2723, %v2797, 0.0
      %2833 = vadd.xlane.f32.xlu0 %v2832
      %v2834 = vpop.xlane.xlu0 %2833
      %v2835 = vsel %vm2723, %v2799, 0.0
      %2836 = vadd.xlane.f32.xlu0 %v2835
      %v2837 = vpop.xlane.xlu0 %2836
      %v2838 = vsel %vm2723, %v2801, 0.0
      %2839 = vadd.xlane.f32.xlu0 %v2838
      %v2840 = vpop.xlane.xlu0 %2839
      %v2841 = vsel %vm2723, %v2803, 0.0
      %2842 = vadd.xlane.f32.xlu0 %v2841
      %v2843 = vpop.xlane.xlu0 %2842
      %v2844 = vsel %vm2723, %v2805, 0.0
      %2845 = vadd.xlane.f32.xlu0 %v2844
      %v2846 = vpop.xlane.xlu0 %2845
      %v2847 = vsel %vm2723, %v2807, 0.0
      %2848 = vadd.xlane.f32.xlu0 %v2847
      %v2849 = vpop.xlane.xlu0 %2848
      %v2850 = vsel %vm2723, %v2809, 0.0
      %2851 = vadd.xlane.f32.xlu0 %v2850
      %v2852 = vpop.xlane.xlu0 %2851
      %v2853 = vsel %vm2723, %v2811, 0.0
      %2854 = vadd.xlane.f32.xlu0 %v2853
      %v2855 = vpop.xlane.xlu0 %2854
      %v2856 = vsel %vm2723, %v2813, 0.0
      %2857 = vadd.xlane.f32.xlu0 %v2856
      %v2858 = vpop.xlane.xlu0 %2857
      %v2859 = vsel %vm2723, %v2815, 0.0
      %2860 = vadd.xlane.f32.xlu0 %v2859
      %v2861 = vpop.xlane.xlu0 %2860
      %v2862 = vsel %vm2723, %v2817, 0.0
      %2863 = vadd.xlane.f32.xlu0 %v2862
      %v2864 = vpop.xlane.xlu0 %2863
      %v2865 = vsel %vm2723, %v2819, 0.0
      %2866 = vadd.xlane.f32.xlu0 %v2865
      %v2867 = vpop.xlane.xlu0 %2866
      %v2868 = vrcp.pop %v2822
      %v2869 = vrcp.pop %v2825
      %v2870 = vrcp.pop %v2828
      %v2871 = vrcp.pop %v2831
      %v2872 = vrcp.pop %v2834
      %v2873 = vrcp.pop %v2837
      %v2874 = vrcp.pop %v2840
      %v2875 = vrcp.pop %v2843
      %v2876 = vrcp.pop %v2846
      %v2877 = vrcp.pop %v2849
      %v2878 = vrcp.pop %v2852
      %v2879 = vrcp.pop %v2855
      %v2880 = vrcp.pop %v2858
      %v2881 = vrcp.pop %v2861
      %v2882 = vrcp.pop %v2864
      %v2883 = vrcp.pop %v2867
      %v2884 = vmul.f32 %v2789, %v2868
      %v2885 = vmul.f32 %v2791, %v2869
      %v2886 = vmul.f32 %v2793, %v2870
      %v2887 = vmul.f32 %v2795, %v2871
      %v2888 = vmul.f32 %v2797, %v2872
      %v2889 = vmul.f32 %v2799, %v2873
      %v2890 = vmul.f32 %v2801, %v2874
      %v2891 = vmul.f32 %v2803, %v2875
      %v2892 = vmul.f32 %v2805, %v2876
      %v2893 = vmul.f32 %v2807, %v2877
      %v2894 = vmul.f32 %v2809, %v2878
      %v2895 = vmul.f32 %v2811, %v2879
      %v2896 = vmul.f32 %v2813, %v2880
      %v2897 = vmul.f32 %v2815, %v2881
      %v2898 = vmul.f32 %v2817, %v2882
      %v2899 = vmul.f32 %v2819, %v2883
      %v2901 = vsel %vm2723, %v2884, 0
      %v2904 = vsel %vm2723, %v2885, 0
      %2906 = vmatprep.subr.mxu0 0.0
      %2907 = vmatpush1.msra.mxu0 %v1866
      %2908 = vmatprep.subr.mxu0 0.0
      %2909 = vmatpush1.msra.mxu0 %v2002
      %2910 = vmatprep.subr.mxu0 0.0
      %2911 = vmatpush1.msra.mxu0 0.0
      %2912 = vmatprep.subr.mxu0 0.0
      %2913 = vmatpush1.msra.mxu0 0.0
      %2914 = vmatprep.subr.mxu0 0.0
      %2915 = vmatpush1.msra.mxu0 0.0
      %2916 = vmatprep.subr.mxu0 0.0
      %2917 = vmatpush1.msra.mxu0 0.0
      %2918 = vmatprep.subr.mxu0 0.0
      %2919 = vmatpush1.msra.mxu0 0.0
      %2920 = vmatprep.subr.mxu0 0.0
      %2921 = vmatpush1.msra.mxu0 0.0
      %2922 = vmatprep.subr.mxu0 0.0
      %2923 = vmatpush1.msra.mxu0 0.0
      %2924 = vmatprep.subr.mxu0 0.0
      %2925 = vmatpush1.msra.mxu0 0.0
      %2926 = vmatprep.subr.mxu0 0.0
      %2927 = vmatpush1.msra.mxu0 0.0
      %2928 = vmatprep.subr.mxu0 0.0
      %2929 = vmatpush1.msra.mxu0 0.0
      %2930 = vmatprep.subr.mxu0 0.0
      %2931 = vmatpush1.msra.mxu0 0.0
      %2932 = vmatprep.subr.mxu0 0.0
      %2933 = vmatpush1.msra.mxu0 0.0
      %2934 = vmatprep.subr.mxu0 0.0
      %2935 = vmatpush1.msra.mxu0 0.0
      %2936 = vmatprep.subr.mxu0 0.0
      %2937 = vmatpush1.msra.mxu0 0.0
      %2938 = vmatprep.subr.mxu0 0.0
      %2939 = vmatpush1.msra.mxu0 0.0
      %2940 = vmatprep.subr.mxu0 0.0
      %2941 = vmatpush1.msra.mxu0 0.0
      %2942 = vmatprep.subr.mxu0 0.0
      %2943 = vmatpush1.msra.mxu0 0.0
      %2944 = vmatprep.subr.mxu0 0.0
      %2945 = vmatpush1.msra.mxu0 0.0
      %2946 = vmatprep.subr.mxu0 0.0
      %2947 = vmatpush1.msra.mxu0 0.0
      %2948 = vmatprep.subr.mxu0 0.0
      %2949 = vmatpush1.msra.mxu0 0.0
      %2950 = vmatprep.subr.mxu0 0.0
      %2951 = vmatpush1.msra.mxu0 0.0
      %2952 = vmatprep.subr.mxu0 0.0
      %2953 = vmatpush1.msra.mxu0 0.0
      %2954 = vmatprep.subr.mxu0 0.0
      %2955 = vmatpush1.msra.mxu0 0.0
      %2956 = vmatprep.subr.mxu0 0.0
      %2957 = vmatpush1.msra.mxu0 0.0
      %2958 = vmatprep.subr.mxu0 0.0
      %2959 = vmatpush1.msra.mxu0 0.0
      %2960 = vmatprep.subr.mxu0 0.0
      %2961 = vmatpush1.msra.mxu0 0.0
      %2962 = vmatprep.subr.mxu0 0.0
      %2963 = vmatpush1.msra.mxu0 0.0
      %2964 = vmatprep.subr.mxu0 0.0
      %2965 = vmatpush1.msra.mxu0 0.0
      %2966 = vmatprep.subr.mxu0 0.0
      %2967 = vmatpush1.msra.mxu0 0.0
      %2968 = vmatprep.subr.mxu0 0.0
      %2969 = vmatpush1.msra.mxu0 0.0
      %2970 = vmatprep.mubr.f32.mxu0 0.0
      %2971 = vmatmul.mubr.f32.gmra.mrb[0].mxu0 %v2901
      %v2972 = vpop.f32.mrb[0].mxu0
      %v2973 = vadd.f32 0.0, %v2972
      %v2974 = vpop.f32.mrb[0].mxu0
      %2975 = vmatprep.mubr.f32.mxu0 0.0
      %2976 = vmatmul.mubr.f32.gmra.mrb[0].mxu0 %v2904
      %v2977 = vpop.f32.mrb[0].mxu0
      %v2978 = vadd.f32 0.0, %v2977
      %v2979 = vpop.f32.mrb[0].mxu0
      %2980 = vdwg.mxu0
      %v2982 = vsel %vm2723, %v2886, 0
      %v2985 = vsel %vm2723, %v2887, 0
      %2987 = vmatprep.subr.mxu0 0.0
      %2988 = vmatpush1.msra.mxu0 %v1867
      %2989 = vmatprep.subr.mxu0 0.0
      %2990 = vmatpush1.msra.mxu0 %v2003
      %2991 = vmatprep.subr.mxu0 0.0
      %2992 = vmatpush1.msra.mxu0 0.0
      %2993 = vmatprep.subr.mxu0 0.0
      %2994 = vmatpush1.msra.mxu0 0.0
      %2995 = vmatprep.subr.mxu0 0.0
      %2996 = vmatpush1.msra.mxu0 0.0
      %2997 = vmatprep.subr.mxu0 0.0
      %2998 = vmatpush1.msra.mxu0 0.0
      %2999 = vmatprep.subr.mxu0 0.0
      %3000 = vmatpush1.msra.mxu0 0.0
      %3001 = vmatprep.subr.mxu0 0.0
      %3002 = vmatpush1.msra.mxu0 0.0
      %3003 = vmatprep.subr.mxu0 0.0
      %3004 = vmatpush1.msra.mxu0 0.0
      %3005 = vmatprep.subr.mxu0 0.0
      %3006 = vmatpush1.msra.mxu0 0.0
      %3007 = vmatprep.subr.mxu0 0.0
      %3008 = vmatpush1.msra.mxu0 0.0
      %3009 = vmatprep.subr.mxu0 0.0
      %3010 = vmatpush1.msra.mxu0 0.0
      %3011 = vmatprep.subr.mxu0 0.0
      %3012 = vmatpush1.msra.mxu0 0.0
      %3013 = vmatprep.subr.mxu0 0.0
      %3014 = vmatpush1.msra.mxu0 0.0
      %3015 = vmatprep.subr.mxu0 0.0
      %3016 = vmatpush1.msra.mxu0 0.0
      %3017 = vmatprep.subr.mxu0 0.0
      %3018 = vmatpush1.msra.mxu0 0.0
      %3019 = vmatprep.subr.mxu0 0.0
      %3020 = vmatpush1.msra.mxu0 0.0
      %3021 = vmatprep.subr.mxu0 0.0
      %3022 = vmatpush1.msra.mxu0 0.0
      %3023 = vmatprep.subr.mxu0 0.0
      %3024 = vmatpush1.msra.mxu0 0.0
      %3025 = vmatprep.subr.mxu0 0.0
      %3026 = vmatpush1.msra.mxu0 0.0
      %3027 = vmatprep.subr.mxu0 0.0
      %3028 = vmatpush1.msra.mxu0 0.0
      %3029 = vmatprep.subr.mxu0 0.0
      %3030 = vmatpush1.msra.mxu0 0.0
      %3031 = vmatprep.subr.mxu0 0.0
      %3032 = vmatpush1.msra.mxu0 0.0
      %3033 = vmatprep.subr.mxu0 0.0
      %3034 = vmatpush1.msra.mxu0 0.0
      %3035 = vmatprep.subr.mxu0 0.0
      %3036 = vmatpush1.msra.mxu0 0.0
      %3037 = vmatprep.subr.mxu0 0.0
      %3038 = vmatpush1.msra.mxu0 0.0
      %3039 = vmatprep.subr.mxu0 0.0
      %3040 = vmatpush1.msra.mxu0 0.0
      %3041 = vmatprep.subr.mxu0 0.0
      %3042 = vmatpush1.msra.mxu0 0.0
      %3043 = vmatprep.subr.mxu0 0.0
      %3044 = vmatpush1.msra.mxu0 0.0
      %3045 = vmatprep.subr.mxu0 0.0
      %3046 = vmatpush1.msra.mxu0 0.0
      %3047 = vmatprep.subr.mxu0 0.0
      %3048 = vmatpush1.msra.mxu0 0.0
      %3049 = vmatprep.subr.mxu0 0.0
      %3050 = vmatpush1.msra.mxu0 0.0
      %3051 = vmatprep.mubr.f32.mxu0 0.0
      %3052 = vmatmul.mubr.f32.gmra.mrb[0].mxu0 %v2982
      %v3053 = vpop.f32.mrb[0].mxu0
      %v3054 = vadd.f32 0.0, %v3053
      %v3055 = vpop.f32.mrb[0].mxu0
      %3056 = vmatprep.mubr.f32.mxu0 0.0
      %3057 = vmatmul.mubr.f32.gmra.mrb[0].mxu0 %v2985
      %v3058 = vpop.f32.mrb[0].mxu0
      %v3059 = vadd.f32 0.0, %v3058
      %v3060 = vpop.f32.mrb[0].mxu0
      %3061 = vdwg.mxu0
      %v3063 = vsel %vm2723, %v2888, 0
      %v3066 = vsel %vm2723, %v2889, 0
      %3068 = vmatprep.subr.mxu0 0.0
      %3069 = vmatpush1.msra.mxu0 %v1868
      %3070 = vmatprep.subr.mxu0 0.0
      %3071 = vmatpush1.msra.mxu0 %v2004
      %3072 = vmatprep.subr.mxu0 0.0
      %3073 = vmatpush1.msra.mxu0 0.0
      %3074 = vmatprep.subr.mxu0 0.0
      %3075 = vmatpush1.msra.mxu0 0.0
      %3076 = vmatprep.subr.mxu0 0.0
      %3077 = vmatpush1.msra.mxu0 0.0
      %3078 = vmatprep.subr.mxu0 0.0
      %3079 = vmatpush1.msra.mxu0 0.0
      %3080 = vmatprep.subr.mxu0 0.0
      %3081 = vmatpush1.msra.mxu0 0.0
      %3082 = vmatprep.subr.mxu0 0.0
      %3083 = vmatpush1.msra.mxu0 0.0
      %3084 = vmatprep.subr.mxu0 0.0
      %3085 = vmatpush1.msra.mxu0 0.0
      %3086 = vmatprep.subr.mxu0 0.0
      %3087 = vmatpush1.msra.mxu0 0.0
      %3088 = vmatprep.subr.mxu0 0.0
      %3089 = vmatpush1.msra.mxu0 0.0
      %3090 = vmatprep.subr.mxu0 0.0
      %3091 = vmatpush1.msra.mxu0 0.0
      %3092 = vmatprep.subr.mxu0 0.0
      %3093 = vmatpush1.msra.mxu0 0.0
      %3094 = vmatprep.subr.mxu0 0.0
      %3095 = vmatpush1.msra.mxu0 0.0
      %3096 = vmatprep.subr.mxu0 0.0
      %3097 = vmatpush1.msra.mxu0 0.0
      %3098 = vmatprep.subr.mxu0 0.0
      %3099 = vmatpush1.msra.mxu0 0.0
      %3100 = vmatprep.subr.mxu0 0.0
      %3101 = vmatpush1.msra.mxu0 0.0
      %3102 = vmatprep.subr.mxu0 0.0
      %3103 = vmatpush1.msra.mxu0 0.0
      %3104 = vmatprep.subr.mxu0 0.0
      %3105 = vmatpush1.msra.mxu0 0.0
      %3106 = vmatprep.subr.mxu0 0.0
      %3107 = vmatpush1.msra.mxu0 0.0
      %3108 = vmatprep.subr.mxu0 0.0
      %3109 = vmatpush1.msra.mxu0 0.0
      %3110 = vmatprep.subr.mxu0 0.0
      %3111 = vmatpush1.msra.mxu0 0.0
      %3112 = vmatprep.subr.mxu0 0.0
      %3113 = vmatpush1.msra.mxu0 0.0
      %3114 = vmatprep.subr.mxu0 0.0
      %3115 = vmatpush1.msra.mxu0 0.0
      %3116 = vmatprep.subr.mxu0 0.0
      %3117 = vmatpush1.msra.mxu0 0.0
      %3118 = vmatprep.subr.mxu0 0.0
      %3119 = vmatpush1.msra.mxu0 0.0
      %3120 = vmatprep.subr.mxu0 0.0
      %3121 = vmatpush1.msra.mxu0 0.0
      %3122 = vmatprep.subr.mxu0 0.0
      %3123 = vmatpush1.msra.mxu0 0.0
      %3124 = vmatprep.subr.mxu0 0.0
      %3125 = vmatpush1.msra.mxu0 0.0
      %3126 = vmatprep.subr.mxu0 0.0
      %3127 = vmatpush1.msra.mxu0 0.0
      %3128 = vmatprep.subr.mxu0 0.0
      %3129 = vmatpush1.msra.mxu0 0.0
      %3130 = vmatprep.subr.mxu0 0.0
      %3131 = vmatpush1.msra.mxu0 0.0
      %3132 = vmatprep.mubr.f32.mxu0 0.0
      %3133 = vmatmul.mubr.f32.gmra.mrb[0].mxu0 %v3063
      %v3134 = vpop.f32.mrb[0].mxu0
      %v3135 = vadd.f32 0.0, %v3134
      %v3136 = vpop.f32.mrb[0].mxu0
      %3137 = vmatprep.mubr.f32.mxu0 0.0
      %3138 = vmatmul.mubr.f32.gmra.mrb[0].mxu0 %v3066
      %v3139 = vpop.f32.mrb[0].mxu0
      %v3140 = vadd.f32 0.0, %v3139
      %v3141 = vpop.f32.mrb[0].mxu0
      %3142 = vdwg.mxu0
      %v3144 = vsel %vm2723, %v2890, 0
      %v3147 = vsel %vm2723, %v2891, 0
      %3149 = vmatprep.subr.mxu0 0.0
      %3150 = vmatpush1.msra.mxu0 %v1869
      %3151 = vmatprep.subr.mxu0 0.0
      %3152 = vmatpush1.msra.mxu0 %v2005
      %3153 = vmatprep.subr.mxu0 0.0
      %3154 = vmatpush1.msra.mxu0 0.0
      %3155 = vmatprep.subr.mxu0 0.0
      %3156 = vmatpush1.msra.mxu0 0.0
      %3157 = vmatprep.subr.mxu0 0.0
      %3158 = vmatpush1.msra.mxu0 0.0
      %3159 = vmatprep.subr.mxu0 0.0
      %3160 = vmatpush1.msra.mxu0 0.0
      %3161 = vmatprep.subr.mxu0 0.0
      %3162 = vmatpush1.msra.mxu0 0.0
      %3163 = vmatprep.subr.mxu0 0.0
      %3164 = vmatpush1.msra.mxu0 0.0
      %3165 = vmatprep.subr.mxu0 0.0
      %3166 = vmatpush1.msra.mxu0 0.0
      %3167 = vmatprep.subr.mxu0 0.0
      %3168 = vmatpush1.msra.mxu0 0.0
      %3169 = vmatprep.subr.mxu0 0.0
      %3170 = vmatpush1.msra.mxu0 0.0
      %3171 = vmatprep.subr.mxu0 0.0
      %3172 = vmatpush1.msra.mxu0 0.0
      %3173 = vmatprep.subr.mxu0 0.0
      %3174 = vmatpush1.msra.mxu0 0.0
      %3175 = vmatprep.subr.mxu0 0.0
      %3176 = vmatpush1.msra.mxu0 0.0
      %3177 = vmatprep.subr.mxu0 0.0
      %3178 = vmatpush1.msra.mxu0 0.0
      %3179 = vmatprep.subr.mxu0 0.0
      %3180 = vmatpush1.msra.mxu0 0.0
      %3181 = vmatprep.subr.mxu0 0.0
      %3182 = vmatpush1.msra.mxu0 0.0
      %3183 = vmatprep.subr.mxu0 0.0
      %3184 = vmatpush1.msra.mxu0 0.0
      %3185 = vmatprep.subr.mxu0 0.0
      %3186 = vmatpush1.msra.mxu0 0.0
      %3187 = vmatprep.subr.mxu0 0.0
      %3188 = vmatpush1.msra.mxu0 0.0
      %3189 = vmatprep.subr.mxu0 0.0
      %3190 = vmatpush1.msra.mxu0 0.0
      %3191 = vmatprep.subr.mxu0 0.0
      %3192 = vmatpush1.msra.mxu0 0.0
      %3193 = vmatprep.subr.mxu0 0.0
      %3194 = vmatpush1.msra.mxu0 0.0
      %3195 = vmatprep.subr.mxu0 0.0
      %3196 = vmatpush1.msra.mxu0 0.0
      %3197 = vmatprep.subr.mxu0 0.0
      %3198 = vmatpush1.msra.mxu0 0.0
      %3199 = vmatprep.subr.mxu0 0.0
      %3200 = vmatpush1.msra.mxu0 0.0
      %3201 = vmatprep.subr.mxu0 0.0
      %3202 = vmatpush1.msra.mxu0 0.0
      %3203 = vmatprep.subr.mxu0 0.0
      %3204 = vmatpush1.msra.mxu0 0.0
      %3205 = vmatprep.subr.mxu0 0.0
      %3206 = vmatpush1.msra.mxu0 0.0
      %3207 = vmatprep.subr.mxu0 0.0
      %3208 = vmatpush1.msra.mxu0 0.0
      %3209 = vmatprep.subr.mxu0 0.0
      %3210 = vmatpush1.msra.mxu0 0.0
      %3211 = vmatprep.subr.mxu0 0.0
      %3212 = vmatpush1.msra.mxu0 0.0
      %3213 = vmatprep.mubr.f32.mxu0 0.0
      %3214 = vmatmul.mubr.f32.gmra.mrb[0].mxu0 %v3144
      %v3215 = vpop.f32.mrb[0].mxu0
      %v3216 = vadd.f32 0.0, %v3215
      %v3217 = vpop.f32.mrb[0].mxu0
      %3218 = vmatprep.mubr.f32.mxu0 0.0
      %3219 = vmatmul.mubr.f32.gmra.mrb[0].mxu0 %v3147
      %v3220 = vpop.f32.mrb[0].mxu0
      %v3221 = vadd.f32 0.0, %v3220
      %v3222 = vpop.f32.mrb[0].mxu0
      %3223 = vdwg.mxu0
      %v3225 = vsel %vm2723, %v2892, 0
      %v3228 = vsel %vm2723, %v2893, 0
      %3230 = vmatprep.subr.mxu0 0.0
      %3231 = vmatpush1.msra.mxu0 %v1870
      %3232 = vmatprep.subr.mxu0 0.0
      %3233 = vmatpush1.msra.mxu0 %v2006
      %3234 = vmatprep.subr.mxu0 0.0
      %3235 = vmatpush1.msra.mxu0 0.0
      %3236 = vmatprep.subr.mxu0 0.0
      %3237 = vmatpush1.msra.mxu0 0.0
      %3238 = vmatprep.subr.mxu0 0.0
      %3239 = vmatpush1.msra.mxu0 0.0
      %3240 = vmatprep.subr.mxu0 0.0
      %3241 = vmatpush1.msra.mxu0 0.0
      %3242 = vmatprep.subr.mxu0 0.0
      %3243 = vmatpush1.msra.mxu0 0.0
      %3244 = vmatprep.subr.mxu0 0.0
      %3245 = vmatpush1.msra.mxu0 0.0
      %3246 = vmatprep.subr.mxu0 0.0
      %3247 = vmatpush1.msra.mxu0 0.0
      %3248 = vmatprep.subr.mxu0 0.0
      %3249 = vmatpush1.msra.mxu0 0.0
      %3250 = vmatprep.subr.mxu0 0.0
      %3251 = vmatpush1.msra.mxu0 0.0
      %3252 = vmatprep.subr.mxu0 0.0
      %3253 = vmatpush1.msra.mxu0 0.0
      %3254 = vmatprep.subr.mxu0 0.0
      %3255 = vmatpush1.msra.mxu0 0.0
      %3256 = vmatprep.subr.mxu0 0.0
      %3257 = vmatpush1.msra.mxu0 0.0
      %3258 = vmatprep.subr.mxu0 0.0
      %3259 = vmatpush1.msra.mxu0 0.0
      %3260 = vmatprep.subr.mxu0 0.0
      %3261 = vmatpush1.msra.mxu0 0.0
      %3262 = vmatprep.subr.mxu0 0.0
      %3263 = vmatpush1.msra.mxu0 0.0
      %3264 = vmatprep.subr.mxu0 0.0
      %3265 = vmatpush1.msra.mxu0 0.0
      %3266 = vmatprep.subr.mxu0 0.0
      %3267 = vmatpush1.msra.mxu0 0.0
      %3268 = vmatprep.subr.mxu0 0.0
      %3269 = vmatpush1.msra.mxu0 0.0
      %3270 = vmatprep.subr.mxu0 0.0
      %3271 = vmatpush1.msra.mxu0 0.0
      %3272 = vmatprep.subr.mxu0 0.0
      %3273 = vmatpush1.msra.mxu0 0.0
      %3274 = vmatprep.subr.mxu0 0.0
      %3275 = vmatpush1.msra.mxu0 0.0
      %3276 = vmatprep.subr.mxu0 0.0
      %3277 = vmatpush1.msra.mxu0 0.0
      %3278 = vmatprep.subr.mxu0 0.0
      %3279 = vmatpush1.msra.mxu0 0.0
      %3280 = vmatprep.subr.mxu0 0.0
      %3281 = vmatpush1.msra.mxu0 0.0
      %3282 = vmatprep.subr.mxu0 0.0
      %3283 = vmatpush1.msra.mxu0 0.0
      %3284 = vmatprep.subr.mxu0 0.0
      %3285 = vmatpush1.msra.mxu0 0.0
      %3286 = vmatprep.subr.mxu0 0.0
      %3287 = vmatpush1.msra.mxu0 0.0
      %3288 = vmatprep.subr.mxu0 0.0
      %3289 = vmatpush1.msra.mxu0 0.0
      %3290 = vmatprep.subr.mxu0 0.0
      %3291 = vmatpush1.msra.mxu0 0.0
      %3292 = vmatprep.subr.mxu0 0.0
      %3293 = vmatpush1.msra.mxu0 0.0
      %3294 = vmatprep.mubr.f32.mxu0 0.0
      %3295 = vmatmul.mubr.f32.gmra.mrb[0].mxu0 %v3225
      %v3296 = vpop.f32.mrb[0].mxu0
      %v3297 = vadd.f32 0.0, %v3296
      %v3298 = vpop.f32.mrb[0].mxu0
      %3299 = vmatprep.mubr.f32.mxu0 0.0
      %3300 = vmatmul.mubr.f32.gmra.mrb[0].mxu0 %v3228
      %v3301 = vpop.f32.mrb[0].mxu0
      %v3302 = vadd.f32 0.0, %v3301
      %v3303 = vpop.f32.mrb[0].mxu0
      %3304 = vdwg.mxu0
      %v3306 = vsel %vm2723, %v2894, 0
      %v3309 = vsel %vm2723, %v2895, 0
      %3311 = vmatprep.subr.mxu0 0.0
      %3312 = vmatpush1.msra.mxu0 %v1871
      %3313 = vmatprep.subr.mxu0 0.0
      %3314 = vmatpush1.msra.mxu0 %v2007
      %3315 = vmatprep.subr.mxu0 0.0
      %3316 = vmatpush1.msra.mxu0 0.0
      %3317 = vmatprep.subr.mxu0 0.0
      %3318 = vmatpush1.msra.mxu0 0.0
      %3319 = vmatprep.subr.mxu0 0.0
      %3320 = vmatpush1.msra.mxu0 0.0
      %3321 = vmatprep.subr.mxu0 0.0
      %3322 = vmatpush1.msra.mxu0 0.0
      %3323 = vmatprep.subr.mxu0 0.0
      %3324 = vmatpush1.msra.mxu0 0.0
      %3325 = vmatprep.subr.mxu0 0.0
      %3326 = vmatpush1.msra.mxu0 0.0
      %3327 = vmatprep.subr.mxu0 0.0
      %3328 = vmatpush1.msra.mxu0 0.0
      %3329 = vmatprep.subr.mxu0 0.0
      %3330 = vmatpush1.msra.mxu0 0.0
      %3331 = vmatprep.subr.mxu0 0.0
      %3332 = vmatpush1.msra.mxu0 0.0
      %3333 = vmatprep.subr.mxu0 0.0
      %3334 = vmatpush1.msra.mxu0 0.0
      %3335 = vmatprep.subr.mxu0 0.0
      %3336 = vmatpush1.msra.mxu0 0.0
      %3337 = vmatprep.subr.mxu0 0.0
      %3338 = vmatpush1.msra.mxu0 0.0
      %3339 = vmatprep.subr.mxu0 0.0
      %3340 = vmatpush1.msra.mxu0 0.0
      %3341 = vmatprep.subr.mxu0 0.0
      %3342 = vmatpush1.msra.mxu0 0.0
      %3343 = vmatprep.subr.mxu0 0.0
      %3344 = vmatpush1.msra.mxu0 0.0
      %3345 = vmatprep.subr.mxu0 0.0
      %3346 = vmatpush1.msra.mxu0 0.0
      %3347 = vmatprep.subr.mxu0 0.0
      %3348 = vmatpush1.msra.mxu0 0.0
      %3349 = vmatprep.subr.mxu0 0.0
      %3350 = vmatpush1.msra.mxu0 0.0
      %3351 = vmatprep.subr.mxu0 0.0
      %3352 = vmatpush1.msra.mxu0 0.0
      %3353 = vmatprep.subr.mxu0 0.0
      %3354 = vmatpush1.msra.mxu0 0.0
      %3355 = vmatprep.subr.mxu0 0.0
      %3356 = vmatpush1.msra.mxu0 0.0
      %3357 = vmatprep.subr.mxu0 0.0
      %3358 = vmatpush1.msra.mxu0 0.0
      %3359 = vmatprep.subr.mxu0 0.0
      %3360 = vmatpush1.msra.mxu0 0.0
      %3361 = vmatprep.subr.mxu0 0.0
      %3362 = vmatpush1.msra.mxu0 0.0
      %3363 = vmatprep.subr.mxu0 0.0
      %3364 = vmatpush1.msra.mxu0 0.0
      %3365 = vmatprep.subr.mxu0 0.0
      %3366 = vmatpush1.msra.mxu0 0.0
      %3367 = vmatprep.subr.mxu0 0.0
      %3368 = vmatpush1.msra.mxu0 0.0
      %3369 = vmatprep.subr.mxu0 0.0
      %3370 = vmatpush1.msra.mxu0 0.0
      %3371 = vmatprep.subr.mxu0 0.0
      %3372 = vmatpush1.msra.mxu0 0.0
      %3373 = vmatprep.subr.mxu0 0.0
      %3374 = vmatpush1.msra.mxu0 0.0
      %3375 = vmatprep.mubr.f32.mxu0 0.0
      %3376 = vmatmul.mubr.f32.gmra.mrb[0].mxu0 %v3306
      %v3377 = vpop.f32.mrb[0].mxu0
      %v3378 = vadd.f32 0.0, %v3377
      %v3379 = vpop.f32.mrb[0].mxu0
      %3380 = vmatprep.mubr.f32.mxu0 0.0
      %3381 = vmatmul.mubr.f32.gmra.mrb[0].mxu0 %v3309
      %v3382 = vpop.f32.mrb[0].mxu0
      %v3383 = vadd.f32 0.0, %v3382
      %v3384 = vpop.f32.mrb[0].mxu0
      %3385 = vdwg.mxu0
      %v3387 = vsel %vm2723, %v2896, 0
      %v3390 = vsel %vm2723, %v2897, 0
      %3392 = vmatprep.subr.mxu0 0.0
      %3393 = vmatpush1.msra.mxu0 %v1872
      %3394 = vmatprep.subr.mxu0 0.0
      %3395 = vmatpush1.msra.mxu0 %v2008
      %3396 = vmatprep.subr.mxu0 0.0
      %3397 = vmatpush1.msra.mxu0 0.0
      %3398 = vmatprep.subr.mxu0 0.0
      %3399 = vmatpush1.msra.mxu0 0.0
      %3400 = vmatprep.subr.mxu0 0.0
      %3401 = vmatpush1.msra.mxu0 0.0
      %3402 = vmatprep.subr.mxu0 0.0
      %3403 = vmatpush1.msra.mxu0 0.0
      %3404 = vmatprep.subr.mxu0 0.0
      %3405 = vmatpush1.msra.mxu0 0.0
      %3406 = vmatprep.subr.mxu0 0.0
      %3407 = vmatpush1.msra.mxu0 0.0
      %3408 = vmatprep.subr.mxu0 0.0
      %3409 = vmatpush1.msra.mxu0 0.0
      %3410 = vmatprep.subr.mxu0 0.0
      %3411 = vmatpush1.msra.mxu0 0.0
      %3412 = vmatprep.subr.mxu0 0.0
      %3413 = vmatpush1.msra.mxu0 0.0
      %3414 = vmatprep.subr.mxu0 0.0
      %3415 = vmatpush1.msra.mxu0 0.0
      %3416 = vmatprep.subr.mxu0 0.0
      %3417 = vmatpush1.msra.mxu0 0.0
      %3418 = vmatprep.subr.mxu0 0.0
      %3419 = vmatpush1.msra.mxu0 0.0
      %3420 = vmatprep.subr.mxu0 0.0
      %3421 = vmatpush1.msra.mxu0 0.0
      %3422 = vmatprep.subr.mxu0 0.0
      %3423 = vmatpush1.msra.mxu0 0.0
      %3424 = vmatprep.subr.mxu0 0.0
      %3425 = vmatpush1.msra.mxu0 0.0
      %3426 = vmatprep.subr.mxu0 0.0
      %3427 = vmatpush1.msra.mxu0 0.0
      %3428 = vmatprep.subr.mxu0 0.0
      %3429 = vmatpush1.msra.mxu0 0.0
      %3430 = vmatprep.subr.mxu0 0.0
      %3431 = vmatpush1.msra.mxu0 0.0
      %3432 = vmatprep.subr.mxu0 0.0
      %3433 = vmatpush1.msra.mxu0 0.0
      %3434 = vmatprep.subr.mxu0 0.0
      %3435 = vmatpush1.msra.mxu0 0.0
      %3436 = vmatprep.subr.mxu0 0.0
      %3437 = vmatpush1.msra.mxu0 0.0
      %3438 = vmatprep.subr.mxu0 0.0
      %3439 = vmatpush1.msra.mxu0 0.0
      %3440 = vmatprep.subr.mxu0 0.0
      %3441 = vmatpush1.msra.mxu0 0.0
      %3442 = vmatprep.subr.mxu0 0.0
      %3443 = vmatpush1.msra.mxu0 0.0
      %3444 = vmatprep.subr.mxu0 0.0
      %3445 = vmatpush1.msra.mxu0 0.0
      %3446 = vmatprep.subr.mxu0 0.0
      %3447 = vmatpush1.msra.mxu0 0.0
      %3448 = vmatprep.subr.mxu0 0.0
      %3449 = vmatpush1.msra.mxu0 0.0
      %3450 = vmatprep.subr.mxu0 0.0
      %3451 = vmatpush1.msra.mxu0 0.0
      %3452 = vmatprep.subr.mxu0 0.0
      %3453 = vmatpush1.msra.mxu0 0.0
      %3454 = vmatprep.subr.mxu0 0.0
      %3455 = vmatpush1.msra.mxu0 0.0
      %3456 = vmatprep.mubr.f32.mxu0 0.0
      %3457 = vmatmul.mubr.f32.gmra.mrb[0].mxu0 %v3387
      %v3458 = vpop.f32.mrb[0].mxu0
      %v3459 = vadd.f32 0.0, %v3458
      %v3460 = vpop.f32.mrb[0].mxu0
      %3461 = vmatprep.mubr.f32.mxu0 0.0
      %3462 = vmatmul.mubr.f32.gmra.mrb[0].mxu0 %v3390
      %v3463 = vpop.f32.mrb[0].mxu0
      %v3464 = vadd.f32 0.0, %v3463
      %v3465 = vpop.f32.mrb[0].mxu0
      %3466 = vdwg.mxu0
      %v3468 = vsel %vm2723, %v2898, 0
      %v3471 = vsel %vm2723, %v2899, 0
      %3473 = vmatprep.subr.mxu0 0.0
      %3474 = vmatpush1.msra.mxu0 %v1873
      %3475 = vmatprep.subr.mxu0 0.0
      %3476 = vmatpush1.msra.mxu0 %v2009
      %3477 = vmatprep.subr.mxu0 0.0
      %3478 = vmatpush1.msra.mxu0 0.0
      %3479 = vmatprep.subr.mxu0 0.0
      %3480 = vmatpush1.msra.mxu0 0.0
      %3481 = vmatprep.subr.mxu0 0.0
      %3482 = vmatpush1.msra.mxu0 0.0
      %3483 = vmatprep.subr.mxu0 0.0
      %3484 = vmatpush1.msra.mxu0 0.0
      %3485 = vmatprep.subr.mxu0 0.0
      %3486 = vmatpush1.msra.mxu0 0.0
      %3487 = vmatprep.subr.mxu0 0.0
      %3488 = vmatpush1.msra.mxu0 0.0
      %3489 = vmatprep.subr.mxu0 0.0
      %3490 = vmatpush1.msra.mxu0 0.0
      %3491 = vmatprep.subr.mxu0 0.0
      %3492 = vmatpush1.msra.mxu0 0.0
      %3493 = vmatprep.subr.mxu0 0.0
      %3494 = vmatpush1.msra.mxu0 0.0
      %3495 = vmatprep.subr.mxu0 0.0
      %3496 = vmatpush1.msra.mxu0 0.0
      %3497 = vmatprep.subr.mxu0 0.0
      %3498 = vmatpush1.msra.mxu0 0.0
      %3499 = vmatprep.subr.mxu0 0.0
      %3500 = vmatpush1.msra.mxu0 0.0
      %3501 = vmatprep.subr.mxu0 0.0
      %3502 = vmatpush1.msra.mxu0 0.0
      %3503 = vmatprep.subr.mxu0 0.0
      %3504 = vmatpush1.msra.mxu0 0.0
      %3505 = vmatprep.subr.mxu0 0.0
      %3506 = vmatpush1.msra.mxu0 0.0
      %3507 = vmatprep.subr.mxu0 0.0
      %3508 = vmatpush1.msra.mxu0 0.0
      %3509 = vmatprep.subr.mxu0 0.0
      %3510 = vmatpush1.msra.mxu0 0.0
      %3511 = vmatprep.subr.mxu0 0.0
      %3512 = vmatpush1.msra.mxu0 0.0
      %3513 = vmatprep.subr.mxu0 0.0
      %3514 = vmatpush1.msra.mxu0 0.0
      %3515 = vmatprep.subr.mxu0 0.0
      %3516 = vmatpush1.msra.mxu0 0.0
      %3517 = vmatprep.subr.mxu0 0.0
      %3518 = vmatpush1.msra.mxu0 0.0
      %3519 = vmatprep.subr.mxu0 0.0
      %3520 = vmatpush1.msra.mxu0 0.0
      %3521 = vmatprep.subr.mxu0 0.0
      %3522 = vmatpush1.msra.mxu0 0.0
      %3523 = vmatprep.subr.mxu0 0.0
      %3524 = vmatpush1.msra.mxu0 0.0
      %3525 = vmatprep.subr.mxu0 0.0
      %3526 = vmatpush1.msra.mxu0 0.0
      %3527 = vmatprep.subr.mxu0 0.0
      %3528 = vmatpush1.msra.mxu0 0.0
      %3529 = vmatprep.subr.mxu0 0.0
      %3530 = vmatpush1.msra.mxu0 0.0
      %3531 = vmatprep.subr.mxu0 0.0
      %3532 = vmatpush1.msra.mxu0 0.0
      %3533 = vmatprep.subr.mxu0 0.0
      %3534 = vmatpush1.msra.mxu0 0.0
      %3535 = vmatprep.subr.mxu0 0.0
      %3536 = vmatpush1.msra.mxu0 0.0
      %3537 = vmatprep.mubr.f32.mxu0 0.0
      %3538 = vmatmul.mubr.f32.gmra.mrb[0].mxu0 %v3468
      %v3539 = vpop.f32.mrb[0].mxu0
      %v3540 = vadd.f32 0.0, %v3539
      %v3541 = vpop.f32.mrb[0].mxu0
      %3542 = vmatprep.mubr.f32.mxu0 0.0
      %3543 = vmatmul.mubr.f32.gmra.mrb[0].mxu0 %v3471
      %v3544 = vpop.f32.mrb[0].mxu0
      %v3545 = vadd.f32 0.0, %v3544
      %v3546 = vpop.f32.mrb[0].mxu0
      %3547 = vdwg.mxu0
      %v3548 = vcombine.low %v2973, %v3135
      %v3549 = vcombine.high %v2973, %v3135
      %v3551 = vunpack.c.l.s4 1983009808
      %v3552 = vunpack.c.0.s8 %v3551
      %v3553 = vlaneseq
      %v3554 = vshrl.u32 %v3553, 7
      %v3555 = vsub.s32 %v3552, %v3554
      %v3556 = vrot.slane %v3548, %v3555
      %v3558 = vunpack.c.l.s4 1983009808
      %v3559 = vunpack.c.0.s8 %v3558
      %v3560 = vlaneseq
      %v3561 = vshrl.u32 %v3560, 7
      %v3562 = vsub.s32 %v3559, %v3561
      %v3563 = vrot.slane %v3549, %v3562
      %v3564 = vcombine.low %v3054, %v3216
      %v3565 = vcombine.high %v3054, %v3216
      %v3567 = vunpack.c.l.s4 1983009808
      %v3568 = vunpack.c.0.s8 %v3567
      %v3569 = vlaneseq
      %v3570 = vshrl.u32 %v3569, 7
      %v3571 = vsub.s32 %v3568, %v3570
      %v3572 = vrot.slane %v3564, %v3571
      %v3574 = vunpack.c.l.s4 1983009808
      %v3575 = vunpack.c.0.s8 %v3574
      %v3576 = vlaneseq
      %v3577 = vshrl.u32 %v3576, 7
      %v3578 = vsub.s32 %v3575, %v3577
      %v3579 = vrot.slane %v3565, %v3578
      %v3580 = vcombine.low %v3297, %v3459
      %v3581 = vcombine.high %v3297, %v3459
      %v3583 = vunpack.c.l.s4 1983009808
      %v3584 = vunpack.c.0.s8 %v3583
      %v3585 = vlaneseq
      %v3586 = vshrl.u32 %v3585, 7
      %v3587 = vsub.s32 %v3584, %v3586
      %v3588 = vrot.slane %v3580, %v3587
      %v3590 = vunpack.c.l.s4 1983009808
      %v3591 = vunpack.c.0.s8 %v3590
      %v3592 = vlaneseq
      %v3593 = vshrl.u32 %v3592, 7
      %v3594 = vsub.s32 %v3591, %v3593
      %v3595 = vrot.slane %v3581, %v3594
      %v3596 = vcombine.low %v3378, %v3540
      %v3597 = vcombine.high %v3378, %v3540
      %v3599 = vunpack.c.l.s4 1983009808
      %v3600 = vunpack.c.0.s8 %v3599
      %v3601 = vlaneseq
      %v3602 = vshrl.u32 %v3601, 7
      %v3603 = vsub.s32 %v3600, %v3602
      %v3604 = vrot.slane %v3596, %v3603
      %v3606 = vunpack.c.l.s4 1983009808
      %v3607 = vunpack.c.0.s8 %v3606
      %v3608 = vlaneseq
      %v3609 = vshrl.u32 %v3608, 7
      %v3610 = vsub.s32 %v3607, %v3609
      %v3611 = vrot.slane %v3597, %v3610
      %v3612 = vcombine.low %v3556, %v3572
      %v3613 = vcombine.high %v3556, %v3572
      %v3615 = vunpack.c.l.s4 1934713408
      %v3616 = vunpack.c.0.s8 %v3615
      %v3617 = vlaneseq
      %v3618 = vshrl.u32 %v3617, 7
      %v3619 = vsub.s32 %v3616, %v3618
      %v3620 = vrot.slane %v3612, %v3619
      %v3622 = vunpack.c.l.s4 1934713408
      %v3623 = vunpack.c.0.s8 %v3622
      %v3624 = vlaneseq
      %v3625 = vshrl.u32 %v3624, 7
      %v3626 = vsub.s32 %v3623, %v3625
      %v3627 = vrot.slane %v3613, %v3626
      %v3628 = vcombine.low %v3563, %v3579
      %v3629 = vcombine.high %v3563, %v3579
      %v3631 = vunpack.c.l.s4 1934713408
      %v3632 = vunpack.c.0.s8 %v3631
      %v3633 = vlaneseq
      %v3634 = vshrl.u32 %v3633, 7
      %v3635 = vsub.s32 %v3632, %v3634
      %v3636 = vrot.slane %v3628, %v3635
      %v3638 = vunpack.c.l.s4 1934713408
      %v3639 = vunpack.c.0.s8 %v3638
      %v3640 = vlaneseq
      %v3641 = vshrl.u32 %v3640, 7
      %v3642 = vsub.s32 %v3639, %v3641
      %v3643 = vrot.slane %v3629, %v3642
      %v3644 = vcombine.low %v3588, %v3604
      %v3645 = vcombine.high %v3588, %v3604
      %v3647 = vunpack.c.l.s4 1934713408
      %v3648 = vunpack.c.0.s8 %v3647
      %v3649 = vlaneseq
      %v3650 = vshrl.u32 %v3649, 7
      %v3651 = vsub.s32 %v3648, %v3650
      %v3652 = vrot.slane %v3644, %v3651
      %v3654 = vunpack.c.l.s4 1934713408
      %v3655 = vunpack.c.0.s8 %v3654
      %v3656 = vlaneseq
      %v3657 = vshrl.u32 %v3656, 7
      %v3658 = vsub.s32 %v3655, %v3657
      %v3659 = vrot.slane %v3645, %v3658
      %v3660 = vcombine.low %v3595, %v3611
      %v3661 = vcombine.high %v3595, %v3611
      %v3663 = vunpack.c.l.s4 1934713408
      %v3664 = vunpack.c.0.s8 %v3663
      %v3665 = vlaneseq
      %v3666 = vshrl.u32 %v3665, 7
      %v3667 = vsub.s32 %v3664, %v3666
      %v3668 = vrot.slane %v3660, %v3667
      %v3670 = vunpack.c.l.s4 1934713408
      %v3671 = vunpack.c.0.s8 %v3670
      %v3672 = vlaneseq
      %v3673 = vshrl.u32 %v3672, 7
      %v3674 = vsub.s32 %v3671, %v3673
      %v3675 = vrot.slane %v3661, %v3674
      %v3676 = vcombine.low %v3620, %v3652
      %v3677 = vcombine.high %v3620, %v3652
      %v3678 = vcombine.low %v3627, %v3659
      %v3679 = vcombine.high %v3627, %v3659
      %v3680 = vcombine.low %v3636, %v3668
      %v3681 = vcombine.high %v3636, %v3668
      %v3682 = vcombine.low %v3643, %v3675
      %v3683 = vcombine.high %v3643, %v3675
      %v3684 = vcombine.low %v2978, %v3140
      %v3685 = vcombine.high %v2978, %v3140
      %v3687 = vunpack.c.l.s4 1983009808
      %v3688 = vunpack.c.0.s8 %v3687
      %v3689 = vlaneseq
      %v3690 = vshrl.u32 %v3689, 7
      %v3691 = vsub.s32 %v3688, %v3690
      %v3692 = vrot.slane %v3684, %v3691
      %v3694 = vunpack.c.l.s4 1983009808
      %v3695 = vunpack.c.0.s8 %v3694
      %v3696 = vlaneseq
      %v3697 = vshrl.u32 %v3696, 7
      %v3698 = vsub.s32 %v3695, %v3697
      %v3699 = vrot.slane %v3685, %v3698
      %v3700 = vcombine.low %v3059, %v3221
      %v3701 = vcombine.high %v3059, %v3221
      %v3703 = vunpack.c.l.s4 1983009808
      %v3704 = vunpack.c.0.s8 %v3703
      %v3705 = vlaneseq
      %v3706 = vshrl.u32 %v3705, 7
      %v3707 = vsub.s32 %v3704, %v3706
      %v3708 = vrot.slane %v3700, %v3707
      %v3710 = vunpack.c.l.s4 1983009808
      %v3711 = vunpack.c.0.s8 %v3710
      %v3712 = vlaneseq
      %v3713 = vshrl.u32 %v3712, 7
      %v3714 = vsub.s32 %v3711, %v3713
      %v3715 = vrot.slane %v3701, %v3714
      %v3716 = vcombine.low %v3302, %v3464
      %v3717 = vcombine.high %v3302, %v3464
      %v3719 = vunpack.c.l.s4 1983009808
      %v3720 = vunpack.c.0.s8 %v3719
      %v3721 = vlaneseq
      %v3722 = vshrl.u32 %v3721, 7
      %v3723 = vsub.s32 %v3720, %v3722
      %v3724 = vrot.slane %v3716, %v3723
      %v3726 = vunpack.c.l.s4 1983009808
      %v3727 = vunpack.c.0.s8 %v3726
      %v3728 = vlaneseq
      %v3729 = vshrl.u32 %v3728, 7
      %v3730 = vsub.s32 %v3727, %v3729
      %v3731 = vrot.slane %v3717, %v3730
      %v3732 = vcombine.low %v3383, %v3545
      %v3733 = vcombine.high %v3383, %v3545
      %v3735 = vunpack.c.l.s4 1983009808
      %v3736 = vunpack.c.0.s8 %v3735
      %v3737 = vlaneseq
      %v3738 = vshrl.u32 %v3737, 7
      %v3739 = vsub.s32 %v3736, %v3738
      %v3740 = vrot.slane %v3732, %v3739
      %v3742 = vunpack.c.l.s4 1983009808
      %v3743 = vunpack.c.0.s8 %v3742
      %v3744 = vlaneseq
      %v3745 = vshrl.u32 %v3744, 7
      %v3746 = vsub.s32 %v3743, %v3745
      %v3747 = vrot.slane %v3733, %v3746
      %v3748 = vcombine.low %v3692, %v3708
      %v3749 = vcombine.high %v3692, %v3708
      %v3751 = vunpack.c.l.s4 1934713408
      %v3752 = vunpack.c.0.s8 %v3751
      %v3753 = vlaneseq
      %v3754 = vshrl.u32 %v3753, 7
      %v3755 = vsub.s32 %v3752, %v3754
      %v3756 = vrot.slane %v3748, %v3755
      %v3758 = vunpack.c.l.s4 1934713408
      %v3759 = vunpack.c.0.s8 %v3758
      %v3760 = vlaneseq
      %v3761 = vshrl.u32 %v3760, 7
      %v3762 = vsub.s32 %v3759, %v3761
      %v3763 = vrot.slane %v3749, %v3762
      %v3764 = vcombine.low %v3699, %v3715
      %v3765 = vcombine.high %v3699, %v3715
      %v3767 = vunpack.c.l.s4 1934713408
      %v3768 = vunpack.c.0.s8 %v3767
      %v3769 = vlaneseq
      %v3770 = vshrl.u32 %v3769, 7
      %v3771 = vsub.s32 %v3768, %v3770
      %v3772 = vrot.slane %v3764, %v3771
      %v3774 = vunpack.c.l.s4 1934713408
      %v3775 = vunpack.c.0.s8 %v3774
      %v3776 = vlaneseq
      %v3777 = vshrl.u32 %v3776, 7
      %v3778 = vsub.s32 %v3775, %v3777
      %v3779 = vrot.slane %v3765, %v3778
      %v3780 = vcombine.low %v3724, %v3740
      %v3781 = vcombine.high %v3724, %v3740
      %v3783 = vunpack.c.l.s4 1934713408
      %v3784 = vunpack.c.0.s8 %v3783
      %v3785 = vlaneseq
      %v3786 = vshrl.u32 %v3785, 7
      %v3787 = vsub.s32 %v3784, %v3786
      %v3788 = vrot.slane %v3780, %v3787
      %v3790 = vunpack.c.l.s4 1934713408
      %v3791 = vunpack.c.0.s8 %v3790
      %v3792 = vlaneseq
      %v3793 = vshrl.u32 %v3792, 7
      %v3794 = vsub.s32 %v3791, %v3793
      %v3795 = vrot.slane %v3781, %v3794
      %v3796 = vcombine.low %v3731, %v3747
      %v3797 = vcombine.high %v3731, %v3747
      %v3799 = vunpack.c.l.s4 1934713408
      %v3800 = vunpack.c.0.s8 %v3799
      %v3801 = vlaneseq
      %v3802 = vshrl.u32 %v3801, 7
      %v3803 = vsub.s32 %v3800, %v3802
      %v3804 = vrot.slane %v3796, %v3803
      %v3806 = vunpack.c.l.s4 1934713408
      %v3807 = vunpack.c.0.s8 %v3806
      %v3808 = vlaneseq
      %v3809 = vshrl.u32 %v3808, 7
      %v3810 = vsub.s32 %v3807, %v3809
      %v3811 = vrot.slane %v3797, %v3810
      %v3812 = vcombine.low %v3756, %v3788
      %v3813 = vcombine.high %v3756, %v3788
      %v3814 = vcombine.low %v3763, %v3795
      %v3815 = vcombine.high %v3763, %v3795
      %v3816 = vcombine.low %v3772, %v3804
      %v3817 = vcombine.high %v3772, %v3804
      %v3818 = vcombine.low %v3779, %v3811
      %v3819 = vcombine.high %v3779, %v3811
      %v3820 = vcombine.low %v3676, %v3678
      %v3821 = vcombine.high %v3676, %v3678
      %v3823 = vunpack.c.l.s4 1983009808
      %v3824 = vunpack.c.0.s8 %v3823
      %v3825 = vlaneseq
      %v3826 = vshrl.u32 %v3825, 7
      %v3827 = vsub.s32 %v3824, %v3826
      %v3828 = vrot.slane %v3820, %v3827
      %v3830 = vunpack.c.l.s4 1983009808
      %v3831 = vunpack.c.0.s8 %v3830
      %v3832 = vlaneseq
      %v3833 = vshrl.u32 %v3832, 7
      %v3834 = vsub.s32 %v3831, %v3833
      %v3835 = vrot.slane %v3821, %v3834
      %v3836 = vcombine.low %v3677, %v3679
      %v3837 = vcombine.high %v3677, %v3679
      %v3839 = vunpack.c.l.s4 1983009808
      %v3840 = vunpack.c.0.s8 %v3839
      %v3841 = vlaneseq
      %v3842 = vshrl.u32 %v3841, 7
      %v3843 = vsub.s32 %v3840, %v3842
      %v3844 = vrot.slane %v3836, %v3843
      %v3846 = vunpack.c.l.s4 1983009808
      %v3847 = vunpack.c.0.s8 %v3846
      %v3848 = vlaneseq
      %v3849 = vshrl.u32 %v3848, 7
      %v3850 = vsub.s32 %v3847, %v3849
      %v3851 = vrot.slane %v3837, %v3850
      %v3852 = vcombine.low %v3680, %v3682
      %v3853 = vcombine.high %v3680, %v3682
      %v3855 = vunpack.c.l.s4 1983009808
      %v3856 = vunpack.c.0.s8 %v3855
      %v3857 = vlaneseq
      %v3858 = vshrl.u32 %v3857, 7
      %v3859 = vsub.s32 %v3856, %v3858
      %v3860 = vrot.slane %v3852, %v3859
      %v3862 = vunpack.c.l.s4 1983009808
      %v3863 = vunpack.c.0.s8 %v3862
      %v3864 = vlaneseq
      %v3865 = vshrl.u32 %v3864, 7
      %v3866 = vsub.s32 %v3863, %v3865
      %v3867 = vrot.slane %v3853, %v3866
      %v3868 = vcombine.low %v3681, %v3683
      %v3869 = vcombine.high %v3681, %v3683
      %v3871 = vunpack.c.l.s4 1983009808
      %v3872 = vunpack.c.0.s8 %v3871
      %v3873 = vlaneseq
      %v3874 = vshrl.u32 %v3873, 7
      %v3875 = vsub.s32 %v3872, %v3874
      %v3876 = vrot.slane %v3868, %v3875
      %v3878 = vunpack.c.l.s4 1983009808
      %v3879 = vunpack.c.0.s8 %v3878
      %v3880 = vlaneseq
      %v3881 = vshrl.u32 %v3880, 7
      %v3882 = vsub.s32 %v3879, %v3881
      %v3883 = vrot.slane %v3869, %v3882
      %v3884 = vcombine.low %v3828, %v3844
      %v3885 = vcombine.high %v3828, %v3844
      %v3887 = vunpack.c.l.s4 1934713408
      %v3888 = vunpack.c.0.s8 %v3887
      %v3889 = vlaneseq
      %v3890 = vshrl.u32 %v3889, 7
      %v3891 = vsub.s32 %v3888, %v3890
      %v3892 = vrot.slane %v3884, %v3891
      %v3894 = vunpack.c.l.s4 1934713408
      %v3895 = vunpack.c.0.s8 %v3894
      %v3896 = vlaneseq
      %v3897 = vshrl.u32 %v3896, 7
      %v3898 = vsub.s32 %v3895, %v3897
      %v3899 = vrot.slane %v3885, %v3898
      %v3900 = vcombine.low %v3835, %v3851
      %v3901 = vcombine.high %v3835, %v3851
      %v3903 = vunpack.c.l.s4 1934713408
      %v3904 = vunpack.c.0.s8 %v3903
      %v3905 = vlaneseq
      %v3906 = vshrl.u32 %v3905, 7
      %v3907 = vsub.s32 %v3904, %v3906
      %v3908 = vrot.slane %v3900, %v3907
      %v3910 = vunpack.c.l.s4 1934713408
      %v3911 = vunpack.c.0.s8 %v3910
      %v3912 = vlaneseq
      %v3913 = vshrl.u32 %v3912, 7
      %v3914 = vsub.s32 %v3911, %v3913
      %v3915 = vrot.slane %v3901, %v3914
      %v3916 = vcombine.low %v3860, %v3876
      %v3917 = vcombine.high %v3860, %v3876
      %v3919 = vunpack.c.l.s4 1934713408
      %v3920 = vunpack.c.0.s8 %v3919
      %v3921 = vlaneseq
      %v3922 = vshrl.u32 %v3921, 7
      %v3923 = vsub.s32 %v3920, %v3922
      %v3924 = vrot.slane %v3916, %v3923
      %v3926 = vunpack.c.l.s4 1934713408
      %v3927 = vunpack.c.0.s8 %v3926
      %v3928 = vlaneseq
      %v3929 = vshrl.u32 %v3928, 7
      %v3930 = vsub.s32 %v3927, %v3929
      %v3931 = vrot.slane %v3917, %v3930
      %v3932 = vcombine.low %v3867, %v3883
      %v3933 = vcombine.high %v3867, %v3883
      %v3935 = vunpack.c.l.s4 1934713408
      %v3936 = vunpack.c.0.s8 %v3935
      %v3937 = vlaneseq
      %v3938 = vshrl.u32 %v3937, 7
      %v3939 = vsub.s32 %v3936, %v3938
      %v3940 = vrot.slane %v3932, %v3939
      %v3942 = vunpack.c.l.s4 1934713408
      %v3943 = vunpack.c.0.s8 %v3942
      %v3944 = vlaneseq
      %v3945 = vshrl.u32 %v3944, 7
      %v3946 = vsub.s32 %v3943, %v3945
      %v3947 = vrot.slane %v3933, %v3946
      %v3948 = vcombine.low %v3892, %v3924
      %v3949 = vcombine.high %v3892, %v3924
      %v3950 = vcombine.low %v3899, %v3931
      %v3951 = vcombine.high %v3899, %v3931
      %v3952 = vcombine.low %v3908, %v3940
      %v3953 = vcombine.high %v3908, %v3940
      %v3954 = vcombine.low %v3915, %v3947
      %v3955 = vcombine.high %v3915, %v3947
      %v3956 = vcombine.low %v3812, %v3814
      %v3957 = vcombine.high %v3812, %v3814
      %v3959 = vunpack.c.l.s4 1983009808
      %v3960 = vunpack.c.0.s8 %v3959
      %v3961 = vlaneseq
      %v3962 = vshrl.u32 %v3961, 7
      %v3963 = vsub.s32 %v3960, %v3962
      %v3964 = vrot.slane %v3956, %v3963
      %v3966 = vunpack.c.l.s4 1983009808
      %v3967 = vunpack.c.0.s8 %v3966
      %v3968 = vlaneseq
      %v3969 = vshrl.u32 %v3968, 7
      %v3970 = vsub.s32 %v3967, %v3969
      %v3971 = vrot.slane %v3957, %v3970
      %v3972 = vcombine.low %v3813, %v3815
      %v3973 = vcombine.high %v3813, %v3815
      %v3975 = vunpack.c.l.s4 1983009808
      %v3976 = vunpack.c.0.s8 %v3975
      %v3977 = vlaneseq
      %v3978 = vshrl.u32 %v3977, 7
      %v3979 = vsub.s32 %v3976, %v3978
      %v3980 = vrot.slane %v3972, %v3979
      %v3982 = vunpack.c.l.s4 1983009808
      %v3983 = vunpack.c.0.s8 %v3982
      %v3984 = vlaneseq
      %v3985 = vshrl.u32 %v3984, 7
      %v3986 = vsub.s32 %v3983, %v3985
      %v3987 = vrot.slane %v3973, %v3986
      %v3988 = vcombine.low %v3816, %v3818
      %v3989 = vcombine.high %v3816, %v3818
      %v3991 = vunpack.c.l.s4 1983009808
      %v3992 = vunpack.c.0.s8 %v3991
      %v3993 = vlaneseq
      %v3994 = vshrl.u32 %v3993, 7
      %v3995 = vsub.s32 %v3992, %v3994
      %v3996 = vrot.slane %v3988, %v3995
      %v3998 = vunpack.c.l.s4 1983009808
      %v3999 = vunpack.c.0.s8 %v3998
      %v4000 = vlaneseq
      %v4001 = vshrl.u32 %v4000, 7
      %v4002 = vsub.s32 %v3999, %v4001
      %v4003 = vrot.slane %v3989, %v4002
      %v4004 = vcombine.low %v3817, %v3819
      %v4005 = vcombine.high %v3817, %v3819
      %v4007 = vunpack.c.l.s4 1983009808
      %v4008 = vunpack.c.0.s8 %v4007
      %v4009 = vlaneseq
      %v4010 = vshrl.u32 %v4009, 7
      %v4011 = vsub.s32 %v4008, %v4010
      %v4012 = vrot.slane %v4004, %v4011
      %v4014 = vunpack.c.l.s4 1983009808
      %v4015 = vunpack.c.0.s8 %v4014
      %v4016 = vlaneseq
      %v4017 = vshrl.u32 %v4016, 7
      %v4018 = vsub.s32 %v4015, %v4017
      %v4019 = vrot.slane %v4005, %v4018
      %v4020 = vcombine.low %v3964, %v3980
      %v4021 = vcombine.high %v3964, %v3980
      %v4023 = vunpack.c.l.s4 1934713408
      %v4024 = vunpack.c.0.s8 %v4023
      %v4025 = vlaneseq
      %v4026 = vshrl.u32 %v4025, 7
      %v4027 = vsub.s32 %v4024, %v4026
      %v4028 = vrot.slane %v4020, %v4027
      %v4030 = vunpack.c.l.s4 1934713408
      %v4031 = vunpack.c.0.s8 %v4030
      %v4032 = vlaneseq
      %v4033 = vshrl.u32 %v4032, 7
      %v4034 = vsub.s32 %v4031, %v4033
      %v4035 = vrot.slane %v4021, %v4034
      %v4036 = vcombine.low %v3971, %v3987
      %v4037 = vcombine.high %v3971, %v3987
      %v4039 = vunpack.c.l.s4 1934713408
      %v4040 = vunpack.c.0.s8 %v4039
      %v4041 = vlaneseq
      %v4042 = vshrl.u32 %v4041, 7
      %v4043 = vsub.s32 %v4040, %v4042
      %v4044 = vrot.slane %v4036, %v4043
      %v4046 = vunpack.c.l.s4 1934713408
      %v4047 = vunpack.c.0.s8 %v4046
      %v4048 = vlaneseq
      %v4049 = vshrl.u32 %v4048, 7
      %v4050 = vsub.s32 %v4047, %v4049
      %v4051 = vrot.slane %v4037, %v4050
      %v4052 = vcombine.low %v3996, %v4012
      %v4053 = vcombine.high %v3996, %v4012
      %v4055 = vunpack.c.l.s4 1934713408
      %v4056 = vunpack.c.0.s8 %v4055
      %v4057 = vlaneseq
      %v4058 = vshrl.u32 %v4057, 7
      %v4059 = vsub.s32 %v4056, %v4058
      %v4060 = vrot.slane %v4052, %v4059
      %v4062 = vunpack.c.l.s4 1934713408
      %v4063 = vunpack.c.0.s8 %v4062
      %v4064 = vlaneseq
      %v4065 = vshrl.u32 %v4064, 7
      %v4066 = vsub.s32 %v4063, %v4065
      %v4067 = vrot.slane %v4053, %v4066
      %v4068 = vcombine.low %v4003, %v4019
      %v4069 = vcombine.high %v4003, %v4019
      %v4071 = vunpack.c.l.s4 1934713408
      %v4072 = vunpack.c.0.s8 %v4071
      %v4073 = vlaneseq
      %v4074 = vshrl.u32 %v4073, 7
      %v4075 = vsub.s32 %v4072, %v4074
      %v4076 = vrot.slane %v4068, %v4075
      %v4078 = vunpack.c.l.s4 1934713408
      %v4079 = vunpack.c.0.s8 %v4078
      %v4080 = vlaneseq
      %v4081 = vshrl.u32 %v4080, 7
      %v4082 = vsub.s32 %v4079, %v4081
      %v4083 = vrot.slane %v4069, %v4082
      %v4084 = vcombine.low %v4028, %v4060
      %v4085 = vcombine.high %v4028, %v4060
      %v4086 = vcombine.low %v4035, %v4067
      %v4087 = vcombine.high %v4035, %v4067
      %v4088 = vcombine.low %v4044, %v4076
      %v4089 = vcombine.high %v4044, %v4076
      %v4090 = vcombine.low %v4051, %v4083
      %v4091 = vcombine.high %v4051, %v4083
      %4094 = vrot.lane.b32.xlu0 %v3949, 8
      %v4095 = vpop.permute.xlu0 %4094
      %4096 = vrot.lane.b32.xlu0 %v4085, 8
      %v4097 = vpop.permute.xlu0 %4096
      %4102 = vrot.lane.b32.xlu0 %v3950, 16
      %v4103 = vpop.permute.xlu0 %4102
      %4104 = vrot.lane.b32.xlu0 %v4086, 16
      %v4105 = vpop.permute.xlu0 %4104
      %4110 = vrot.lane.b32.xlu0 %v3951, 24
      %v4111 = vpop.permute.xlu0 %4110
      %4112 = vrot.lane.b32.xlu0 %v4087, 24
      %v4113 = vpop.permute.xlu0 %4112
      %4118 = vrot.lane.b32.xlu0 %v3952, 32
      %v4119 = vpop.permute.xlu0 %4118
      %4120 = vrot.lane.b32.xlu0 %v4088, 32
      %v4121 = vpop.permute.xlu0 %4120
      %4126 = vrot.lane.b32.xlu0 %v3953, 40
      %v4127 = vpop.permute.xlu0 %4126
      %4128 = vrot.lane.b32.xlu0 %v4089, 40
      %v4129 = vpop.permute.xlu0 %4128
      %4134 = vrot.lane.b32.xlu0 %v3954, 48
      %v4135 = vpop.permute.xlu0 %4134
      %4136 = vrot.lane.b32.xlu0 %v4090, 48
      %v4137 = vpop.permute.xlu0 %4136
      %4142 = vrot.lane.b32.xlu0 %v3955, 56
      %v4143 = vpop.permute.xlu0 %4142
      %4144 = vrot.lane.b32.xlu0 %v4091, 56
      %v4145 = vpop.permute.xlu0 %4144
      %v4148 = vsel %vm2026, %v3948, %v4095
      %v4149 = vsel %vm2026, %v4084, %v4097
      %v4150 = vsel %vm2723, %v4148, %v4103
      %v4151 = vsel %vm2723, %v4149, %v4105
      %vm4152 = vcmask 195584
      %v4153 = vsel %vm4152, %v4150, %v4111
      %v4154 = vsel %vm4152, %v4151, %v4113
      %vm4155 = vcmask 261120
      %v4156 = vsel %vm4155, %v4153, %v4119
      %v4157 = vsel %vm4155, %v4154, %v4121
      %vm4158 = vcmask 326656
      %v4159 = vsel %vm4158, %v4156, %v4127
      %v4160 = vsel %vm4158, %v4157, %v4129
      %vm4161 = vcmask 392192
      %v4162 = vsel %vm4161, %v4159, %v4135
      %v4163 = vsel %vm4161, %v4160, %v4137
      %vm4164 = vcmask 457728
      %v4165 = vsel %vm4164, %v4162, %v4143
      %v4166 = vsel %vm4164, %v4163, %v4145
      %vm4167 = vcmask 523264
      %4168 = vst.msk [vmem:[%s204] sm:$0xff] %vm4167, %v4165
      %4169 = vst.msk [vmem:[%s204 + $0x8] sm:$0xff] %vm4167, %v4166
      %s4170 = smul.u32 2, %s18
      %p4171 = scmp.lt.s32.totalorder %s17, 1
      %s4172 = scalar_select %p4171, %s17, 1
      %p4173 = scmp.lt.s32.totalorder %s4170, 1
      %s4174 = scalar_select %p4173, %s4170, 1
      %s4175 = smul.addr %s4172, 2
      %s4176 = sadd.s32 %s4174, %s4175
      %s4177 = smul.addr %s4176, 8
      %s4178 = scalar_lea.vmem %s2, %s4177
      // Predicated region
      $region29: #{attention_forward.4} parent=27 // pred_check
        %p4179 = pneg %p99
      $region30: #{attention_forward.4} parent=27 // pred_check_branch
        %4181 = sbr.rel (%p4179) target = $region32
      $region31: #{attention_forward.4} parent=27 // pred_region
        %s4182 = smul.u32 2, %s18
      $region32: #{attention_forward.4} parent=27 // pred_fallthru
        _
    $region28: #{attention_forward.4} parent=5 // pred_fallthru
      _
    %p4183 = scmp.le.s32.totalorder 2, %s8
    // Predicated region
    $region33: #{attention_forward.4} parent=5 // pred_check
      %p4184 = pneg %p4183
    $region34: #{attention_forward.4} parent=5 // pred_check_branch
      %4186 = sbr.rel (%p4184) target = $region36
    $region35: #{attention_forward.4} parent=5 // pred_region
      %s4187 = ssub.s32 %s8, 2
      // Predicated region
      $region37: #{attention_forward.4} parent=35 // pred_check
        %p4188 = pneg %p105
      $region38: #{attention_forward.4} parent=35 // pred_check_branch
        %4190 = sbr.rel (%p4188) target = $region40
      $region39: #{attention_forward.4} parent=35 // pred_region
        %s4191 = smul.u32 2, %s20
        %p4192 = scmp.lt.s32.totalorder %s19, 1
        %s4193 = scalar_select %p4192, %s19, 1
        %p4194 = scmp.lt.s32.totalorder %s4191, 1
        %s4195 = scalar_select %p4194, %s4191, 1
        %s4196 = smul.addr %s4193, 2
        %s4197 = sadd.s32 %s4195, %s4196
        %s4198 = smul.addr %s4197, 8
        %s4199 = scalar_lea.vmem %s2, %s4198
      $region40: #{attention_forward.4} parent=35 // pred_fallthru
        _
    $region36: #{attention_forward.4} parent=5 // pred_fallthru
      _
  $region6: #{attention_forward.4} parent=0 // loop_footer
    %s12 = sadd.s32 1, %s8
  $region7: #{attention_forward.4} parent=0 // loop_footer_branch
    %7 = sbr.rel target = $region3
  $region8: #{attention_forward.4} parent=0 // loop_exit
    _

</llo_original>
